<compile_context>
chip_gen: v5e
topology: v5e:2x2
jax: 0.10.0
libtpu: 0.0.40
codegen_flags: <defaults>
</compile_context>

<pallas_src>
import functools
import math

import jax
import jax.numpy as jnp
import numpy as np
from jax.experimental import pallas as pl
from jax.experimental.pallas import tpu as pltpu


# ---------------------------------------------------------------------------
# Pallas kernel: one (Bt, S, P) slab = one partition x one batch tile
# ---------------------------------------------------------------------------
def _encoder_layer_kernel(x_ref, w_ref, vec_ref, o_ref, *, num_heads, eps):
    Bt, S, P = x_ref.shape
    H = num_heads
    Dh = P // H
    M = Bt * S
    scale = 1.0 / math.sqrt(Dh)
    dn_t = (((1,), (1,)), ((), ()))      # contract last dims: a @ b^T on the MXU

    # rows ordered (b, s); S is a multiple of 8 here so this reshape is free
    x = x_ref[...].reshape(M, P)
    xb = x.astype(jnp.bfloat16)
    vecs = vec_ref[0]                    # (10, P) packed bias / LN vectors (f32)

    def vrow(i):                         # (1, P) row, broadcasts over M rows
        return vecs[i:i + 1, :]

    # ---- QKV projections: bf16 MXU inputs, f32 accumulation; scale folded into q
    q = (jnp.dot(xb, w_ref[0, 0], preferred_element_type=jnp.float32)
         + vrow(0)) * scale
    k = jnp.dot(xb, w_ref[0, 1], preferred_element_type=jnp.float32) + vrow(1)
    v = jnp.dot(xb, w_ref[0, 2], preferred_element_type=jnp.float32) + vrow(2)

    # ---- self-attention: rows are (b, s) ordered, so each batch's keys form a
    # contiguous SxS block; compute ONLY those blocks (no mask, no waste).
    ctx_blocks = []
    for b in range(Bt):                                  # static unroll
        rs = slice(b * S, (b + 1) * S)
        q_b = q[rs].astype(jnp.bfloat16)                 # (S, P)
        k_b = k[rs].astype(jnp.bfloat16)
        v_b = v[rs].astype(jnp.bfloat16)
        head_outs = []
        for h in range(H):
            cs = slice(h * Dh, (h + 1) * Dh)
            s_att = jax.lax.dot_general(
                q_b[:, cs], k_b[:, cs], dn_t,
                preferred_element_type=jnp.float32)      # (S, S)
            s_att = s_att - jnp.max(s_att, axis=-1, keepdims=True)
            p_att = jnp.exp(s_att)
            p_att = p_att * pl.reciprocal(
                jnp.sum(p_att, axis=-1, keepdims=True), approx=True)
            head_outs.append(
                jnp.dot(p_att.astype(jnp.bfloat16), v_b[:, cs],
                        preferred_element_type=jnp.float32))   # (S, Dh)
        ctx_blocks.append(jnp.concatenate(head_outs, axis=-1))  # (S, P)
    ctx = jnp.concatenate(ctx_blocks, axis=0)                   # (M, P)

    attn = (jnp.dot(ctx.astype(jnp.bfloat16), w_ref[0, 3],
                    preferred_element_type=jnp.float32) + vrow(3))

    # ---- residual + LayerNorm1 (post-norm), f32
    y = x + attn
    mu = jnp.mean(y, axis=-1, keepdims=True)
    var = jnp.mean(jnp.square(y - mu), axis=-1, keepdims=True)
    y = (y - mu) * jax.lax.rsqrt(var + eps) * vrow(4) + vrow(5)

    # ---- feed-forward (relu) + residual + LayerNorm2
    h1 = jnp.maximum(
        jnp.dot(y.astype(jnp.bfloat16), w_ref[0, 4],
                preferred_element_type=jnp.float32) + vrow(8), 0.0)
    ff = jnp.dot(h1.astype(jnp.bfloat16), w_ref[0, 5],
                 preferred_element_type=jnp.float32) + vrow(9)
    z = y + ff
    mu2 = jnp.mean(z, axis=-1, keepdims=True)
    var2 = jnp.mean(jnp.square(z - mu2), axis=-1, keepdims=True)
    z = (z - mu2) * jax.lax.rsqrt(var2 + eps) * vrow(6) + vrow(7)

    o_ref[...] = z.reshape(Bt, S, P)


# ---------------------------------------------------------------------------
# Wrapper
# ---------------------------------------------------------------------------
def partitioned_transformer_encoder_layer(x, params, *, num_heads, eps=1e-5,
                                          batch_tile=None):
    """x: (S, B, E) float32 (PyTorch batch_first=False layout)."""
    S, B, E = x.shape
    n_part, threeP, P = params["in_proj_w"].shape
    assert threeP == 3 * P and n_part * P == E
    assert P % num_heads == 0
    assert P % 128 == 0, "partition width must be lane-dense (multiple of 128)"

    # --- pad batch to a multiple of 8 so all flattens stay sublane-aligned ---
    Bp = ((B + 7) // 8) * 8
    xp = x if Bp == B else jnp.pad(x, ((0, 0), (0, Bp - B), (0, 0)))

    # (S, B, E) -> (B, S, E): rows flatten as (b, s) inside the kernel so each
    # batch's attention is a contiguous SxS block (mask-free attention).
    xt = jnp.transpose(xp, (1, 0, 2))

    # --- batch tile selection ---
    if batch_tile is None:
        divisors = [d for d in range(8, Bp + 1, 8) if Bp % d == 0]
        capped = [d for d in divisors if S * d <= 1024] or [min(divisors)]
        filled = [d for d in capped if S * d >= 256]       # fill 256-row MXU
        if filled:
            Bt = min(filled)
        else:                                              # keep pipelining slack
            slack = [d for d in capped if n_part * (Bp // d) >= 4]
            Bt = max(slack) if slack else max(capped)
    else:
        Bt = batch_tile
    assert Bp % Bt == 0 and Bt % 8 == 0
    M = Bt * S
    n_bt = Bp // Bt

    # ---- one-time weight repack (outside the grid loop; negligible cost) ----
    # PyTorch stores weights as (out, in); transpose to (in, out) so the kernel
    # never does .T, stack all six P x P matrices per partition, cast to bf16.
    wq, wk, wv = jnp.split(params["in_proj_w"], 3, axis=1)       # (n_part, P, P)
    w_stack = jnp.stack(
        [jnp.swapaxes(w, 1, 2) for w in
         (wq, wk, wv, params["out_proj_w"], params["lin1_w"], params["lin2_w"])],
        axis=1).astype(jnp.bfloat16)                              # (n_part, 6, P, P)

    bq, bk, bv = jnp.split(params["in_proj_b"], 3, axis=1)        # (n_part, P)
    vec_stack = jnp.stack(
        [bq, bk, bv, params["out_proj_b"],
         params["ln1_w"], params["ln1_b"], params["ln2_w"], params["ln2_b"],
         params["lin1_b"], params["lin2_b"]], axis=1)             # (n_part, 10, P)

    # Batch axis innermost: the weight/vec block index is constant across
    # consecutive inner steps, so Pallas does not re-DMA the 6*P^2 block.
    grid = (n_part, n_bt)
    x_spec = pl.BlockSpec((Bt, S, P), lambda p, b: (b, 0, p))
    w_spec = pl.BlockSpec((1, 6, P, P), lambda p, b: (p, 0, 0, 0))
    vec_spec = pl.BlockSpec((1, 10, P), lambda p, b: (p, 0, 0))

    kernel = functools.partial(_encoder_layer_kernel,
                               num_heads=num_heads, eps=eps)

    gemm_flops = 2 * 6 * S * Bp * P * P * n_part
    attn_flops = 4 * n_part * Bp * S * S * P
    cost = pl.CostEstimate(
        flops=gemm_flops + attn_flops,
        transcendentals=n_part * Bp * num_heads * S * S,
        bytes_accessed=2 * xt.size * 4 + w_stack.size * 2 + vec_stack.size * 4)

    # Explicit VMEM budget (tightest on v7x: 32 MiB scoped default / 64 MiB
    # physical): double-buffered x/out blocks + bf16 weight block + live f32
    # intermediates headroom.
    blk_bytes = (2 * 2 * (Bt * S * P * 4)       # x + out blocks, double-buffered
                 + 2 * (6 * P * P * 2)          # bf16 weight block, double-buffered
                 + 2 * (10 * P * 4)             # vec block
                 + 12 * (M * P * 4))            # live f32 intermediates headroom
    vmem_limit = int(max(16 << 20, min(2 * blk_bytes + (4 << 20), 32 << 20)))

    out = pl.pallas_call(
        kernel,
        out_shape=jax.ShapeDtypeStruct((Bp, S, E), jnp.float32),
        grid=grid,
        in_specs=[x_spec, w_spec, vec_spec],
        out_specs=x_spec,
        compiler_params=pltpu.CompilerParams(
            dimension_semantics=("parallel", "parallel"),
            vmem_limit_bytes=vmem_limit),
        cost_estimate=cost,
    )(xt, w_stack, vec_stack)

    out = jnp.transpose(out, (1, 0, 2))          # back to (S, Bp, E)
    if Bp != B:
        out = out[:, :B, :]
    return out


# ---------------------------------------------------------------------------
# Pure-JAX reference (mirrors PyTorch post-norm encoder layer, dropout = 0)
# ---------------------------------------------------------------------------
def _reference(x, params, *, num_heads, eps=1e-5):
    S, B, E = x.shape
    n_part, _, P = params["in_proj_w"].shape
    H, Dh = num_heads, P // num_heads
    outs = []
    for p in range(n_part):
        xp = x[:, :, p * P:(p + 1) * P]
        qkv = (jnp.einsum("sbe,fe->sbf", xp, params["in_proj_w"][p])
               + params["in_proj_b"][p])
        q, k, v = qkv[..., :P], qkv[..., P:2 * P], qkv[..., 2 * P:]

        def split(t):
            return t.reshape(S, B, H, Dh).transpose(1, 2, 0, 3)

        qh, kh, vh = split(q), split(k), split(v)
        s = jnp.einsum("bhqd,bhkd->bhqk", qh, kh) / math.sqrt(Dh)
        a = jax.nn.softmax(s, axis=-1)
        o = jnp.einsum("bhqk,bhkd->bhqd", a, vh).transpose(2, 0, 1, 3).reshape(S, B, P)
        o = jnp.einsum("sbe,fe->sbf", o, params["out_proj_w"][p]) + params["out_proj_b"][p]

        def ln(t, w, b):
            mu = jnp.mean(t, axis=-1, keepdims=True)
            var = jnp.mean((t - mu) ** 2, axis=-1, keepdims=True)
            return (t - mu) * jax.lax.rsqrt(var + eps) * w + b

        y = ln(xp + o, params["ln1_w"][p], params["ln1_b"][p])
        h1 = jax.nn.relu(jnp.einsum("sbe,fe->sbf", y, params["lin1_w"][p])
                         + params["lin1_b"][p])
        ff = jnp.einsum("sbe,fe->sbf", h1, params["lin2_w"][p]) + params["lin2_b"][p]
        outs.append(ln(y + ff, params["ln2_w"][p], params["ln2_b"][p]))
    return jnp.concatenate(outs, axis=2)


# ---------------------------------------------------------------------------
# Deterministic parameter construction (PyTorch (out, in) weight layout)
# ---------------------------------------------------------------------------
def make_params(key, n_part, P):
    ks = jax.random.split(key, 8)
    sc = 0.05
    return {
        "in_proj_w":  sc * jax.random.normal(ks[0], (n_part, 3 * P, P), jnp.float32),
        "in_proj_b":  sc * jax.random.normal(ks[1], (n_part, 3 * P), jnp.float32),
        "out_proj_w": sc * jax.random.normal(ks[2], (n_part, P, P), jnp.float32),
        "out_proj_b": sc * jax.random.normal(ks[3], (n_part, P), jnp.float32),
        "ln1_w": jnp.ones((n_part, P), jnp.float32),
        "ln1_b": jnp.zeros((n_part, P), jnp.float32),
        "ln2_w": jnp.ones((n_part, P), jnp.float32),
        "ln2_b": jnp.zeros((n_part, P), jnp.float32),
        "lin1_w": sc * jax.random.normal(ks[4], (n_part, P, P), jnp.float32),
        "lin1_b": sc * jax.random.normal(ks[5], (n_part, P), jnp.float32),
        "lin2_w": sc * jax.random.normal(ks[6], (n_part, P, P), jnp.float32),
        "lin2_b": sc * jax.random.normal(ks[7], (n_part, P), jnp.float32),
    }


if __name__ == "__main__":
    # Small but lane-dense shapes: seq=8, batch=16, dim_input=256,
    # num_partitions=2 -> P=128 per partition, 4 heads (head_dim=32).
    S, B, E = 8, 16, 256
    NUM_PARTITIONS, NUM_HEADS = 2, 4
    P = E // NUM_PARTITIONS

    key = jax.random.PRNGKey(0)
    kx, kp = jax.random.split(key)
    x = jax.random.normal(kx, (S, B, E), jnp.float32)     # (seq, batch, embed)
    params = make_params(kp, NUM_PARTITIONS, P)

    fwd = jax.jit(functools.partial(partitioned_transformer_encoder_layer,
                                    num_heads=NUM_HEADS))
    out = jax.block_until_ready(fwd(x, params))

    ref = _reference(x, params, num_heads=NUM_HEADS)
    # tolerance accounts for bf16 MXU inputs (f32 accumulation) and the EUP
    # approximate reciprocal in the softmax -- acceptable for inference.
    np.testing.assert_allclose(np.asarray(out), np.asarray(ref),
                               atol=5e-2, rtol=5e-2)

    print("KERNEL_OK")
</pallas_src>

<mosaic_0001>
module attributes {stable_mosaic.version = 11 : i64} {
  func.func @_encoder_layer_kernel(%arg0: i32, %arg1: i32, %arg2: memref<8x8x128xf32, #tpu.memory_space<vmem>>, %arg3: memref<1x6x128x128xbf16, #tpu.memory_space<vmem>>, %arg4: memref<1x10x128xf32, #tpu.memory_space<vmem>>, %arg5: memref<8x8x128xf32, #tpu.memory_space<vmem>>) attributes {dimension_semantics = [#tpu.dimension_semantics<parallel>, #tpu.dimension_semantics<parallel>], iteration_bounds = array<i64: 2, 2>, scalar_prefetch = 0 : i64, scratch_operands = 0 : i64, tpu.core_type = #tpu.core_type<tc>, window_params = [{transform_indices = @transform_0, window_bounds = array<i64: 8, 8, 128>}, {transform_indices = @transform_1, window_bounds = array<i64: 1, 6, 128, 128>}, {transform_indices = @transform_2, window_bounds = array<i64: 1, 10, 128>}, {transform_indices = @transform_3, window_bounds = array<i64: 8, 8, 128>}]} {
    %c0 = arith.constant 0 : index
    %c0_0 = arith.constant 0 : index
    %c0_1 = arith.constant 0 : index
    %0 = vector.load %arg2[%c0, %c0_0, %c0_1] : memref<8x8x128xf32, #tpu.memory_space<vmem>>, vector<8x8x128xf32>
    %1 = vector.shape_cast %0 : vector<8x8x128xf32> to vector<64x128xf32>
    %2 = arith.truncf %1 : vector<64x128xf32> to vector<64x128xbf16>
    %c0_2 = arith.constant 0 : index
    %c0_3 = arith.constant 0 : index
    %c0_4 = arith.constant 0 : index
    %3 = vector.load %arg4[%c0_2, %c0_3, %c0_4] : memref<1x10x128xf32, #tpu.memory_space<vmem>>, vector<1x10x128xf32>
    %4 = vector.shape_cast %3 : vector<1x10x128xf32> to vector<10x128xf32>
    %c0_5 = arith.constant 0 : index
    %c0_6 = arith.constant 0 : index
    %c0_7 = arith.constant 0 : index
    %c0_8 = arith.constant 0 : index
    %5 = vector.load %arg3[%c0_5, %c0_6, %c0_7, %c0_8] : memref<1x6x128x128xbf16, #tpu.memory_space<vmem>>, vector<1x1x128x128xbf16>
    %6 = vector.shape_cast %5 : vector<1x1x128x128xbf16> to vector<128x128xbf16>
    %cst = arith.constant dense<0.000000e+00> : vector<64x128xf32>
    %7 = tpu.matmul %2, %6, %cst {dimension_numbers = #tpu.dot_dimension_numbers<[1], [0], [0], [1], [0, 0, 1, 1], [], []>} : vector<64x128xbf16>, vector<128x128xbf16>, vector<64x128xf32> -> vector<64x128xf32>
    %8 = vector.extract_strided_slice %4 {offsets = [0, 0], sizes = [1, 128], strides = [1, 1]} : vector<10x128xf32> to vector<1x128xf32>
    %9 = vector.broadcast %8 : vector<1x128xf32> to vector<64x128xf32>
    %10 = arith.addf %7, %9 : vector<64x128xf32>
    %cst_9 = arith.constant 0.176776692 : f32
    %11 = vector.broadcast %cst_9 : f32 to vector<64x128xf32>
    %12 = arith.mulf %10, %11 : vector<64x128xf32>
    %c0_10 = arith.constant 0 : index
    %c1 = arith.constant 1 : index
    %c0_11 = arith.constant 0 : index
    %c0_12 = arith.constant 0 : index
    %13 = vector.load %arg3[%c0_10, %c1, %c0_11, %c0_12] : memref<1x6x128x128xbf16, #tpu.memory_space<vmem>>, vector<1x1x128x128xbf16>
    %14 = vector.shape_cast %13 : vector<1x1x128x128xbf16> to vector<128x128xbf16>
    %cst_13 = arith.constant dense<0.000000e+00> : vector<64x128xf32>
    %15 = tpu.matmul %2, %14, %cst_13 {dimension_numbers = #tpu.dot_dimension_numbers<[1], [0], [0], [1], [0, 0, 1, 1], [], []>} : vector<64x128xbf16>, vector<128x128xbf16>, vector<64x128xf32> -> vector<64x128xf32>
    %16 = vector.extract_strided_slice %4 {offsets = [1, 0], sizes = [1, 128], strides = [1, 1]} : vector<10x128xf32> to vector<1x128xf32>
    %17 = vector.broadcast %16 : vector<1x128xf32> to vector<64x128xf32>
    %18 = arith.addf %15, %17 : vector<64x128xf32>
    %c0_14 = arith.constant 0 : index
    %c2 = arith.constant 2 : index
    %c0_15 = arith.constant 0 : index
    %c0_16 = arith.constant 0 : index
    %19 = vector.load %arg3[%c0_14, %c2, %c0_15, %c0_16] : memref<1x6x128x128xbf16, #tpu.memory_space<vmem>>, vector<1x1x128x128xbf16>
    %20 = vector.shape_cast %19 : vector<1x1x128x128xbf16> to vector<128x128xbf16>
    %cst_17 = arith.constant dense<0.000000e+00> : vector<64x128xf32>
    %21 = tpu.matmul %2, %20, %cst_17 {dimension_numbers = #tpu.dot_dimension_numbers<[1], [0], [0], [1], [0, 0, 1, 1], [], []>} : vector<64x128xbf16>, vector<128x128xbf16>, vector<64x128xf32> -> vector<64x128xf32>
    %22 = vector.extract_strided_slice %4 {offsets = [2, 0], sizes = [1, 128], strides = [1, 1]} : vector<10x128xf32> to vector<1x128xf32>
    %23 = vector.broadcast %22 : vector<1x128xf32> to vector<64x128xf32>
    %24 = arith.addf %21, %23 : vector<64x128xf32>
    %25 = vector.extract_strided_slice %12 {offsets = [0, 0], sizes = [8, 128], strides = [1, 1]} : vector<64x128xf32> to vector<8x128xf32>
    %26 = arith.truncf %25 : vector<8x128xf32> to vector<8x128xbf16>
    %27 = vector.extract_strided_slice %18 {offsets = [0, 0], sizes = [8, 128], strides = [1, 1]} : vector<64x128xf32> to vector<8x128xf32>
    %28 = arith.truncf %27 : vector<8x128xf32> to vector<8x128xbf16>
    %29 = vector.extract_strided_slice %24 {offsets = [0, 0], sizes = [8, 128], strides = [1, 1]} : vector<64x128xf32> to vector<8x128xf32>
    %30 = arith.truncf %29 : vector<8x128xf32> to vector<8x128xbf16>
    %31 = vector.extract_strided_slice %26 {offsets = [0, 0], sizes = [8, 32], strides = [1, 1]} : vector<8x128xbf16> to vector<8x32xbf16>
    %32 = vector.extract_strided_slice %28 {offsets = [0, 0], sizes = [8, 32], strides = [1, 1]} : vector<8x128xbf16> to vector<8x32xbf16>
    %cst_18 = arith.constant dense<0.000000e+00> : vector<8x8xf32>
    %33 = tpu.matmul %31, %32, %cst_18 {dimension_numbers = #tpu.dot_dimension_numbers<[1], [1], [0], [0], [0, 0, 1, 0], [], []>} : vector<8x32xbf16>, vector<8x32xbf16>, vector<8x8xf32> -> vector<8x8xf32>
    %cst_19 = arith.constant dense<0xFF800000> : vector<8xf32>
    %34 = vector.multi_reduction <maximumf>, %33, %cst_19 [1] : vector<8x8xf32> to vector<8xf32>
    %35 = vector.shape_cast %34 : vector<8xf32> to vector<8x1xf32>
    %36 = vector.broadcast %35 : vector<8x1xf32> to vector<8x8xf32>
    %37 = arith.subf %33, %36 : vector<8x8xf32>
    %38 = math.exp %37 : vector<8x8xf32>
    %cst_20 = arith.constant dense<0.000000e+00> : vector<8xf32>
    %39 = vector.multi_reduction <add>, %38, %cst_20 [1] : vector<8x8xf32> to vector<8xf32>
    %40 = vector.shape_cast %39 : vector<8xf32> to vector<8x1xf32>
    %41 = tpu.reciprocal %40 {approx = true} : vector<8x1xf32> -> vector<8x1xf32>
    %42 = vector.broadcast %41 : vector<8x1xf32> to vector<8x8xf32>
    %43 = arith.mulf %38, %42 : vector<8x8xf32>
    %44 = arith.truncf %43 : vector<8x8xf32> to vector<8x8xbf16>
    %45 = vector.extract_strided_slice %30 {offsets = [0, 0], sizes = [8, 32], strides = [1, 1]} : vector<8x128xbf16> to vector<8x32xbf16>
    %cst_21 = arith.constant dense<0.000000e+00> : vector<8x32xf32>
    %46 = tpu.matmul %44, %45, %cst_21 {dimension_numbers = #tpu.dot_dimension_numbers<[1], [0], [0], [1], [0, 0, 1, 1], [], []>} : vector<8x8xbf16>, vector<8x32xbf16>, vector<8x32xf32> -> vector<8x32xf32>
    %47 = vector.extract_strided_slice %26 {offsets = [0, 32], sizes = [8, 32], strides = [1, 1]} : vector<8x128xbf16> to vector<8x32xbf16>
    %48 = vector.extract_strided_slice %28 {offsets = [0, 32], sizes = [8, 32], strides = [1, 1]} : vector<8x128xbf16> to vector<8x32xbf16>
    %cst_22 = arith.constant dense<0.000000e+00> : vector<8x8xf32>
    %49 = tpu.matmul %47, %48, %cst_22 {dimension_numbers = #tpu.dot_dimension_numbers<[1], [1], [0], [0], [0, 0, 1, 0], [], []>} : vector<8x32xbf16>, vector<8x32xbf16>, vector<8x8xf32> -> vector<8x8xf32>
    %cst_23 = arith.constant dense<0xFF800000> : vector<8xf32>
    %50 = vector.multi_reduction <maximumf>, %49, %cst_23 [1] : vector<8x8xf32> to vector<8xf32>
    %51 = vector.shape_cast %50 : vector<8xf32> to vector<8x1xf32>
    %52 = vector.broadcast %51 : vector<8x1xf32> to vector<8x8xf32>
    %53 = arith.subf %49, %52 : vector<8x8xf32>
    %54 = math.exp %53 : vector<8x8xf32>
    %cst_24 = arith.constant dense<0.000000e+00> : vector<8xf32>
    %55 = vector.multi_reduction <add>, %54, %cst_24 [1] : vector<8x8xf32> to vector<8xf32>
    %56 = vector.shape_cast %55 : vector<8xf32> to vector<8x1xf32>
    %57 = tpu.reciprocal %56 {approx = true} : vector<8x1xf32> -> vector<8x1xf32>
    %58 = vector.broadcast %57 : vector<8x1xf32> to vector<8x8xf32>
    %59 = arith.mulf %54, %58 : vector<8x8xf32>
    %60 = arith.truncf %59 : vector<8x8xf32> to vector<8x8xbf16>
    %61 = vector.extract_strided_slice %30 {offsets = [0, 32], sizes = [8, 32], strides = [1, 1]} : vector<8x128xbf16> to vector<8x32xbf16>
    %cst_25 = arith.constant dense<0.000000e+00> : vector<8x32xf32>
    %62 = tpu.matmul %60, %61, %cst_25 {dimension_numbers = #tpu.dot_dimension_numbers<[1], [0], [0], [1], [0, 0, 1, 1], [], []>} : vector<8x8xbf16>, vector<8x32xbf16>, vector<8x32xf32> -> vector<8x32xf32>
    %63 = vector.extract_strided_slice %26 {offsets = [0, 64], sizes = [8, 32], strides = [1, 1]} : vector<8x128xbf16> to vector<8x32xbf16>
    %64 = vector.extract_strided_slice %28 {offsets = [0, 64], sizes = [8, 32], strides = [1, 1]} : vector<8x128xbf16> to vector<8x32xbf16>
    %cst_26 = arith.constant dense<0.000000e+00> : vector<8x8xf32>
    %65 = tpu.matmul %63, %64, %cst_26 {dimension_numbers = #tpu.dot_dimension_numbers<[1], [1], [0], [0], [0, 0, 1, 0], [], []>} : vector<8x32xbf16>, vector<8x32xbf16>, vector<8x8xf32> -> vector<8x8xf32>
    %cst_27 = arith.constant dense<0xFF800000> : vector<8xf32>
    %66 = vector.multi_reduction <maximumf>, %65, %cst_27 [1] : vector<8x8xf32> to vector<8xf32>
    %67 = vector.shape_cast %66 : vector<8xf32> to vector<8x1xf32>
    %68 = vector.broadcast %67 : vector<8x1xf32> to vector<8x8xf32>
    %69 = arith.subf %65, %68 : vector<8x8xf32>
    %70 = math.exp %69 : vector<8x8xf32>
    %cst_28 = arith.constant dense<0.000000e+00> : vector<8xf32>
    %71 = vector.multi_reduction <add>, %70, %cst_28 [1] : vector<8x8xf32> to vector<8xf32>
    %72 = vector.shape_cast %71 : vector<8xf32> to vector<8x1xf32>
    %73 = tpu.reciprocal %72 {approx = true} : vector<8x1xf32> -> vector<8x1xf32>
    %74 = vector.broadcast %73 : vector<8x1xf32> to vector<8x8xf32>
    %75 = arith.mulf %70, %74 : vector<8x8xf32>
    %76 = arith.truncf %75 : vector<8x8xf32> to vector<8x8xbf16>
    %77 = vector.extract_strided_slice %30 {offsets = [0, 64], sizes = [8, 32], strides = [1, 1]} : vector<8x128xbf16> to vector<8x32xbf16>
    %cst_29 = arith.constant dense<0.000000e+00> : vector<8x32xf32>
    %78 = tpu.matmul %76, %77, %cst_29 {dimension_numbers = #tpu.dot_dimension_numbers<[1], [0], [0], [1], [0, 0, 1, 1], [], []>} : vector<8x8xbf16>, vector<8x32xbf16>, vector<8x32xf32> -> vector<8x32xf32>
    %79 = vector.extract_strided_slice %26 {offsets = [0, 96], sizes = [8, 32], strides = [1, 1]} : vector<8x128xbf16> to vector<8x32xbf16>
    %80 = vector.extract_strided_slice %28 {offsets = [0, 96], sizes = [8, 32], strides = [1, 1]} : vector<8x128xbf16> to vector<8x32xbf16>
    %cst_30 = arith.constant dense<0.000000e+00> : vector<8x8xf32>
    %81 = tpu.matmul %79, %80, %cst_30 {dimension_numbers = #tpu.dot_dimension_numbers<[1], [1], [0], [0], [0, 0, 1, 0], [], []>} : vector<8x32xbf16>, vector<8x32xbf16>, vector<8x8xf32> -> vector<8x8xf32>
    %cst_31 = arith.constant dense<0xFF800000> : vector<8xf32>
    %82 = vector.multi_reduction <maximumf>, %81, %cst_31 [1] : vector<8x8xf32> to vector<8xf32>
    %83 = vector.shape_cast %82 : vector<8xf32> to vector<8x1xf32>
    %84 = vector.broadcast %83 : vector<8x1xf32> to vector<8x8xf32>
    %85 = arith.subf %81, %84 : vector<8x8xf32>
    %86 = math.exp %85 : vector<8x8xf32>
    %cst_32 = arith.constant dense<0.000000e+00> : vector<8xf32>
    %87 = vector.multi_reduction <add>, %86, %cst_32 [1] : vector<8x8xf32> to vector<8xf32>
    %88 = vector.shape_cast %87 : vector<8xf32> to vector<8x1xf32>
    %89 = tpu.reciprocal %88 {approx = true} : vector<8x1xf32> -> vector<8x1xf32>
    %90 = vector.broadcast %89 : vector<8x1xf32> to vector<8x8xf32>
    %91 = arith.mulf %86, %90 : vector<8x8xf32>
    %92 = arith.truncf %91 : vector<8x8xf32> to vector<8x8xbf16>
    %93 = vector.extract_strided_slice %30 {offsets = [0, 96], sizes = [8, 32], strides = [1, 1]} : vector<8x128xbf16> to vector<8x32xbf16>
    %cst_33 = arith.constant dense<0.000000e+00> : vector<8x32xf32>
    %94 = tpu.matmul %92, %93, %cst_33 {dimension_numbers = #tpu.dot_dimension_numbers<[1], [0], [0], [1], [0, 0, 1, 1], [], []>} : vector<8x8xbf16>, vector<8x32xbf16>, vector<8x32xf32> -> vector<8x32xf32>
    %95 = tpu.concatenate %46, %62, %78, %94 in 1 : vector<8x32xf32>, vector<8x32xf32>, vector<8x32xf32>, vector<8x32xf32> -> vector<8x128xf32>
    %96 = vector.extract_strided_slice %12 {offsets = [8, 0], sizes = [8, 128], strides = [1, 1]} : vector<64x128xf32> to vector<8x128xf32>
    %97 = arith.truncf %96 : vector<8x128xf32> to vector<8x128xbf16>
    %98 = vector.extract_strided_slice %18 {offsets = [8, 0], sizes = [8, 128], strides = [1, 1]} : vector<64x128xf32> to vector<8x128xf32>
    %99 = arith.truncf %98 : vector<8x128xf32> to vector<8x128xbf16>
    %100 = vector.extract_strided_slice %24 {offsets = [8, 0], sizes = [8, 128], strides = [1, 1]} : vector<64x128xf32> to vector<8x128xf32>
    %101 = arith.truncf %100 : vector<8x128xf32> to vector<8x128xbf16>
    %102 = vector.extract_strided_slice %97 {offsets = [0, 0], sizes = [8, 32], strides = [1, 1]} : vector<8x128xbf16> to vector<8x32xbf16>
    %103 = vector.extract_strided_slice %99 {offsets = [0, 0], sizes = [8, 32], strides = [1, 1]} : vector<8x128xbf16> to vector<8x32xbf16>
    %cst_34 = arith.constant dense<0.000000e+00> : vector<8x8xf32>
    %104 = tpu.matmul %102, %103, %cst_34 {dimension_numbers = #tpu.dot_dimension_numbers<[1], [1], [0], [0], [0, 0, 1, 0], [], []>} : vector<8x32xbf16>, vector<8x32xbf16>, vector<8x8xf32> -> vector<8x8xf32>
    %cst_35 = arith.constant dense<0xFF800000> : vector<8xf32>
    %105 = vector.multi_reduction <maximumf>, %104, %cst_35 [1] : vector<8x8xf32> to vector<8xf32>
    %106 = vector.shape_cast %105 : vector<8xf32> to vector<8x1xf32>
    %107 = vector.broadcast %106 : vector<8x1xf32> to vector<8x8xf32>
    %108 = arith.subf %104, %107 : vector<8x8xf32>
    %109 = math.exp %108 : vector<8x8xf32>
    %cst_36 = arith.constant dense<0.000000e+00> : vector<8xf32>
    %110 = vector.multi_reduction <add>, %109, %cst_36 [1] : vector<8x8xf32> to vector<8xf32>
    %111 = vector.shape_cast %110 : vector<8xf32> to vector<8x1xf32>
    %112 = tpu.reciprocal %111 {approx = true} : vector<8x1xf32> -> vector<8x1xf32>
    %113 = vector.broadcast %112 : vector<8x1xf32> to vector<8x8xf32>
    %114 = arith.mulf %109, %113 : vector<8x8xf32>
    %115 = arith.truncf %114 : vector<8x8xf32> to vector<8x8xbf16>
    %116 = vector.extract_strided_slice %101 {offsets = [0, 0], sizes = [8, 32], strides = [1, 1]} : vector<8x128xbf16> to vector<8x32xbf16>
    %cst_37 = arith.constant dense<0.000000e+00> : vector<8x32xf32>
    %117 = tpu.matmul %115, %116, %cst_37 {dimension_numbers = #tpu.dot_dimension_numbers<[1], [0], [0], [1], [0, 0, 1, 1], [], []>} : vector<8x8xbf16>, vector<8x32xbf16>, vector<8x32xf32> -> vector<8x32xf32>
    %118 = vector.extract_strided_slice %97 {offsets = [0, 32], sizes = [8, 32], strides = [1, 1]} : vector<8x128xbf16> to vector<8x32xbf16>
    %119 = vector.extract_strided_slice %99 {offsets = [0, 32], sizes = [8, 32], strides = [1, 1]} : vector<8x128xbf16> to vector<8x32xbf16>
    %cst_38 = arith.constant dense<0.000000e+00> : vector<8x8xf32>
    %120 = tpu.matmul %118, %119, %cst_38 {dimension_numbers = #tpu.dot_dimension_numbers<[1], [1], [0], [0], [0, 0, 1, 0], [], []>} : vector<8x32xbf16>, vector<8x32xbf16>, vector<8x8xf32> -> vector<8x8xf32>
    %cst_39 = arith.constant dense<0xFF800000> : vector<8xf32>
    %121 = vector.multi_reduction <maximumf>, %120, %cst_39 [1] : vector<8x8xf32> to vector<8xf32>
    %122 = vector.shape_cast %121 : vector<8xf32> to vector<8x1xf32>
    %123 = vector.broadcast %122 : vector<8x1xf32> to vector<8x8xf32>
    %124 = arith.subf %120, %123 : vector<8x8xf32>
    %125 = math.exp %124 : vector<8x8xf32>
    %cst_40 = arith.constant dense<0.000000e+00> : vector<8xf32>
    %126 = vector.multi_reduction <add>, %125, %cst_40 [1] : vector<8x8xf32> to vector<8xf32>
    %127 = vector.shape_cast %126 : vector<8xf32> to vector<8x1xf32>
    %128 = tpu.reciprocal %127 {approx = true} : vector<8x1xf32> -> vector<8x1xf32>
    %129 = vector.broadcast %128 : vector<8x1xf32> to vector<8x8xf32>
    %130 = arith.mulf %125, %129 : vector<8x8xf32>
    %131 = arith.truncf %130 : vector<8x8xf32> to vector<8x8xbf16>
    %132 = vector.extract_strided_slice %101 {offsets = [0, 32], sizes = [8, 32], strides = [1, 1]} : vector<8x128xbf16> to vector<8x32xbf16>
    %cst_41 = arith.constant dense<0.000000e+00> : vector<8x32xf32>
    %133 = tpu.matmul %131, %132, %cst_41 {dimension_numbers = #tpu.dot_dimension_numbers<[1], [0], [0], [1], [0, 0, 1, 1], [], []>} : vector<8x8xbf16>, vector<8x32xbf16>, vector<8x32xf32> -> vector<8x32xf32>
    %134 = vector.extract_strided_slice %97 {offsets = [0, 64], sizes = [8, 32], strides = [1, 1]} : vector<8x128xbf16> to vector<8x32xbf16>
    %135 = vector.extract_strided_slice %99 {offsets = [0, 64], sizes = [8, 32], strides = [1, 1]} : vector<8x128xbf16> to vector<8x32xbf16>
    %cst_42 = arith.constant dense<0.000000e+00> : vector<8x8xf32>
    %136 = tpu.matmul %134, %135, %cst_42 {dimension_numbers = #tpu.dot_dimension_numbers<[1], [1], [0], [0], [0, 0, 1, 0], [], []>} : vector<8x32xbf16>, vector<8x32xbf16>, vector<8x8xf32> -> vector<8x8xf32>
    %cst_43 = arith.constant dense<0xFF800000> : vector<8xf32>
    %137 = vector.multi_reduction <maximumf>, %136, %cst_43 [1] : vector<8x8xf32> to vector<8xf32>
    %138 = vector.shape_cast %137 : vector<8xf32> to vector<8x1xf32>
    %139 = vector.broadcast %138 : vector<8x1xf32> to vector<8x8xf32>
    %140 = arith.subf %136, %139 : vector<8x8xf32>
    %141 = math.exp %140 : vector<8x8xf32>
    %cst_44 = arith.constant dense<0.000000e+00> : vector<8xf32>
    %142 = vector.multi_reduction <add>, %141, %cst_44 [1] : vector<8x8xf32> to vector<8xf32>
    %143 = vector.shape_cast %142 : vector<8xf32> to vector<8x1xf32>
    %144 = tpu.reciprocal %143 {approx = true} : vector<8x1xf32> -> vector<8x1xf32>
    %145 = vector.broadcast %144 : vector<8x1xf32> to vector<8x8xf32>
    %146 = arith.mulf %141, %145 : vector<8x8xf32>
    %147 = arith.truncf %146 : vector<8x8xf32> to vector<8x8xbf16>
    %148 = vector.extract_strided_slice %101 {offsets = [0, 64], sizes = [8, 32], strides = [1, 1]} : vector<8x128xbf16> to vector<8x32xbf16>
    %cst_45 = arith.constant dense<0.000000e+00> : vector<8x32xf32>
    %149 = tpu.matmul %147, %148, %cst_45 {dimension_numbers = #tpu.dot_dimension_numbers<[1], [0], [0], [1], [0, 0, 1, 1], [], []>} : vector<8x8xbf16>, vector<8x32xbf16>, vector<8x32xf32> -> vector<8x32xf32>
    %150 = vector.extract_strided_slice %97 {offsets = [0, 96], sizes = [8, 32], strides = [1, 1]} : vector<8x128xbf16> to vector<8x32xbf16>
    %151 = vector.extract_strided_slice %99 {offsets = [0, 96], sizes = [8, 32], strides = [1, 1]} : vector<8x128xbf16> to vector<8x32xbf16>
    %cst_46 = arith.constant dense<0.000000e+00> : vector<8x8xf32>
    %152 = tpu.matmul %150, %151, %cst_46 {dimension_numbers = #tpu.dot_dimension_numbers<[1], [1], [0], [0], [0, 0, 1, 0], [], []>} : vector<8x32xbf16>, vector<8x32xbf16>, vector<8x8xf32> -> vector<8x8xf32>
    %cst_47 = arith.constant dense<0xFF800000> : vector<8xf32>
    %153 = vector.multi_reduction <maximumf>, %152, %cst_47 [1] : vector<8x8xf32> to vector<8xf32>
    %154 = vector.shape_cast %153 : vector<8xf32> to vector<8x1xf32>
    %155 = vector.broadcast %154 : vector<8x1xf32> to vector<8x8xf32>
    %156 = arith.subf %152, %155 : vector<8x8xf32>
    %157 = math.exp %156 : vector<8x8xf32>
    %cst_48 = arith.constant dense<0.000000e+00> : vector<8xf32>
    %158 = vector.multi_reduction <add>, %157, %cst_48 [1] : vector<8x8xf32> to vector<8xf32>
    %159 = vector.shape_cast %158 : vector<8xf32> to vector<8x1xf32>
    %160 = tpu.reciprocal %159 {approx = true} : vector<8x1xf32> -> vector<8x1xf32>
    %161 = vector.broadcast %160 : vector<8x1xf32> to vector<8x8xf32>
    %162 = arith.mulf %157, %161 : vector<8x8xf32>
    %163 = arith.truncf %162 : vector<8x8xf32> to vector<8x8xbf16>
    %164 = vector.extract_strided_slice %101 {offsets = [0, 96], sizes = [8, 32], strides = [1, 1]} : vector<8x128xbf16> to vector<8x32xbf16>
    %cst_49 = arith.constant dense<0.000000e+00> : vector<8x32xf32>
    %165 = tpu.matmul %163, %164, %cst_49 {dimension_numbers = #tpu.dot_dimension_numbers<[1], [0], [0], [1], [0, 0, 1, 1], [], []>} : vector<8x8xbf16>, vector<8x32xbf16>, vector<8x32xf32> -> vector<8x32xf32>
    %166 = tpu.concatenate %117, %133, %149, %165 in 1 : vector<8x32xf32>, vector<8x32xf32>, vector<8x32xf32>, vector<8x32xf32> -> vector<8x128xf32>
    %167 = vector.extract_strided_slice %12 {offsets = [16, 0], sizes = [8, 128], strides = [1, 1]} : vector<64x128xf32> to vector<8x128xf32>
    %168 = arith.truncf %167 : vector<8x128xf32> to vector<8x128xbf16>
    %169 = vector.extract_strided_slice %18 {offsets = [16, 0], sizes = [8, 128], strides = [1, 1]} : vector<64x128xf32> to vector<8x128xf32>
    %170 = arith.truncf %169 : vector<8x128xf32> to vector<8x128xbf16>
    %171 = vector.extract_strided_slice %24 {offsets = [16, 0], sizes = [8, 128], strides = [1, 1]} : vector<64x128xf32> to vector<8x128xf32>
    %172 = arith.truncf %171 : vector<8x128xf32> to vector<8x128xbf16>
    %173 = vector.extract_strided_slice %168 {offsets = [0, 0], sizes = [8, 32], strides = [1, 1]} : vector<8x128xbf16> to vector<8x32xbf16>
    %174 = vector.extract_strided_slice %170 {offsets = [0, 0], sizes = [8, 32], strides = [1, 1]} : vector<8x128xbf16> to vector<8x32xbf16>
    %cst_50 = arith.constant dense<0.000000e+00> : vector<8x8xf32>
    %175 = tpu.matmul %173, %174, %cst_50 {dimension_numbers = #tpu.dot_dimension_numbers<[1], [1], [0], [0], [0, 0, 1, 0], [], []>} : vector<8x32xbf16>, vector<8x32xbf16>, vector<8x8xf32> -> vector<8x8xf32>
    %cst_51 = arith.constant dense<0xFF800000> : vector<8xf32>
    %176 = vector.multi_reduction <maximumf>, %175, %cst_51 [1] : vector<8x8xf32> to vector<8xf32>
    %177 = vector.shape_cast %176 : vector<8xf32> to vector<8x1xf32>
    %178 = vector.broadcast %177 : vector<8x1xf32> to vector<8x8xf32>
    %179 = arith.subf %175, %178 : vector<8x8xf32>
    %180 = math.exp %179 : vector<8x8xf32>
    %cst_52 = arith.constant dense<0.000000e+00> : vector<8xf32>
    %181 = vector.multi_reduction <add>, %180, %cst_52 [1] : vector<8x8xf32> to vector<8xf32>
    %182 = vector.shape_cast %181 : vector<8xf32> to vector<8x1xf32>
    %183 = tpu.reciprocal %182 {approx = true} : vector<8x1xf32> -> vector<8x1xf32>
    %184 = vector.broadcast %183 : vector<8x1xf32> to vector<8x8xf32>
    %185 = arith.mulf %180, %184 : vector<8x8xf32>
    %186 = arith.truncf %185 : vector<8x8xf32> to vector<8x8xbf16>
    %187 = vector.extract_strided_slice %172 {offsets = [0, 0], sizes = [8, 32], strides = [1, 1]} : vector<8x128xbf16> to vector<8x32xbf16>
    %cst_53 = arith.constant dense<0.000000e+00> : vector<8x32xf32>
    %188 = tpu.matmul %186, %187, %cst_53 {dimension_numbers = #tpu.dot_dimension_numbers<[1], [0], [0], [1], [0, 0, 1, 1], [], []>} : vector<8x8xbf16>, vector<8x32xbf16>, vector<8x32xf32> -> vector<8x32xf32>
    %189 = vector.extract_strided_slice %168 {offsets = [0, 32], sizes = [8, 32], strides = [1, 1]} : vector<8x128xbf16> to vector<8x32xbf16>
    %190 = vector.extract_strided_slice %170 {offsets = [0, 32], sizes = [8, 32], strides = [1, 1]} : vector<8x128xbf16> to vector<8x32xbf16>
    %cst_54 = arith.constant dense<0.000000e+00> : vector<8x8xf32>
    %191 = tpu.matmul %189, %190, %cst_54 {dimension_numbers = #tpu.dot_dimension_numbers<[1], [1], [0], [0], [0, 0, 1, 0], [], []>} : vector<8x32xbf16>, vector<8x32xbf16>, vector<8x8xf32> -> vector<8x8xf32>
    %cst_55 = arith.constant dense<0xFF800000> : vector<8xf32>
    %192 = vector.multi_reduction <maximumf>, %191, %cst_55 [1] : vector<8x8xf32> to vector<8xf32>
    %193 = vector.shape_cast %192 : vector<8xf32> to vector<8x1xf32>
    %194 = vector.broadcast %193 : vector<8x1xf32> to vector<8x8xf32>
    %195 = arith.subf %191, %194 : vector<8x8xf32>
    %196 = math.exp %195 : vector<8x8xf32>
    %cst_56 = arith.constant dense<0.000000e+00> : vector<8xf32>
    %197 = vector.multi_reduction <add>, %196, %cst_56 [1] : vector<8x8xf32> to vector<8xf32>
    %198 = vector.shape_cast %197 : vector<8xf32> to vector<8x1xf32>
    %199 = tpu.reciprocal %198 {approx = true} : vector<8x1xf32> -> vector<8x1xf32>
    %200 = vector.broadcast %199 : vector<8x1xf32> to vector<8x8xf32>
    %201 = arith.mulf %196, %200 : vector<8x8xf32>
    %202 = arith.truncf %201 : vector<8x8xf32> to vector<8x8xbf16>
    %203 = vector.extract_strided_slice %172 {offsets = [0, 32], sizes = [8, 32], strides = [1, 1]} : vector<8x128xbf16> to vector<8x32xbf16>
    %cst_57 = arith.constant dense<0.000000e+00> : vector<8x32xf32>
    %204 = tpu.matmul %202, %203, %cst_57 {dimension_numbers = #tpu.dot_dimension_numbers<[1], [0], [0], [1], [0, 0, 1, 1], [], []>} : vector<8x8xbf16>, vector<8x32xbf16>, vector<8x32xf32> -> vector<8x32xf32>
    %205 = vector.extract_strided_slice %168 {offsets = [0, 64], sizes = [8, 32], strides = [1, 1]} : vector<8x128xbf16> to vector<8x32xbf16>
    %206 = vector.extract_strided_slice %170 {offsets = [0, 64], sizes = [8, 32], strides = [1, 1]} : vector<8x128xbf16> to vector<8x32xbf16>
    %cst_58 = arith.constant dense<0.000000e+00> : vector<8x8xf32>
    %207 = tpu.matmul %205, %206, %cst_58 {dimension_numbers = #tpu.dot_dimension_numbers<[1], [1], [0], [0], [0, 0, 1, 0], [], []>} : vector<8x32xbf16>, vector<8x32xbf16>, vector<8x8xf32> -> vector<8x8xf32>
    %cst_59 = arith.constant dense<0xFF800000> : vector<8xf32>
    %208 = vector.multi_reduction <maximumf>, %207, %cst_59 [1] : vector<8x8xf32> to vector<8xf32>
    %209 = vector.shape_cast %208 : vector<8xf32> to vector<8x1xf32>
    %210 = vector.broadcast %209 : vector<8x1xf32> to vector<8x8xf32>
    %211 = arith.subf %207, %210 : vector<8x8xf32>
    %212 = math.exp %211 : vector<8x8xf32>
    %cst_60 = arith.constant dense<0.000000e+00> : vector<8xf32>
    %213 = vector.multi_reduction <add>, %212, %cst_60 [1] : vector<8x8xf32> to vector<8xf32>
    %214 = vector.shape_cast %213 : vector<8xf32> to vector<8x1xf32>
    %215 = tpu.reciprocal %214 {approx = true} : vector<8x1xf32> -> vector<8x1xf32>
    %216 = vector.broadcast %215 : vector<8x1xf32> to vector<8x8xf32>
    %217 = arith.mulf %212, %216 : vector<8x8xf32>
    %218 = arith.truncf %217 : vector<8x8xf32> to vector<8x8xbf16>
    %219 = vector.extract_strided_slice %172 {offsets = [0, 64], sizes = [8, 32], strides = [1, 1]} : vector<8x128xbf16> to vector<8x32xbf16>
    %cst_61 = arith.constant dense<0.000000e+00> : vector<8x32xf32>
    %220 = tpu.matmul %218, %219, %cst_61 {dimension_numbers = #tpu.dot_dimension_numbers<[1], [0], [0], [1], [0, 0, 1, 1], [], []>} : vector<8x8xbf16>, vector<8x32xbf16>, vector<8x32xf32> -> vector<8x32xf32>
    %221 = vector.extract_strided_slice %168 {offsets = [0, 96], sizes = [8, 32], strides = [1, 1]} : vector<8x128xbf16> to vector<8x32xbf16>
    %222 = vector.extract_strided_slice %170 {offsets = [0, 96], sizes = [8, 32], strides = [1, 1]} : vector<8x128xbf16> to vector<8x32xbf16>
    %cst_62 = arith.constant dense<0.000000e+00> : vector<8x8xf32>
    %223 = tpu.matmul %221, %222, %cst_62 {dimension_numbers = #tpu.dot_dimension_numbers<[1], [1], [0], [0], [0, 0, 1, 0], [], []>} : vector<8x32xbf16>, vector<8x32xbf16>, vector<8x8xf32> -> vector<8x8xf32>
    %cst_63 = arith.constant dense<0xFF800000> : vector<8xf32>
    %224 = vector.multi_reduction <maximumf>, %223, %cst_63 [1] : vector<8x8xf32> to vector<8xf32>
    %225 = vector.shape_cast %224 : vector<8xf32> to vector<8x1xf32>
    %226 = vector.broadcast %225 : vector<8x1xf32> to vector<8x8xf32>
    %227 = arith.subf %223, %226 : vector<8x8xf32>
    %228 = math.exp %227 : vector<8x8xf32>
    %cst_64 = arith.constant dense<0.000000e+00> : vector<8xf32>
    %229 = vector.multi_reduction <add>, %228, %cst_64 [1] : vector<8x8xf32> to vector<8xf32>
    %230 = vector.shape_cast %229 : vector<8xf32> to vector<8x1xf32>
    %231 = tpu.reciprocal %230 {approx = true} : vector<8x1xf32> -> vector<8x1xf32>
    %232 = vector.broadcast %231 : vector<8x1xf32> to vector<8x8xf32>
    %233 = arith.mulf %228, %232 : vector<8x8xf32>
    %234 = arith.truncf %233 : vector<8x8xf32> to vector<8x8xbf16>
    %235 = vector.extract_strided_slice %172 {offsets = [0, 96], sizes = [8, 32], strides = [1, 1]} : vector<8x128xbf16> to vector<8x32xbf16>
    %cst_65 = arith.constant dense<0.000000e+00> : vector<8x32xf32>
    %236 = tpu.matmul %234, %235, %cst_65 {dimension_numbers = #tpu.dot_dimension_numbers<[1], [0], [0], [1], [0, 0, 1, 1], [], []>} : vector<8x8xbf16>, vector<8x32xbf16>, vector<8x32xf32> -> vector<8x32xf32>
    %237 = tpu.concatenate %188, %204, %220, %236 in 1 : vector<8x32xf32>, vector<8x32xf32>, vector<8x32xf32>, vector<8x32xf32> -> vector<8x128xf32>
    %238 = vector.extract_strided_slice %12 {offsets = [24, 0], sizes = [8, 128], strides = [1, 1]} : vector<64x128xf32> to vector<8x128xf32>
    %239 = arith.truncf %238 : vector<8x128xf32> to vector<8x128xbf16>
    %240 = vector.extract_strided_slice %18 {offsets = [24, 0], sizes = [8, 128], strides = [1, 1]} : vector<64x128xf32> to vector<8x128xf32>
    %241 = arith.truncf %240 : vector<8x128xf32> to vector<8x128xbf16>
    %242 = vector.extract_strided_slice %24 {offsets = [24, 0], sizes = [8, 128], strides = [1, 1]} : vector<64x128xf32> to vector<8x128xf32>
    %243 = arith.truncf %242 : vector<8x128xf32> to vector<8x128xbf16>
    %244 = vector.extract_strided_slice %239 {offsets = [0, 0], sizes = [8, 32], strides = [1, 1]} : vector<8x128xbf16> to vector<8x32xbf16>
    %245 = vector.extract_strided_slice %241 {offsets = [0, 0], sizes = [8, 32], strides = [1, 1]} : vector<8x128xbf16> to vector<8x32xbf16>
    %cst_66 = arith.constant dense<0.000000e+00> : vector<8x8xf32>
    %246 = tpu.matmul %244, %245, %cst_66 {dimension_numbers = #tpu.dot_dimension_numbers<[1], [1], [0], [0], [0, 0, 1, 0], [], []>} : vector<8x32xbf16>, vector<8x32xbf16>, vector<8x8xf32> -> vector<8x8xf32>
    %cst_67 = arith.constant dense<0xFF800000> : vector<8xf32>
    %247 = vector.multi_reduction <maximumf>, %246, %cst_67 [1] : vector<8x8xf32> to vector<8xf32>
    %248 = vector.shape_cast %247 : vector<8xf32> to vector<8x1xf32>
    %249 = vector.broadcast %248 : vector<8x1xf32> to vector<8x8xf32>
    %250 = arith.subf %246, %249 : vector<8x8xf32>
    %251 = math.exp %250 : vector<8x8xf32>
    %cst_68 = arith.constant dense<0.000000e+00> : vector<8xf32>
    %252 = vector.multi_reduction <add>, %251, %cst_68 [1] : vector<8x8xf32> to vector<8xf32>
    %253 = vector.shape_cast %252 : vector<8xf32> to vector<8x1xf32>
    %254 = tpu.reciprocal %253 {approx = true} : vector<8x1xf32> -> vector<8x1xf32>
    %255 = vector.broadcast %254 : vector<8x1xf32> to vector<8x8xf32>
    %256 = arith.mulf %251, %255 : vector<8x8xf32>
    %257 = arith.truncf %256 : vector<8x8xf32> to vector<8x8xbf16>
    %258 = vector.extract_strided_slice %243 {offsets = [0, 0], sizes = [8, 32], strides = [1, 1]} : vector<8x128xbf16> to vector<8x32xbf16>
    %cst_69 = arith.constant dense<0.000000e+00> : vector<8x32xf32>
    %259 = tpu.matmul %257, %258, %cst_69 {dimension_numbers = #tpu.dot_dimension_numbers<[1], [0], [0], [1], [0, 0, 1, 1], [], []>} : vector<8x8xbf16>, vector<8x32xbf16>, vector<8x32xf32> -> vector<8x32xf32>
    %260 = vector.extract_strided_slice %239 {offsets = [0, 32], sizes = [8, 32], strides = [1, 1]} : vector<8x128xbf16> to vector<8x32xbf16>
    %261 = vector.extract_strided_slice %241 {offsets = [0, 32], sizes = [8, 32], strides = [1, 1]} : vector<8x128xbf16> to vector<8x32xbf16>
    %cst_70 = arith.constant dense<0.000000e+00> : vector<8x8xf32>
    %262 = tpu.matmul %260, %261, %cst_70 {dimension_numbers = #tpu.dot_dimension_numbers<[1], [1], [0], [0], [0, 0, 1, 0], [], []>} : vector<8x32xbf16>, vector<8x32xbf16>, vector<8x8xf32> -> vector<8x8xf32>
    %cst_71 = arith.constant dense<0xFF800000> : vector<8xf32>
    %263 = vector.multi_reduction <maximumf>, %262, %cst_71 [1] : vector<8x8xf32> to vector<8xf32>
    %264 = vector.shape_cast %263 : vector<8xf32> to vector<8x1xf32>
    %265 = vector.broadcast %264 : vector<8x1xf32> to vector<8x8xf32>
    %266 = arith.subf %262, %265 : vector<8x8xf32>
    %267 = math.exp %266 : vector<8x8xf32>
    %cst_72 = arith.constant dense<0.000000e+00> : vector<8xf32>
    %268 = vector.multi_reduction <add>, %267, %cst_72 [1] : vector<8x8xf32> to vector<8xf32>
    %269 = vector.shape_cast %268 : vector<8xf32> to vector<8x1xf32>
    %270 = tpu.reciprocal %269 {approx = true} : vector<8x1xf32> -> vector<8x1xf32>
    %271 = vector.broadcast %270 : vector<8x1xf32> to vector<8x8xf32>
    %272 = arith.mulf %267, %271 : vector<8x8xf32>
    %273 = arith.truncf %272 : vector<8x8xf32> to vector<8x8xbf16>
    %274 = vector.extract_strided_slice %243 {offsets = [0, 32], sizes = [8, 32], strides = [1, 1]} : vector<8x128xbf16> to vector<8x32xbf16>
    %cst_73 = arith.constant dense<0.000000e+00> : vector<8x32xf32>
    %275 = tpu.matmul %273, %274, %cst_73 {dimension_numbers = #tpu.dot_dimension_numbers<[1], [0], [0], [1], [0, 0, 1, 1], [], []>} : vector<8x8xbf16>, vector<8x32xbf16>, vector<8x32xf32> -> vector<8x32xf32>
    %276 = vector.extract_strided_slice %239 {offsets = [0, 64], sizes = [8, 32], strides = [1, 1]} : vector<8x128xbf16> to vector<8x32xbf16>
    %277 = vector.extract_strided_slice %241 {offsets = [0, 64], sizes = [8, 32], strides = [1, 1]} : vector<8x128xbf16> to vector<8x32xbf16>
    %cst_74 = arith.constant dense<0.000000e+00> : vector<8x8xf32>
    %278 = tpu.matmul %276, %277, %cst_74 {dimension_numbers = #tpu.dot_dimension_numbers<[1], [1], [0], [0], [0, 0, 1, 0], [], []>} : vector<8x32xbf16>, vector<8x32xbf16>, vector<8x8xf32> -> vector<8x8xf32>
    %cst_75 = arith.constant dense<0xFF800000> : vector<8xf32>
    %279 = vector.multi_reduction <maximumf>, %278, %cst_75 [1] : vector<8x8xf32> to vector<8xf32>
    %280 = vector.shape_cast %279 : vector<8xf32> to vector<8x1xf32>
    %281 = vector.broadcast %280 : vector<8x1xf32> to vector<8x8xf32>
    %282 = arith.subf %278, %281 : vector<8x8xf32>
    %283 = math.exp %282 : vector<8x8xf32>
    %cst_76 = arith.constant dense<0.000000e+00> : vector<8xf32>
    %284 = vector.multi_reduction <add>, %283, %cst_76 [1] : vector<8x8xf32> to vector<8xf32>
    %285 = vector.shape_cast %284 : vector<8xf32> to vector<8x1xf32>
    %286 = tpu.reciprocal %285 {approx = true} : vector<8x1xf32> -> vector<8x1xf32>
    %287 = vector.broadcast %286 : vector<8x1xf32> to vector<8x8xf32>
    %288 = arith.mulf %283, %287 : vector<8x8xf32>
    %289 = arith.truncf %288 : vector<8x8xf32> to vector<8x8xbf16>
    %290 = vector.extract_strided_slice %243 {offsets = [0, 64], sizes = [8, 32], strides = [1, 1]} : vector<8x128xbf16> to vector<8x32xbf16>
    %cst_77 = arith.constant dense<0.000000e+00> : vector<8x32xf32>
    %291 = tpu.matmul %289, %290, %cst_77 {dimension_numbers = #tpu.dot_dimension_numbers<[1], [0], [0], [1], [0, 0, 1, 1], [], []>} : vector<8x8xbf16>, vector<8x32xbf16>, vector<8x32xf32> -> vector<8x32xf32>
    %292 = vector.extract_strided_slice %239 {offsets = [0, 96], sizes = [8, 32], strides = [1, 1]} : vector<8x128xbf16> to vector<8x32xbf16>
    %293 = vector.extract_strided_slice %241 {offsets = [0, 96], sizes = [8, 32], strides = [1, 1]} : vector<8x128xbf16> to vector<8x32xbf16>
    %cst_78 = arith.constant dense<0.000000e+00> : vector<8x8xf32>
    %294 = tpu.matmul %292, %293, %cst_78 {dimension_numbers = #tpu.dot_dimension_numbers<[1], [1], [0], [0], [0, 0, 1, 0], [], []>} : vector<8x32xbf16>, vector<8x32xbf16>, vector<8x8xf32> -> vector<8x8xf32>
    %cst_79 = arith.constant dense<0xFF800000> : vector<8xf32>
    %295 = vector.multi_reduction <maximumf>, %294, %cst_79 [1] : vector<8x8xf32> to vector<8xf32>
    %296 = vector.shape_cast %295 : vector<8xf32> to vector<8x1xf32>
    %297 = vector.broadcast %296 : vector<8x1xf32> to vector<8x8xf32>
    %298 = arith.subf %294, %297 : vector<8x8xf32>
    %299 = math.exp %298 : vector<8x8xf32>
    %cst_80 = arith.constant dense<0.000000e+00> : vector<8xf32>
    %300 = vector.multi_reduction <add>, %299, %cst_80 [1] : vector<8x8xf32> to vector<8xf32>
    %301 = vector.shape_cast %300 : vector<8xf32> to vector<8x1xf32>
    %302 = tpu.reciprocal %301 {approx = true} : vector<8x1xf32> -> vector<8x1xf32>
    %303 = vector.broadcast %302 : vector<8x1xf32> to vector<8x8xf32>
    %304 = arith.mulf %299, %303 : vector<8x8xf32>
    %305 = arith.truncf %304 : vector<8x8xf32> to vector<8x8xbf16>
    %306 = vector.extract_strided_slice %243 {offsets = [0, 96], sizes = [8, 32], strides = [1, 1]} : vector<8x128xbf16> to vector<8x32xbf16>
    %cst_81 = arith.constant dense<0.000000e+00> : vector<8x32xf32>
    %307 = tpu.matmul %305, %306, %cst_81 {dimension_numbers = #tpu.dot_dimension_numbers<[1], [0], [0], [1], [0, 0, 1, 1], [], []>} : vector<8x8xbf16>, vector<8x32xbf16>, vector<8x32xf32> -> vector<8x32xf32>
    %308 = tpu.concatenate %259, %275, %291, %307 in 1 : vector<8x32xf32>, vector<8x32xf32>, vector<8x32xf32>, vector<8x32xf32> -> vector<8x128xf32>
    %309 = vector.extract_strided_slice %12 {offsets = [32, 0], sizes = [8, 128], strides = [1, 1]} : vector<64x128xf32> to vector<8x128xf32>
    %310 = arith.truncf %309 : vector<8x128xf32> to vector<8x128xbf16>
    %311 = vector.extract_strided_slice %18 {offsets = [32, 0], sizes = [8, 128], strides = [1, 1]} : vector<64x128xf32> to vector<8x128xf32>
    %312 = arith.truncf %311 : vector<8x128xf32> to vector<8x128xbf16>
    %313 = vector.extract_strided_slice %24 {offsets = [32, 0], sizes = [8, 128], strides = [1, 1]} : vector<64x128xf32> to vector<8x128xf32>
    %314 = arith.truncf %313 : vector<8x128xf32> to vector<8x128xbf16>
    %315 = vector.extract_strided_slice %310 {offsets = [0, 0], sizes = [8, 32], strides = [1, 1]} : vector<8x128xbf16> to vector<8x32xbf16>
    %316 = vector.extract_strided_slice %312 {offsets = [0, 0], sizes = [8, 32], strides = [1, 1]} : vector<8x128xbf16> to vector<8x32xbf16>
    %cst_82 = arith.constant dense<0.000000e+00> : vector<8x8xf32>
    %317 = tpu.matmul %315, %316, %cst_82 {dimension_numbers = #tpu.dot_dimension_numbers<[1], [1], [0], [0], [0, 0, 1, 0], [], []>} : vector<8x32xbf16>, vector<8x32xbf16>, vector<8x8xf32> -> vector<8x8xf32>
    %cst_83 = arith.constant dense<0xFF800000> : vector<8xf32>
    %318 = vector.multi_reduction <maximumf>, %317, %cst_83 [1] : vector<8x8xf32> to vector<8xf32>
    %319 = vector.shape_cast %318 : vector<8xf32> to vector<8x1xf32>
    %320 = vector.broadcast %319 : vector<8x1xf32> to vector<8x8xf32>
    %321 = arith.subf %317, %320 : vector<8x8xf32>
    %322 = math.exp %321 : vector<8x8xf32>
    %cst_84 = arith.constant dense<0.000000e+00> : vector<8xf32>
    %323 = vector.multi_reduction <add>, %322, %cst_84 [1] : vector<8x8xf32> to vector<8xf32>
    %324 = vector.shape_cast %323 : vector<8xf32> to vector<8x1xf32>
    %325 = tpu.reciprocal %324 {approx = true} : vector<8x1xf32> -> vector<8x1xf32>
    %326 = vector.broadcast %325 : vector<8x1xf32> to vector<8x8xf32>
    %327 = arith.mulf %322, %326 : vector<8x8xf32>
    %328 = arith.truncf %327 : vector<8x8xf32> to vector<8x8xbf16>
    %329 = vector.extract_strided_slice %314 {offsets = [0, 0], sizes = [8, 32], strides = [1, 1]} : vector<8x128xbf16> to vector<8x32xbf16>
    %cst_85 = arith.constant dense<0.000000e+00> : vector<8x32xf32>
    %330 = tpu.matmul %328, %329, %cst_85 {dimension_numbers = #tpu.dot_dimension_numbers<[1], [0], [0], [1], [0, 0, 1, 1], [], []>} : vector<8x8xbf16>, vector<8x32xbf16>, vector<8x32xf32> -> vector<8x32xf32>
    %331 = vector.extract_strided_slice %310 {offsets = [0, 32], sizes = [8, 32], strides = [1, 1]} : vector<8x128xbf16> to vector<8x32xbf16>
    %332 = vector.extract_strided_slice %312 {offsets = [0, 32], sizes = [8, 32], strides = [1, 1]} : vector<8x128xbf16> to vector<8x32xbf16>
    %cst_86 = arith.constant dense<0.000000e+00> : vector<8x8xf32>
    %333 = tpu.matmul %331, %332, %cst_86 {dimension_numbers = #tpu.dot_dimension_numbers<[1], [1], [0], [0], [0, 0, 1, 0], [], []>} : vector<8x32xbf16>, vector<8x32xbf16>, vector<8x8xf32> -> vector<8x8xf32>
    %cst_87 = arith.constant dense<0xFF800000> : vector<8xf32>
    %334 = vector.multi_reduction <maximumf>, %333, %cst_87 [1] : vector<8x8xf32> to vector<8xf32>
    %335 = vector.shape_cast %334 : vector<8xf32> to vector<8x1xf32>
    %336 = vector.broadcast %335 : vector<8x1xf32> to vector<8x8xf32>
    %337 = arith.subf %333, %336 : vector<8x8xf32>
    %338 = math.exp %337 : vector<8x8xf32>
    %cst_88 = arith.constant dense<0.000000e+00> : vector<8xf32>
    %339 = vector.multi_reduction <add>, %338, %cst_88 [1] : vector<8x8xf32> to vector<8xf32>
    %340 = vector.shape_cast %339 : vector<8xf32> to vector<8x1xf32>
    %341 = tpu.reciprocal %340 {approx = true} : vector<8x1xf32> -> vector<8x1xf32>
    %342 = vector.broadcast %341 : vector<8x1xf32> to vector<8x8xf32>
    %343 = arith.mulf %338, %342 : vector<8x8xf32>
    %344 = arith.truncf %343 : vector<8x8xf32> to vector<8x8xbf16>
    %345 = vector.extract_strided_slice %314 {offsets = [0, 32], sizes = [8, 32], strides = [1, 1]} : vector<8x128xbf16> to vector<8x32xbf16>
    %cst_89 = arith.constant dense<0.000000e+00> : vector<8x32xf32>
    %346 = tpu.matmul %344, %345, %cst_89 {dimension_numbers = #tpu.dot_dimension_numbers<[1], [0], [0], [1], [0, 0, 1, 1], [], []>} : vector<8x8xbf16>, vector<8x32xbf16>, vector<8x32xf32> -> vector<8x32xf32>
    %347 = vector.extract_strided_slice %310 {offsets = [0, 64], sizes = [8, 32], strides = [1, 1]} : vector<8x128xbf16> to vector<8x32xbf16>
    %348 = vector.extract_strided_slice %312 {offsets = [0, 64], sizes = [8, 32], strides = [1, 1]} : vector<8x128xbf16> to vector<8x32xbf16>
    %cst_90 = arith.constant dense<0.000000e+00> : vector<8x8xf32>
    %349 = tpu.matmul %347, %348, %cst_90 {dimension_numbers = #tpu.dot_dimension_numbers<[1], [1], [0], [0], [0, 0, 1, 0], [], []>} : vector<8x32xbf16>, vector<8x32xbf16>, vector<8x8xf32> -> vector<8x8xf32>
    %cst_91 = arith.constant dense<0xFF800000> : vector<8xf32>
    %350 = vector.multi_reduction <maximumf>, %349, %cst_91 [1] : vector<8x8xf32> to vector<8xf32>
    %351 = vector.shape_cast %350 : vector<8xf32> to vector<8x1xf32>
    %352 = vector.broadcast %351 : vector<8x1xf32> to vector<8x8xf32>
    %353 = arith.subf %349, %352 : vector<8x8xf32>
    %354 = math.exp %353 : vector<8x8xf32>
    %cst_92 = arith.constant dense<0.000000e+00> : vector<8xf32>
    %355 = vector.multi_reduction <add>, %354, %cst_92 [1] : vector<8x8xf32> to vector<8xf32>
    %356 = vector.shape_cast %355 : vector<8xf32> to vector<8x1xf32>
    %357 = tpu.reciprocal %356 {approx = true} : vector<8x1xf32> -> vector<8x1xf32>
    %358 = vector.broadcast %357 : vector<8x1xf32> to vector<8x8xf32>
    %359 = arith.mulf %354, %358 : vector<8x8xf32>
    %360 = arith.truncf %359 : vector<8x8xf32> to vector<8x8xbf16>
    %361 = vector.extract_strided_slice %314 {offsets = [0, 64], sizes = [8, 32], strides = [1, 1]} : vector<8x128xbf16> to vector<8x32xbf16>
    %cst_93 = arith.constant dense<0.000000e+00> : vector<8x32xf32>
    %362 = tpu.matmul %360, %361, %cst_93 {dimension_numbers = #tpu.dot_dimension_numbers<[1], [0], [0], [1], [0, 0, 1, 1], [], []>} : vector<8x8xbf16>, vector<8x32xbf16>, vector<8x32xf32> -> vector<8x32xf32>
    %363 = vector.extract_strided_slice %310 {offsets = [0, 96], sizes = [8, 32], strides = [1, 1]} : vector<8x128xbf16> to vector<8x32xbf16>
    %364 = vector.extract_strided_slice %312 {offsets = [0, 96], sizes = [8, 32], strides = [1, 1]} : vector<8x128xbf16> to vector<8x32xbf16>
    %cst_94 = arith.constant dense<0.000000e+00> : vector<8x8xf32>
    %365 = tpu.matmul %363, %364, %cst_94 {dimension_numbers = #tpu.dot_dimension_numbers<[1], [1], [0], [0], [0, 0, 1, 0], [], []>} : vector<8x32xbf16>, vector<8x32xbf16>, vector<8x8xf32> -> vector<8x8xf32>
    %cst_95 = arith.constant dense<0xFF800000> : vector<8xf32>
    %366 = vector.multi_reduction <maximumf>, %365, %cst_95 [1] : vector<8x8xf32> to vector<8xf32>
    %367 = vector.shape_cast %366 : vector<8xf32> to vector<8x1xf32>
    %368 = vector.broadcast %367 : vector<8x1xf32> to vector<8x8xf32>
    %369 = arith.subf %365, %368 : vector<8x8xf32>
    %370 = math.exp %369 : vector<8x8xf32>
    %cst_96 = arith.constant dense<0.000000e+00> : vector<8xf32>
    %371 = vector.multi_reduction <add>, %370, %cst_96 [1] : vector<8x8xf32> to vector<8xf32>
    %372 = vector.shape_cast %371 : vector<8xf32> to vector<8x1xf32>
    %373 = tpu.reciprocal %372 {approx = true} : vector<8x1xf32> -> vector<8x1xf32>
    %374 = vector.broadcast %373 : vector<8x1xf32> to vector<8x8xf32>
    %375 = arith.mulf %370, %374 : vector<8x8xf32>
    %376 = arith.truncf %375 : vector<8x8xf32> to vector<8x8xbf16>
    %377 = vector.extract_strided_slice %314 {offsets = [0, 96], sizes = [8, 32], strides = [1, 1]} : vector<8x128xbf16> to vector<8x32xbf16>
    %cst_97 = arith.constant dense<0.000000e+00> : vector<8x32xf32>
    %378 = tpu.matmul %376, %377, %cst_97 {dimension_numbers = #tpu.dot_dimension_numbers<[1], [0], [0], [1], [0, 0, 1, 1], [], []>} : vector<8x8xbf16>, vector<8x32xbf16>, vector<8x32xf32> -> vector<8x32xf32>
    %379 = tpu.concatenate %330, %346, %362, %378 in 1 : vector<8x32xf32>, vector<8x32xf32>, vector<8x32xf32>, vector<8x32xf32> -> vector<8x128xf32>
    %380 = vector.extract_strided_slice %12 {offsets = [40, 0], sizes = [8, 128], strides = [1, 1]} : vector<64x128xf32> to vector<8x128xf32>
    %381 = arith.truncf %380 : vector<8x128xf32> to vector<8x128xbf16>
    %382 = vector.extract_strided_slice %18 {offsets = [40, 0], sizes = [8, 128], strides = [1, 1]} : vector<64x128xf32> to vector<8x128xf32>
    %383 = arith.truncf %382 : vector<8x128xf32> to vector<8x128xbf16>
    %384 = vector.extract_strided_slice %24 {offsets = [40, 0], sizes = [8, 128], strides = [1, 1]} : vector<64x128xf32> to vector<8x128xf32>
    %385 = arith.truncf %384 : vector<8x128xf32> to vector<8x128xbf16>
    %386 = vector.extract_strided_slice %381 {offsets = [0, 0], sizes = [8, 32], strides = [1, 1]} : vector<8x128xbf16> to vector<8x32xbf16>
    %387 = vector.extract_strided_slice %383 {offsets = [0, 0], sizes = [8, 32], strides = [1, 1]} : vector<8x128xbf16> to vector<8x32xbf16>
    %cst_98 = arith.constant dense<0.000000e+00> : vector<8x8xf32>
    %388 = tpu.matmul %386, %387, %cst_98 {dimension_numbers = #tpu.dot_dimension_numbers<[1], [1], [0], [0], [0, 0, 1, 0], [], []>} : vector<8x32xbf16>, vector<8x32xbf16>, vector<8x8xf32> -> vector<8x8xf32>
    %cst_99 = arith.constant dense<0xFF800000> : vector<8xf32>
    %389 = vector.multi_reduction <maximumf>, %388, %cst_99 [1] : vector<8x8xf32> to vector<8xf32>
    %390 = vector.shape_cast %389 : vector<8xf32> to vector<8x1xf32>
    %391 = vector.broadcast %390 : vector<8x1xf32> to vector<8x8xf32>
    %392 = arith.subf %388, %391 : vector<8x8xf32>
    %393 = math.exp %392 : vector<8x8xf32>
    %cst_100 = arith.constant dense<0.000000e+00> : vector<8xf32>
    %394 = vector.multi_reduction <add>, %393, %cst_100 [1] : vector<8x8xf32> to vector<8xf32>
    %395 = vector.shape_cast %394 : vector<8xf32> to vector<8x1xf32>
    %396 = tpu.reciprocal %395 {approx = true} : vector<8x1xf32> -> vector<8x1xf32>
    %397 = vector.broadcast %396 : vector<8x1xf32> to vector<8x8xf32>
    %398 = arith.mulf %393, %397 : vector<8x8xf32>
    %399 = arith.truncf %398 : vector<8x8xf32> to vector<8x8xbf16>
    %400 = vector.extract_strided_slice %385 {offsets = [0, 0], sizes = [8, 32], strides = [1, 1]} : vector<8x128xbf16> to vector<8x32xbf16>
    %cst_101 = arith.constant dense<0.000000e+00> : vector<8x32xf32>
    %401 = tpu.matmul %399, %400, %cst_101 {dimension_numbers = #tpu.dot_dimension_numbers<[1], [0], [0], [1], [0, 0, 1, 1], [], []>} : vector<8x8xbf16>, vector<8x32xbf16>, vector<8x32xf32> -> vector<8x32xf32>
    %402 = vector.extract_strided_slice %381 {offsets = [0, 32], sizes = [8, 32], strides = [1, 1]} : vector<8x128xbf16> to vector<8x32xbf16>
    %403 = vector.extract_strided_slice %383 {offsets = [0, 32], sizes = [8, 32], strides = [1, 1]} : vector<8x128xbf16> to vector<8x32xbf16>
    %cst_102 = arith.constant dense<0.000000e+00> : vector<8x8xf32>
    %404 = tpu.matmul %402, %403, %cst_102 {dimension_numbers = #tpu.dot_dimension_numbers<[1], [1], [0], [0], [0, 0, 1, 0], [], []>} : vector<8x32xbf16>, vector<8x32xbf16>, vector<8x8xf32> -> vector<8x8xf32>
    %cst_103 = arith.constant dense<0xFF800000> : vector<8xf32>
    %405 = vector.multi_reduction <maximumf>, %404, %cst_103 [1] : vector<8x8xf32> to vector<8xf32>
    %406 = vector.shape_cast %405 : vector<8xf32> to vector<8x1xf32>
    %407 = vector.broadcast %406 : vector<8x1xf32> to vector<8x8xf32>
    %408 = arith.subf %404, %407 : vector<8x8xf32>
    %409 = math.exp %408 : vector<8x8xf32>
    %cst_104 = arith.constant dense<0.000000e+00> : vector<8xf32>
    %410 = vector.multi_reduction <add>, %409, %cst_104 [1] : vector<8x8xf32> to vector<8xf32>
    %411 = vector.shape_cast %410 : vector<8xf32> to vector<8x1xf32>
    %412 = tpu.reciprocal %411 {approx = true} : vector<8x1xf32> -> vector<8x1xf32>
    %413 = vector.broadcast %412 : vector<8x1xf32> to vector<8x8xf32>
    %414 = arith.mulf %409, %413 : vector<8x8xf32>
    %415 = arith.truncf %414 : vector<8x8xf32> to vector<8x8xbf16>
    %416 = vector.extract_strided_slice %385 {offsets = [0, 32], sizes = [8, 32], strides = [1, 1]} : vector<8x128xbf16> to vector<8x32xbf16>
    %cst_105 = arith.constant dense<0.000000e+00> : vector<8x32xf32>
    %417 = tpu.matmul %415, %416, %cst_105 {dimension_numbers = #tpu.dot_dimension_numbers<[1], [0], [0], [1], [0, 0, 1, 1], [], []>} : vector<8x8xbf16>, vector<8x32xbf16>, vector<8x32xf32> -> vector<8x32xf32>
    %418 = vector.extract_strided_slice %381 {offsets = [0, 64], sizes = [8, 32], strides = [1, 1]} : vector<8x128xbf16> to vector<8x32xbf16>
    %419 = vector.extract_strided_slice %383 {offsets = [0, 64], sizes = [8, 32], strides = [1, 1]} : vector<8x128xbf16> to vector<8x32xbf16>
    %cst_106 = arith.constant dense<0.000000e+00> : vector<8x8xf32>
    %420 = tpu.matmul %418, %419, %cst_106 {dimension_numbers = #tpu.dot_dimension_numbers<[1], [1], [0], [0], [0, 0, 1, 0], [], []>} : vector<8x32xbf16>, vector<8x32xbf16>, vector<8x8xf32> -> vector<8x8xf32>
    %cst_107 = arith.constant dense<0xFF800000> : vector<8xf32>
    %421 = vector.multi_reduction <maximumf>, %420, %cst_107 [1] : vector<8x8xf32> to vector<8xf32>
    %422 = vector.shape_cast %421 : vector<8xf32> to vector<8x1xf32>
    %423 = vector.broadcast %422 : vector<8x1xf32> to vector<8x8xf32>
    %424 = arith.subf %420, %423 : vector<8x8xf32>
    %425 = math.exp %424 : vector<8x8xf32>
    %cst_108 = arith.constant dense<0.000000e+00> : vector<8xf32>
    %426 = vector.multi_reduction <add>, %425, %cst_108 [1] : vector<8x8xf32> to vector<8xf32>
    %427 = vector.shape_cast %426 : vector<8xf32> to vector<8x1xf32>
    %428 = tpu.reciprocal %427 {approx = true} : vector<8x1xf32> -> vector<8x1xf32>
    %429 = vector.broadcast %428 : vector<8x1xf32> to vector<8x8xf32>
    %430 = arith.mulf %425, %429 : vector<8x8xf32>
    %431 = arith.truncf %430 : vector<8x8xf32> to vector<8x8xbf16>
    %432 = vector.extract_strided_slice %385 {offsets = [0, 64], sizes = [8, 32], strides = [1, 1]} : vector<8x128xbf16> to vector<8x32xbf16>
    %cst_109 = arith.constant dense<0.000000e+00> : vector<8x32xf32>
    %433 = tpu.matmul %431, %432, %cst_109 {dimension_numbers = #tpu.dot_dimension_numbers<[1], [0], [0], [1], [0, 0, 1, 1], [], []>} : vector<8x8xbf16>, vector<8x32xbf16>, vector<8x32xf32> -> vector<8x32xf32>
    %434 = vector.extract_strided_slice %381 {offsets = [0, 96], sizes = [8, 32], strides = [1, 1]} : vector<8x128xbf16> to vector<8x32xbf16>
    %435 = vector.extract_strided_slice %383 {offsets = [0, 96], sizes = [8, 32], strides = [1, 1]} : vector<8x128xbf16> to vector<8x32xbf16>
    %cst_110 = arith.constant dense<0.000000e+00> : vector<8x8xf32>
    %436 = tpu.matmul %434, %435, %cst_110 {dimension_numbers = #tpu.dot_dimension_numbers<[1], [1], [0], [0], [0, 0, 1, 0], [], []>} : vector<8x32xbf16>, vector<8x32xbf16>, vector<8x8xf32> -> vector<8x8xf32>
    %cst_111 = arith.constant dense<0xFF800000> : vector<8xf32>
    %437 = vector.multi_reduction <maximumf>, %436, %cst_111 [1] : vector<8x8xf32> to vector<8xf32>
    %438 = vector.shape_cast %437 : vector<8xf32> to vector<8x1xf32>
    %439 = vector.broadcast %438 : vector<8x1xf32> to vector<8x8xf32>
    %440 = arith.subf %436, %439 : vector<8x8xf32>
    %441 = math.exp %440 : vector<8x8xf32>
    %cst_112 = arith.constant dense<0.000000e+00> : vector<8xf32>
    %442 = vector.multi_reduction <add>, %441, %cst_112 [1] : vector<8x8xf32> to vector<8xf32>
    %443 = vector.shape_cast %442 : vector<8xf32> to vector<8x1xf32>
    %444 = tpu.reciprocal %443 {approx = true} : vector<8x1xf32> -> vector<8x1xf32>
    %445 = vector.broadcast %444 : vector<8x1xf32> to vector<8x8xf32>
    %446 = arith.mulf %441, %445 : vector<8x8xf32>
    %447 = arith.truncf %446 : vector<8x8xf32> to vector<8x8xbf16>
    %448 = vector.extract_strided_slice %385 {offsets = [0, 96], sizes = [8, 32], strides = [1, 1]} : vector<8x128xbf16> to vector<8x32xbf16>
    %cst_113 = arith.constant dense<0.000000e+00> : vector<8x32xf32>
    %449 = tpu.matmul %447, %448, %cst_113 {dimension_numbers = #tpu.dot_dimension_numbers<[1], [0], [0], [1], [0, 0, 1, 1], [], []>} : vector<8x8xbf16>, vector<8x32xbf16>, vector<8x32xf32> -> vector<8x32xf32>
    %450 = tpu.concatenate %401, %417, %433, %449 in 1 : vector<8x32xf32>, vector<8x32xf32>, vector<8x32xf32>, vector<8x32xf32> -> vector<8x128xf32>
    %451 = vector.extract_strided_slice %12 {offsets = [48, 0], sizes = [8, 128], strides = [1, 1]} : vector<64x128xf32> to vector<8x128xf32>
    %452 = arith.truncf %451 : vector<8x128xf32> to vector<8x128xbf16>
    %453 = vector.extract_strided_slice %18 {offsets = [48, 0], sizes = [8, 128], strides = [1, 1]} : vector<64x128xf32> to vector<8x128xf32>
    %454 = arith.truncf %453 : vector<8x128xf32> to vector<8x128xbf16>
    %455 = vector.extract_strided_slice %24 {offsets = [48, 0], sizes = [8, 128], strides = [1, 1]} : vector<64x128xf32> to vector<8x128xf32>
    %456 = arith.truncf %455 : vector<8x128xf32> to vector<8x128xbf16>
    %457 = vector.extract_strided_slice %452 {offsets = [0, 0], sizes = [8, 32], strides = [1, 1]} : vector<8x128xbf16> to vector<8x32xbf16>
    %458 = vector.extract_strided_slice %454 {offsets = [0, 0], sizes = [8, 32], strides = [1, 1]} : vector<8x128xbf16> to vector<8x32xbf16>
    %cst_114 = arith.constant dense<0.000000e+00> : vector<8x8xf32>
    %459 = tpu.matmul %457, %458, %cst_114 {dimension_numbers = #tpu.dot_dimension_numbers<[1], [1], [0], [0], [0, 0, 1, 0], [], []>} : vector<8x32xbf16>, vector<8x32xbf16>, vector<8x8xf32> -> vector<8x8xf32>
    %cst_115 = arith.constant dense<0xFF800000> : vector<8xf32>
    %460 = vector.multi_reduction <maximumf>, %459, %cst_115 [1] : vector<8x8xf32> to vector<8xf32>
    %461 = vector.shape_cast %460 : vector<8xf32> to vector<8x1xf32>
    %462 = vector.broadcast %461 : vector<8x1xf32> to vector<8x8xf32>
    %463 = arith.subf %459, %462 : vector<8x8xf32>
    %464 = math.exp %463 : vector<8x8xf32>
    %cst_116 = arith.constant dense<0.000000e+00> : vector<8xf32>
    %465 = vector.multi_reduction <add>, %464, %cst_116 [1] : vector<8x8xf32> to vector<8xf32>
    %466 = vector.shape_cast %465 : vector<8xf32> to vector<8x1xf32>
    %467 = tpu.reciprocal %466 {approx = true} : vector<8x1xf32> -> vector<8x1xf32>
    %468 = vector.broadcast %467 : vector<8x1xf32> to vector<8x8xf32>
    %469 = arith.mulf %464, %468 : vector<8x8xf32>
    %470 = arith.truncf %469 : vector<8x8xf32> to vector<8x8xbf16>
    %471 = vector.extract_strided_slice %456 {offsets = [0, 0], sizes = [8, 32], strides = [1, 1]} : vector<8x128xbf16> to vector<8x32xbf16>
    %cst_117 = arith.constant dense<0.000000e+00> : vector<8x32xf32>
    %472 = tpu.matmul %470, %471, %cst_117 {dimension_numbers = #tpu.dot_dimension_numbers<[1], [0], [0], [1], [0, 0, 1, 1], [], []>} : vector<8x8xbf16>, vector<8x32xbf16>, vector<8x32xf32> -> vector<8x32xf32>
    %473 = vector.extract_strided_slice %452 {offsets = [0, 32], sizes = [8, 32], strides = [1, 1]} : vector<8x128xbf16> to vector<8x32xbf16>
    %474 = vector.extract_strided_slice %454 {offsets = [0, 32], sizes = [8, 32], strides = [1, 1]} : vector<8x128xbf16> to vector<8x32xbf16>
    %cst_118 = arith.constant dense<0.000000e+00> : vector<8x8xf32>
    %475 = tpu.matmul %473, %474, %cst_118 {dimension_numbers = #tpu.dot_dimension_numbers<[1], [1], [0], [0], [0, 0, 1, 0], [], []>} : vector<8x32xbf16>, vector<8x32xbf16>, vector<8x8xf32> -> vector<8x8xf32>
    %cst_119 = arith.constant dense<0xFF800000> : vector<8xf32>
    %476 = vector.multi_reduction <maximumf>, %475, %cst_119 [1] : vector<8x8xf32> to vector<8xf32>
    %477 = vector.shape_cast %476 : vector<8xf32> to vector<8x1xf32>
    %478 = vector.broadcast %477 : vector<8x1xf32> to vector<8x8xf32>
    %479 = arith.subf %475, %478 : vector<8x8xf32>
    %480 = math.exp %479 : vector<8x8xf32>
    %cst_120 = arith.constant dense<0.000000e+00> : vector<8xf32>
    %481 = vector.multi_reduction <add>, %480, %cst_120 [1] : vector<8x8xf32> to vector<8xf32>
    %482 = vector.shape_cast %481 : vector<8xf32> to vector<8x1xf32>
    %483 = tpu.reciprocal %482 {approx = true} : vector<8x1xf32> -> vector<8x1xf32>
    %484 = vector.broadcast %483 : vector<8x1xf32> to vector<8x8xf32>
    %485 = arith.mulf %480, %484 : vector<8x8xf32>
    %486 = arith.truncf %485 : vector<8x8xf32> to vector<8x8xbf16>
    %487 = vector.extract_strided_slice %456 {offsets = [0, 32], sizes = [8, 32], strides = [1, 1]} : vector<8x128xbf16> to vector<8x32xbf16>
    %cst_121 = arith.constant dense<0.000000e+00> : vector<8x32xf32>
    %488 = tpu.matmul %486, %487, %cst_121 {dimension_numbers = #tpu.dot_dimension_numbers<[1], [0], [0], [1], [0, 0, 1, 1], [], []>} : vector<8x8xbf16>, vector<8x32xbf16>, vector<8x32xf32> -> vector<8x32xf32>
    %489 = vector.extract_strided_slice %452 {offsets = [0, 64], sizes = [8, 32], strides = [1, 1]} : vector<8x128xbf16> to vector<8x32xbf16>
    %490 = vector.extract_strided_slice %454 {offsets = [0, 64], sizes = [8, 32], strides = [1, 1]} : vector<8x128xbf16> to vector<8x32xbf16>
    %cst_122 = arith.constant dense<0.000000e+00> : vector<8x8xf32>
    %491 = tpu.matmul %489, %490, %cst_122 {dimension_numbers = #tpu.dot_dimension_numbers<[1], [1], [0], [0], [0, 0, 1, 0], [], []>} : vector<8x32xbf16>, vector<8x32xbf16>, vector<8x8xf32> -> vector<8x8xf32>
    %cst_123 = arith.constant dense<0xFF800000> : vector<8xf32>
    %492 = vector.multi_reduction <maximumf>, %491, %cst_123 [1] : vector<8x8xf32> to vector<8xf32>
    %493 = vector.shape_cast %492 : vector<8xf32> to vector<8x1xf32>
    %494 = vector.broadcast %493 : vector<8x1xf32> to vector<8x8xf32>
    %495 = arith.subf %491, %494 : vector<8x8xf32>
    %496 = math.exp %495 : vector<8x8xf32>
    %cst_124 = arith.constant dense<0.000000e+00> : vector<8xf32>
    %497 = vector.multi_reduction <add>, %496, %cst_124 [1] : vector<8x8xf32> to vector<8xf32>
    %498 = vector.shape_cast %497 : vector<8xf32> to vector<8x1xf32>
    %499 = tpu.reciprocal %498 {approx = true} : vector<8x1xf32> -> vector<8x1xf32>
    %500 = vector.broadcast %499 : vector<8x1xf32> to vector<8x8xf32>
    %501 = arith.mulf %496, %500 : vector<8x8xf32>
    %502 = arith.truncf %501 : vector<8x8xf32> to vector<8x8xbf16>
    %503 = vector.extract_strided_slice %456 {offsets = [0, 64], sizes = [8, 32], strides = [1, 1]} : vector<8x128xbf16> to vector<8x32xbf16>
    %cst_125 = arith.constant dense<0.000000e+00> : vector<8x32xf32>
    %504 = tpu.matmul %502, %503, %cst_125 {dimension_numbers = #tpu.dot_dimension_numbers<[1], [0], [0], [1], [0, 0, 1, 1], [], []>} : vector<8x8xbf16>, vector<8x32xbf16>, vector<8x32xf32> -> vector<8x32xf32>
    %505 = vector.extract_strided_slice %452 {offsets = [0, 96], sizes = [8, 32], strides = [1, 1]} : vector<8x128xbf16> to vector<8x32xbf16>
    %506 = vector.extract_strided_slice %454 {offsets = [0, 96], sizes = [8, 32], strides = [1, 1]} : vector<8x128xbf16> to vector<8x32xbf16>
    %cst_126 = arith.constant dense<0.000000e+00> : vector<8x8xf32>
    %507 = tpu.matmul %505, %506, %cst_126 {dimension_numbers = #tpu.dot_dimension_numbers<[1], [1], [0], [0], [0, 0, 1, 0], [], []>} : vector<8x32xbf16>, vector<8x32xbf16>, vector<8x8xf32> -> vector<8x8xf32>
    %cst_127 = arith.constant dense<0xFF800000> : vector<8xf32>
    %508 = vector.multi_reduction <maximumf>, %507, %cst_127 [1] : vector<8x8xf32> to vector<8xf32>
    %509 = vector.shape_cast %508 : vector<8xf32> to vector<8x1xf32>
    %510 = vector.broadcast %509 : vector<8x1xf32> to vector<8x8xf32>
    %511 = arith.subf %507, %510 : vector<8x8xf32>
    %512 = math.exp %511 : vector<8x8xf32>
    %cst_128 = arith.constant dense<0.000000e+00> : vector<8xf32>
    %513 = vector.multi_reduction <add>, %512, %cst_128 [1] : vector<8x8xf32> to vector<8xf32>
    %514 = vector.shape_cast %513 : vector<8xf32> to vector<8x1xf32>
    %515 = tpu.reciprocal %514 {approx = true} : vector<8x1xf32> -> vector<8x1xf32>
    %516 = vector.broadcast %515 : vector<8x1xf32> to vector<8x8xf32>
    %517 = arith.mulf %512, %516 : vector<8x8xf32>
    %518 = arith.truncf %517 : vector<8x8xf32> to vector<8x8xbf16>
    %519 = vector.extract_strided_slice %456 {offsets = [0, 96], sizes = [8, 32], strides = [1, 1]} : vector<8x128xbf16> to vector<8x32xbf16>
    %cst_129 = arith.constant dense<0.000000e+00> : vector<8x32xf32>
    %520 = tpu.matmul %518, %519, %cst_129 {dimension_numbers = #tpu.dot_dimension_numbers<[1], [0], [0], [1], [0, 0, 1, 1], [], []>} : vector<8x8xbf16>, vector<8x32xbf16>, vector<8x32xf32> -> vector<8x32xf32>
    %521 = tpu.concatenate %472, %488, %504, %520 in 1 : vector<8x32xf32>, vector<8x32xf32>, vector<8x32xf32>, vector<8x32xf32> -> vector<8x128xf32>
    %522 = vector.extract_strided_slice %12 {offsets = [56, 0], sizes = [8, 128], strides = [1, 1]} : vector<64x128xf32> to vector<8x128xf32>
    %523 = arith.truncf %522 : vector<8x128xf32> to vector<8x128xbf16>
    %524 = vector.extract_strided_slice %18 {offsets = [56, 0], sizes = [8, 128], strides = [1, 1]} : vector<64x128xf32> to vector<8x128xf32>
    %525 = arith.truncf %524 : vector<8x128xf32> to vector<8x128xbf16>
    %526 = vector.extract_strided_slice %24 {offsets = [56, 0], sizes = [8, 128], strides = [1, 1]} : vector<64x128xf32> to vector<8x128xf32>
    %527 = arith.truncf %526 : vector<8x128xf32> to vector<8x128xbf16>
    %528 = vector.extract_strided_slice %523 {offsets = [0, 0], sizes = [8, 32], strides = [1, 1]} : vector<8x128xbf16> to vector<8x32xbf16>
    %529 = vector.extract_strided_slice %525 {offsets = [0, 0], sizes = [8, 32], strides = [1, 1]} : vector<8x128xbf16> to vector<8x32xbf16>
    %cst_130 = arith.constant dense<0.000000e+00> : vector<8x8xf32>
    %530 = tpu.matmul %528, %529, %cst_130 {dimension_numbers = #tpu.dot_dimension_numbers<[1], [1], [0], [0], [0, 0, 1, 0], [], []>} : vector<8x32xbf16>, vector<8x32xbf16>, vector<8x8xf32> -> vector<8x8xf32>
    %cst_131 = arith.constant dense<0xFF800000> : vector<8xf32>
    %531 = vector.multi_reduction <maximumf>, %530, %cst_131 [1] : vector<8x8xf32> to vector<8xf32>
    %532 = vector.shape_cast %531 : vector<8xf32> to vector<8x1xf32>
    %533 = vector.broadcast %532 : vector<8x1xf32> to vector<8x8xf32>
    %534 = arith.subf %530, %533 : vector<8x8xf32>
    %535 = math.exp %534 : vector<8x8xf32>
    %cst_132 = arith.constant dense<0.000000e+00> : vector<8xf32>
    %536 = vector.multi_reduction <add>, %535, %cst_132 [1] : vector<8x8xf32> to vector<8xf32>
    %537 = vector.shape_cast %536 : vector<8xf32> to vector<8x1xf32>
    %538 = tpu.reciprocal %537 {approx = true} : vector<8x1xf32> -> vector<8x1xf32>
    %539 = vector.broadcast %538 : vector<8x1xf32> to vector<8x8xf32>
    %540 = arith.mulf %535, %539 : vector<8x8xf32>
    %541 = arith.truncf %540 : vector<8x8xf32> to vector<8x8xbf16>
    %542 = vector.extract_strided_slice %527 {offsets = [0, 0], sizes = [8, 32], strides = [1, 1]} : vector<8x128xbf16> to vector<8x32xbf16>
    %cst_133 = arith.constant dense<0.000000e+00> : vector<8x32xf32>
    %543 = tpu.matmul %541, %542, %cst_133 {dimension_numbers = #tpu.dot_dimension_numbers<[1], [0], [0], [1], [0, 0, 1, 1], [], []>} : vector<8x8xbf16>, vector<8x32xbf16>, vector<8x32xf32> -> vector<8x32xf32>
    %544 = vector.extract_strided_slice %523 {offsets = [0, 32], sizes = [8, 32], strides = [1, 1]} : vector<8x128xbf16> to vector<8x32xbf16>
    %545 = vector.extract_strided_slice %525 {offsets = [0, 32], sizes = [8, 32], strides = [1, 1]} : vector<8x128xbf16> to vector<8x32xbf16>
    %cst_134 = arith.constant dense<0.000000e+00> : vector<8x8xf32>
    %546 = tpu.matmul %544, %545, %cst_134 {dimension_numbers = #tpu.dot_dimension_numbers<[1], [1], [0], [0], [0, 0, 1, 0], [], []>} : vector<8x32xbf16>, vector<8x32xbf16>, vector<8x8xf32> -> vector<8x8xf32>
    %cst_135 = arith.constant dense<0xFF800000> : vector<8xf32>
    %547 = vector.multi_reduction <maximumf>, %546, %cst_135 [1] : vector<8x8xf32> to vector<8xf32>
    %548 = vector.shape_cast %547 : vector<8xf32> to vector<8x1xf32>
    %549 = vector.broadcast %548 : vector<8x1xf32> to vector<8x8xf32>
    %550 = arith.subf %546, %549 : vector<8x8xf32>
    %551 = math.exp %550 : vector<8x8xf32>
    %cst_136 = arith.constant dense<0.000000e+00> : vector<8xf32>
    %552 = vector.multi_reduction <add>, %551, %cst_136 [1] : vector<8x8xf32> to vector<8xf32>
    %553 = vector.shape_cast %552 : vector<8xf32> to vector<8x1xf32>
    %554 = tpu.reciprocal %553 {approx = true} : vector<8x1xf32> -> vector<8x1xf32>
    %555 = vector.broadcast %554 : vector<8x1xf32> to vector<8x8xf32>
    %556 = arith.mulf %551, %555 : vector<8x8xf32>
    %557 = arith.truncf %556 : vector<8x8xf32> to vector<8x8xbf16>
    %558 = vector.extract_strided_slice %527 {offsets = [0, 32], sizes = [8, 32], strides = [1, 1]} : vector<8x128xbf16> to vector<8x32xbf16>
    %cst_137 = arith.constant dense<0.000000e+00> : vector<8x32xf32>
    %559 = tpu.matmul %557, %558, %cst_137 {dimension_numbers = #tpu.dot_dimension_numbers<[1], [0], [0], [1], [0, 0, 1, 1], [], []>} : vector<8x8xbf16>, vector<8x32xbf16>, vector<8x32xf32> -> vector<8x32xf32>
    %560 = vector.extract_strided_slice %523 {offsets = [0, 64], sizes = [8, 32], strides = [1, 1]} : vector<8x128xbf16> to vector<8x32xbf16>
    %561 = vector.extract_strided_slice %525 {offsets = [0, 64], sizes = [8, 32], strides = [1, 1]} : vector<8x128xbf16> to vector<8x32xbf16>
    %cst_138 = arith.constant dense<0.000000e+00> : vector<8x8xf32>
    %562 = tpu.matmul %560, %561, %cst_138 {dimension_numbers = #tpu.dot_dimension_numbers<[1], [1], [0], [0], [0, 0, 1, 0], [], []>} : vector<8x32xbf16>, vector<8x32xbf16>, vector<8x8xf32> -> vector<8x8xf32>
    %cst_139 = arith.constant dense<0xFF800000> : vector<8xf32>
    %563 = vector.multi_reduction <maximumf>, %562, %cst_139 [1] : vector<8x8xf32> to vector<8xf32>
    %564 = vector.shape_cast %563 : vector<8xf32> to vector<8x1xf32>
    %565 = vector.broadcast %564 : vector<8x1xf32> to vector<8x8xf32>
    %566 = arith.subf %562, %565 : vector<8x8xf32>
    %567 = math.exp %566 : vector<8x8xf32>
    %cst_140 = arith.constant dense<0.000000e+00> : vector<8xf32>
    %568 = vector.multi_reduction <add>, %567, %cst_140 [1] : vector<8x8xf32> to vector<8xf32>
    %569 = vector.shape_cast %568 : vector<8xf32> to vector<8x1xf32>
    %570 = tpu.reciprocal %569 {approx = true} : vector<8x1xf32> -> vector<8x1xf32>
    %571 = vector.broadcast %570 : vector<8x1xf32> to vector<8x8xf32>
    %572 = arith.mulf %567, %571 : vector<8x8xf32>
    %573 = arith.truncf %572 : vector<8x8xf32> to vector<8x8xbf16>
    %574 = vector.extract_strided_slice %527 {offsets = [0, 64], sizes = [8, 32], strides = [1, 1]} : vector<8x128xbf16> to vector<8x32xbf16>
    %cst_141 = arith.constant dense<0.000000e+00> : vector<8x32xf32>
    %575 = tpu.matmul %573, %574, %cst_141 {dimension_numbers = #tpu.dot_dimension_numbers<[1], [0], [0], [1], [0, 0, 1, 1], [], []>} : vector<8x8xbf16>, vector<8x32xbf16>, vector<8x32xf32> -> vector<8x32xf32>
    %576 = vector.extract_strided_slice %523 {offsets = [0, 96], sizes = [8, 32], strides = [1, 1]} : vector<8x128xbf16> to vector<8x32xbf16>
    %577 = vector.extract_strided_slice %525 {offsets = [0, 96], sizes = [8, 32], strides = [1, 1]} : vector<8x128xbf16> to vector<8x32xbf16>
    %cst_142 = arith.constant dense<0.000000e+00> : vector<8x8xf32>
    %578 = tpu.matmul %576, %577, %cst_142 {dimension_numbers = #tpu.dot_dimension_numbers<[1], [1], [0], [0], [0, 0, 1, 0], [], []>} : vector<8x32xbf16>, vector<8x32xbf16>, vector<8x8xf32> -> vector<8x8xf32>
    %cst_143 = arith.constant dense<0xFF800000> : vector<8xf32>
    %579 = vector.multi_reduction <maximumf>, %578, %cst_143 [1] : vector<8x8xf32> to vector<8xf32>
    %580 = vector.shape_cast %579 : vector<8xf32> to vector<8x1xf32>
    %581 = vector.broadcast %580 : vector<8x1xf32> to vector<8x8xf32>
    %582 = arith.subf %578, %581 : vector<8x8xf32>
    %583 = math.exp %582 : vector<8x8xf32>
    %cst_144 = arith.constant dense<0.000000e+00> : vector<8xf32>
    %584 = vector.multi_reduction <add>, %583, %cst_144 [1] : vector<8x8xf32> to vector<8xf32>
    %585 = vector.shape_cast %584 : vector<8xf32> to vector<8x1xf32>
    %586 = tpu.reciprocal %585 {approx = true} : vector<8x1xf32> -> vector<8x1xf32>
    %587 = vector.broadcast %586 : vector<8x1xf32> to vector<8x8xf32>
    %588 = arith.mulf %583, %587 : vector<8x8xf32>
    %589 = arith.truncf %588 : vector<8x8xf32> to vector<8x8xbf16>
    %590 = vector.extract_strided_slice %527 {offsets = [0, 96], sizes = [8, 32], strides = [1, 1]} : vector<8x128xbf16> to vector<8x32xbf16>
    %cst_145 = arith.constant dense<0.000000e+00> : vector<8x32xf32>
    %591 = tpu.matmul %589, %590, %cst_145 {dimension_numbers = #tpu.dot_dimension_numbers<[1], [0], [0], [1], [0, 0, 1, 1], [], []>} : vector<8x8xbf16>, vector<8x32xbf16>, vector<8x32xf32> -> vector<8x32xf32>
    %592 = tpu.concatenate %543, %559, %575, %591 in 1 : vector<8x32xf32>, vector<8x32xf32>, vector<8x32xf32>, vector<8x32xf32> -> vector<8x128xf32>
    %593 = tpu.concatenate %95, %166, %237, %308, %379, %450, %521, %592 in 0 : vector<8x128xf32>, vector<8x128xf32>, vector<8x128xf32>, vector<8x128xf32>, vector<8x128xf32>, vector<8x128xf32>, vector<8x128xf32>, vector<8x128xf32> -> vector<64x128xf32>
    %594 = arith.truncf %593 : vector<64x128xf32> to vector<64x128xbf16>
    %c0_146 = arith.constant 0 : index
    %c3 = arith.constant 3 : index
    %c0_147 = arith.constant 0 : index
    %c0_148 = arith.constant 0 : index
    %595 = vector.load %arg3[%c0_146, %c3, %c0_147, %c0_148] : memref<1x6x128x128xbf16, #tpu.memory_space<vmem>>, vector<1x1x128x128xbf16>
    %596 = vector.shape_cast %595 : vector<1x1x128x128xbf16> to vector<128x128xbf16>
    %cst_149 = arith.constant dense<0.000000e+00> : vector<64x128xf32>
    %597 = tpu.matmul %594, %596, %cst_149 {dimension_numbers = #tpu.dot_dimension_numbers<[1], [0], [0], [1], [0, 0, 1, 1], [], []>} : vector<64x128xbf16>, vector<128x128xbf16>, vector<64x128xf32> -> vector<64x128xf32>
    %598 = vector.extract_strided_slice %4 {offsets = [3, 0], sizes = [1, 128], strides = [1, 1]} : vector<10x128xf32> to vector<1x128xf32>
    %599 = vector.broadcast %598 : vector<1x128xf32> to vector<64x128xf32>
    %600 = arith.addf %597, %599 : vector<64x128xf32>
    %601 = arith.addf %1, %600 : vector<64x128xf32>
    %cst_150 = arith.constant dense<0.000000e+00> : vector<64xf32>
    %602 = vector.multi_reduction <add>, %601, %cst_150 [1] : vector<64x128xf32> to vector<64xf32>
    %603 = vector.shape_cast %602 : vector<64xf32> to vector<64x1xf32>
    %cst_151 = arith.constant 1.280000e+02 : f32
    %604 = vector.broadcast %cst_151 : f32 to vector<64x1xf32>
    %605 = arith.divf %603, %604 : vector<64x1xf32>
    %606 = vector.broadcast %605 : vector<64x1xf32> to vector<64x128xf32>
    %607 = arith.subf %601, %606 : vector<64x128xf32>
    %608 = arith.mulf %607, %607 : vector<64x128xf32>
    %cst_152 = arith.constant dense<0.000000e+00> : vector<64xf32>
    %609 = vector.multi_reduction <add>, %608, %cst_152 [1] : vector<64x128xf32> to vector<64xf32>
    %610 = vector.shape_cast %609 : vector<64xf32> to vector<64x1xf32>
    %cst_153 = arith.constant 1.280000e+02 : f32
    %611 = vector.broadcast %cst_153 : f32 to vector<64x1xf32>
    %612 = arith.divf %610, %611 : vector<64x1xf32>
    %613 = vector.broadcast %605 : vector<64x1xf32> to vector<64x128xf32>
    %614 = arith.subf %601, %613 : vector<64x128xf32>
    %cst_154 = arith.constant 9.99999974E-6 : f32
    %615 = vector.broadcast %cst_154 : f32 to vector<64x1xf32>
    %616 = arith.addf %612, %615 : vector<64x1xf32>
    %617 = math.rsqrt %616 : vector<64x1xf32>
    %618 = vector.broadcast %617 : vector<64x1xf32> to vector<64x128xf32>
    %619 = arith.mulf %614, %618 : vector<64x128xf32>
    %620 = vector.extract_strided_slice %4 {offsets = [4, 0], sizes = [1, 128], strides = [1, 1]} : vector<10x128xf32> to vector<1x128xf32>
    %621 = vector.broadcast %620 : vector<1x128xf32> to vector<64x128xf32>
    %622 = arith.mulf %619, %621 : vector<64x128xf32>
    %623 = vector.extract_strided_slice %4 {offsets = [5, 0], sizes = [1, 128], strides = [1, 1]} : vector<10x128xf32> to vector<1x128xf32>
    %624 = vector.broadcast %623 : vector<1x128xf32> to vector<64x128xf32>
    %625 = arith.addf %622, %624 : vector<64x128xf32>
    %626 = arith.truncf %625 : vector<64x128xf32> to vector<64x128xbf16>
    %c0_155 = arith.constant 0 : index
    %c4 = arith.constant 4 : index
    %c0_156 = arith.constant 0 : index
    %c0_157 = arith.constant 0 : index
    %627 = vector.load %arg3[%c0_155, %c4, %c0_156, %c0_157] : memref<1x6x128x128xbf16, #tpu.memory_space<vmem>>, vector<1x1x128x128xbf16>
    %628 = vector.shape_cast %627 : vector<1x1x128x128xbf16> to vector<128x128xbf16>
    %cst_158 = arith.constant dense<0.000000e+00> : vector<64x128xf32>
    %629 = tpu.matmul %626, %628, %cst_158 {dimension_numbers = #tpu.dot_dimension_numbers<[1], [0], [0], [1], [0, 0, 1, 1], [], []>} : vector<64x128xbf16>, vector<128x128xbf16>, vector<64x128xf32> -> vector<64x128xf32>
    %630 = vector.extract_strided_slice %4 {offsets = [8, 0], sizes = [1, 128], strides = [1, 1]} : vector<10x128xf32> to vector<1x128xf32>
    %631 = vector.broadcast %630 : vector<1x128xf32> to vector<64x128xf32>
    %632 = arith.addf %629, %631 : vector<64x128xf32>
    %cst_159 = arith.constant 0.000000e+00 : f32
    %633 = vector.broadcast %cst_159 : f32 to vector<64x128xf32>
    %634 = arith.maximumf %632, %633 : vector<64x128xf32>
    %635 = arith.truncf %634 : vector<64x128xf32> to vector<64x128xbf16>
    %c0_160 = arith.constant 0 : index
    %c5 = arith.constant 5 : index
    %c0_161 = arith.constant 0 : index
    %c0_162 = arith.constant 0 : index
    %636 = vector.load %arg3[%c0_160, %c5, %c0_161, %c0_162] : memref<1x6x128x128xbf16, #tpu.memory_space<vmem>>, vector<1x1x128x128xbf16>
    %637 = vector.shape_cast %636 : vector<1x1x128x128xbf16> to vector<128x128xbf16>
    %cst_163 = arith.constant dense<0.000000e+00> : vector<64x128xf32>
    %638 = tpu.matmul %635, %637, %cst_163 {dimension_numbers = #tpu.dot_dimension_numbers<[1], [0], [0], [1], [0, 0, 1, 1], [], []>} : vector<64x128xbf16>, vector<128x128xbf16>, vector<64x128xf32> -> vector<64x128xf32>
    %639 = vector.extract_strided_slice %4 {offsets = [9, 0], sizes = [1, 128], strides = [1, 1]} : vector<10x128xf32> to vector<1x128xf32>
    %640 = vector.broadcast %639 : vector<1x128xf32> to vector<64x128xf32>
    %641 = arith.addf %638, %640 : vector<64x128xf32>
    %642 = arith.addf %625, %641 : vector<64x128xf32>
    %cst_164 = arith.constant dense<0.000000e+00> : vector<64xf32>
    %643 = vector.multi_reduction <add>, %642, %cst_164 [1] : vector<64x128xf32> to vector<64xf32>
    %644 = vector.shape_cast %643 : vector<64xf32> to vector<64x1xf32>
    %cst_165 = arith.constant 1.280000e+02 : f32
    %645 = vector.broadcast %cst_165 : f32 to vector<64x1xf32>
    %646 = arith.divf %644, %645 : vector<64x1xf32>
    %647 = vector.broadcast %646 : vector<64x1xf32> to vector<64x128xf32>
    %648 = arith.subf %642, %647 : vector<64x128xf32>
    %649 = arith.mulf %648, %648 : vector<64x128xf32>
    %cst_166 = arith.constant dense<0.000000e+00> : vector<64xf32>
    %650 = vector.multi_reduction <add>, %649, %cst_166 [1] : vector<64x128xf32> to vector<64xf32>
    %651 = vector.shape_cast %650 : vector<64xf32> to vector<64x1xf32>
    %cst_167 = arith.constant 1.280000e+02 : f32
    %652 = vector.broadcast %cst_167 : f32 to vector<64x1xf32>
    %653 = arith.divf %651, %652 : vector<64x1xf32>
    %654 = vector.broadcast %646 : vector<64x1xf32> to vector<64x128xf32>
    %655 = arith.subf %642, %654 : vector<64x128xf32>
    %cst_168 = arith.constant 9.99999974E-6 : f32
    %656 = vector.broadcast %cst_168 : f32 to vector<64x1xf32>
    %657 = arith.addf %653, %656 : vector<64x1xf32>
    %658 = math.rsqrt %657 : vector<64x1xf32>
    %659 = vector.broadcast %658 : vector<64x1xf32> to vector<64x128xf32>
    %660 = arith.mulf %655, %659 : vector<64x128xf32>
    %661 = vector.extract_strided_slice %4 {offsets = [6, 0], sizes = [1, 128], strides = [1, 1]} : vector<10x128xf32> to vector<1x128xf32>
    %662 = vector.broadcast %661 : vector<1x128xf32> to vector<64x128xf32>
    %663 = arith.mulf %660, %662 : vector<64x128xf32>
    %664 = vector.extract_strided_slice %4 {offsets = [7, 0], sizes = [1, 128], strides = [1, 1]} : vector<10x128xf32> to vector<1x128xf32>
    %665 = vector.broadcast %664 : vector<1x128xf32> to vector<64x128xf32>
    %666 = arith.addf %663, %665 : vector<64x128xf32>
    %667 = vector.shape_cast %666 : vector<64x128xf32> to vector<8x8x128xf32>
    %c0_169 = arith.constant 0 : index
    %c0_170 = arith.constant 0 : index
    %c0_171 = arith.constant 0 : index
    %668 = vector.load %arg5[%c0_169, %c0_170, %c0_171] : memref<8x8x128xf32, #tpu.memory_space<vmem>>, vector<8x8x128xf32>
    tpu.vector_store %arg5[%c0_169, %c0_170, %c0_171], %667 {strides = array<i32>} : memref<8x8x128xf32, #tpu.memory_space<vmem>>, vector<8x8x128xf32>,
    return
  }
  func.func @transform_0(%arg0: i32, %arg1: i32) -> (i32, i32, i32) {
    %c0_i32 = arith.constant 0 : i32
    %c0_i32_0 = arith.constant 0 : i32
    return %arg1, %c0_i32, %arg0 : i32, i32, i32
  }
  func.func @transform_1(%arg0: i32, %arg1: i32) -> (i32, i32, i32, i32) {
    %c0_i32 = arith.constant 0 : i32
    %c0_i32_0 = arith.constant 0 : i32
    %c0_i32_1 = arith.constant 0 : i32
    %c0_i32_2 = arith.constant 0 : i32
    return %arg0, %c0_i32, %c0_i32_0, %c0_i32_1 : i32, i32, i32, i32
  }
  func.func @transform_2(%arg0: i32, %arg1: i32) -> (i32, i32, i32) {
    %c0_i32 = arith.constant 0 : i32
    %c0_i32_0 = arith.constant 0 : i32
    %c0_i32_1 = arith.constant 0 : i32
    return %arg0, %c0_i32, %c0_i32_0 : i32, i32, i32
  }
  func.func @transform_3(%arg0: i32, %arg1: i32) -> (i32, i32, i32) {
    %c0_i32 = arith.constant 0 : i32
    %c0_i32_0 = arith.constant 0 : i32
    return %arg1, %c0_i32, %arg0 : i32, i32, i32
  }
}

</mosaic_0001>

<llo_original>
// kernel: partitioned_transformer_encoder_layer.1
$region0: #{partitioned_transformer_encoder_layer.1}
  #allocation0 [shape = 'u32[]', space=smem, size = 0x4, offset = 0x4, fixed_abs, tag = 'smem constant byte address 0x4 - core index']
  #allocation1 [shape = 'u32[72,128]{1,0:T(1,128)}', space=vmem, size = 0x9000, scoped, tag = 'internal scratch']
  %s0 = inlined_call_operand.vmem [shape: f32[16,8,256], index: 0, kind: input, shape index: {}]
  %s1 = inlined_call_operand.vmem [shape: bf16[2,6,128,128], index: 1, kind: input, shape index: {}]
  %s2 = inlined_call_operand.vmem [shape: f32[2,10,128], index: 2, kind: input, shape index: {}]
  %s3 = inlined_call_operand.vmem [shape: f32[16,8,256], index: 3, kind: output, shape index: {}]
  %s4 = sld [smem:[#allocation0]]
  $region117: #{partitioned_transformer_encoder_layer.1} parent=0
    _
  %s6 = ssub.s32 1, %s4
  %s7 = scalar_select 0, %s6, %s4
  $region1: #{partitioned_transformer_encoder_layer.1} parent=0
    #allocation2 [shape = 'u8[65536]{0}', space=vmem, size = 0x10000, scoped, tag = 'input window, operand 0']
    #allocation3 [shape = 'u8[65536]{0}', space=vmem, size = 0x10000, scoped, tag = 'output window, operand 0']
    loop: start=0, step=1, limit=6
    $region2: #{partitioned_transformer_encoder_layer.1} parent=1 // loop_pre_header
      _
    $region3: #{partitioned_transformer_encoder_layer.1} parent=1 // loop_header
      %s9 = sphi 0, %s13
      %p10 = scmp.ge.s32.totalorder %s9, 6
      %s16 = sphi 0, %s28
      %s17 = sphi 0, %s24
      %s18 = sphi 0, %s16
      %s19 = sphi 0, %s17
      %s20 = sphi 0, %s18
      %s21 = sphi 0, %s19
      %s33 = sphi 0, %s35
      %s36 = sphi 0, %s33
      %s37 = sphi 0, %s36
      %s53 = sphi 0, %s37
      %s59 = sphi 0, %s61
      %s62 = sphi 0, %s59
      %s63 = sphi 0, %s62
      %s79 = sphi 0, %s63
      %s85 = sphi 0, %s87
      %s88 = sphi 0, %s85
      %s89 = sphi 0, %s88
      %s105 = sphi 0, %s89
      %s113 = sphi 0, %s115
      %s116 = sphi 0, %s113
      %s117 = sphi 0, %s116
      %s133 = sphi 0, %s117
    $region4: #{partitioned_transformer_encoder_layer.1} parent=1 // loop_header_branch
      %12 = sbr.rel (%p10) target = $region8
    $region5: #{partitioned_transformer_encoder_layer.1} parent=1 // loop_body
      %s14 = ssub.s32 %s9, 1
      %s15 = ssub.s32 %s9, 2
      %s22 = sadd.s32 1, %s17
      %p23 = scmp.ge.s32.totalorder %s22, 2
      %s24 = scalar_select %p23, 0, %s22
      %s25 = sadd.s32 1, %s16
      %s26 = scalar_select %p23, %s25, %s16
      %p27 = scmp.ge.s32.totalorder %s26, 2
      %s28 = scalar_select %p27, 0, %s26
      %s29 = ssub.s32 %s17, %s24
      %s30 = ssub.s32 %s16, %s28
      %s31 = sor.u32 %s29, %s30
      %p32 = scmp.eq.s32.totalorder %s31, 0
      %s34 = sadd.s32 %s33, 1
      %s35 = scalar_select %p32, %s33, %s34
      %p38 = pneg %p32
      %p39 = scmp.eq.s32.totalorder %s9, 3
      %p40 = por %p38, %p39
      %p41 = scmp.ne.s32.totalorder %s33, %s36
      %p42 = scmp.eq.s32.totalorder %s9, 0
      %p43 = por %p41, %p42
      %p44 = scmp.ne.s32.totalorder %s33, %s36
      %p45 = scmp.eq.s32.totalorder %s14, 3
      %p46 = por %p44, %p45
      %p47 = scmp.ne.s32.totalorder %s36, %s37
      %p48 = scmp.eq.s32.totalorder %s14, 0
      %p49 = por %p47, %p48
      %p50 = scmp.ne.s32.totalorder %s36, %s37
      %p51 = scmp.eq.s32.totalorder %s15, 3
      %p52 = por %p50, %p51
      %p54 = scmp.ne.s32.totalorder %s37, %s53
      %p55 = scmp.eq.s32.totalorder %s15, 0
      %p56 = por %p54, %p55
      %s57 = ssub.s32 %s16, %s28
      %p58 = scmp.eq.s32.totalorder %s57, 0
      %s60 = sadd.s32 %s59, 1
      %s61 = scalar_select %p58, %s59, %s60
      %p64 = pneg %p58
      %p65 = scmp.eq.s32.totalorder %s9, 3
      %p66 = por %p64, %p65
      %p67 = scmp.ne.s32.totalorder %s59, %s62
      %p68 = scmp.eq.s32.totalorder %s9, 0
      %p69 = por %p67, %p68
      %p70 = scmp.ne.s32.totalorder %s59, %s62
      %p71 = scmp.eq.s32.totalorder %s14, 3
      %p72 = por %p70, %p71
      %p73 = scmp.ne.s32.totalorder %s62, %s63
      %p74 = scmp.eq.s32.totalorder %s14, 0
      %p75 = por %p73, %p74
      %p76 = scmp.ne.s32.totalorder %s62, %s63
      %p77 = scmp.eq.s32.totalorder %s15, 3
      %p78 = por %p76, %p77
      %p80 = scmp.ne.s32.totalorder %s63, %s79
      %p81 = scmp.eq.s32.totalorder %s15, 0
      %p82 = por %p80, %p81
      %s83 = ssub.s32 %s16, %s28
      %p84 = scmp.eq.s32.totalorder %s83, 0
      %s86 = sadd.s32 %s85, 1
      %s87 = scalar_select %p84, %s85, %s86
      %p90 = pneg %p84
      %p91 = scmp.eq.s32.totalorder %s9, 3
      %p92 = por %p90, %p91
      %p93 = scmp.ne.s32.totalorder %s85, %s88
      %p94 = scmp.eq.s32.totalorder %s9, 0
      %p95 = por %p93, %p94
      %p96 = scmp.ne.s32.totalorder %s85, %s88
      %p97 = scmp.eq.s32.totalorder %s14, 3
      %p98 = por %p96, %p97
      %p99 = scmp.ne.s32.totalorder %s88, %s89
      %p100 = scmp.eq.s32.totalorder %s14, 0
      %p101 = por %p99, %p100
      %p102 = scmp.ne.s32.totalorder %s88, %s89
      %p103 = scmp.eq.s32.totalorder %s15, 3
      %p104 = por %p102, %p103
      %p106 = scmp.ne.s32.totalorder %s89, %s105
      %p107 = scmp.eq.s32.totalorder %s15, 0
      %p108 = por %p106, %p107
      %s109 = ssub.s32 %s17, %s24
      %s110 = ssub.s32 %s16, %s28
      %s111 = sor.u32 %s109, %s110
      %p112 = scmp.eq.s32.totalorder %s111, 0
      %s114 = sadd.s32 %s113, 1
      %s115 = scalar_select %p112, %s113, %s114
      %p118 = pneg %p112
      %p119 = scmp.eq.s32.totalorder %s9, 3
      %p120 = por %p118, %p119
      %p121 = scmp.ne.s32.totalorder %s113, %s116
      %p122 = scmp.eq.s32.totalorder %s9, 0
      %p123 = por %p121, %p122
      %p124 = scmp.ne.s32.totalorder %s113, %s116
      %p125 = scmp.eq.s32.totalorder %s14, 3
      %p126 = por %p124, %p125
      %p127 = scmp.ne.s32.totalorder %s116, %s117
      %p128 = scmp.eq.s32.totalorder %s14, 0
      %p129 = por %p127, %p128
      %p130 = scmp.ne.s32.totalorder %s116, %s117
      %p131 = scmp.eq.s32.totalorder %s15, 3
      %p132 = por %p130, %p131
      %p134 = scmp.ne.s32.totalorder %s117, %s133
      %p135 = scmp.eq.s32.totalorder %s15, 0
      %p136 = por %p134, %p135
      %p137 = scmp.le.s32.totalorder 1, %s9
      %p138 = scmp.lt.s32.totalorder %s9, 5
      %p139 = pnand %p137, %p138
      %p140 = pneg %p139
      // Predicated region
      $region9: #{partitioned_transformer_encoder_layer.1} parent=5 // pred_check
        _
      $region10: #{partitioned_transformer_encoder_layer.1} parent=5 // pred_check_branch
        %142 = sbr.rel (%p139) target = $region12
      $region11: #{partitioned_transformer_encoder_layer.1} parent=5 // pred_region
        %s143 = ssub.s32 %s9, 1
      $region12: #{partitioned_transformer_encoder_layer.1} parent=5 // pred_fallthru
        _
      %p144 = scmp.lt.s32.totalorder %s9, 4
      // Predicated region
      $region13: #{partitioned_transformer_encoder_layer.1} parent=5 // pred_check
        %p145 = pneg %p144
      $region14: #{partitioned_transformer_encoder_layer.1} parent=5 // pred_check_branch
        %147 = sbr.rel (%p145) target = $region16
      $region15: #{partitioned_transformer_encoder_layer.1} parent=5 // pred_region
        // Predicated region
        $region17: #{partitioned_transformer_encoder_layer.1} parent=15 // pred_check
          %p148 = pneg %p43
        $region18: #{partitioned_transformer_encoder_layer.1} parent=15 // pred_check_branch
          %150 = sbr.rel (%p148) target = $region20
        $region19: #{partitioned_transformer_encoder_layer.1} parent=15 // pred_region
          %s151 = sand.u32 %s33, 1
          %s152 = sand.u32 %s33, 1
          %s153 = smul.addr %s152, 64
          %s154 = scalar_lea.vmem [#allocation2], %s153
          %s155 = smul.u32 8, %s17
          %s156 = smul.addr %s155, 2
          %s157 = sadd.s32 %s16, %s156
          %s158 = smul.addr %s157, 8
          %s159 = scalar_lea.vmem %s0, %s158
          // Predicated region
          $region21: #{partitioned_transformer_encoder_layer.1} parent=19 // pred_check
            _
          $region22: #{partitioned_transformer_encoder_layer.1} parent=19 // pred_check_branch
            %161 = sbr.rel (0) target = $region24
          $region23: #{partitioned_transformer_encoder_layer.1} parent=19 // pred_region
            // Predicated region
            $region25: #{partitioned_transformer_encoder_layer.1} parent=23 // pred_check
              _
            $region26: #{partitioned_transformer_encoder_layer.1} parent=23 // pred_check_branch
              %163 = sbr.rel (0) target = $region28
            $region27: #{partitioned_transformer_encoder_layer.1} parent=23 // pred_region
              // Predicated region
              $region40: #{partitioned_transformer_encoder_layer.1} parent=27 // pred_check
                _
              $region41: #{partitioned_transformer_encoder_layer.1} parent=27 // pred_check_branch
                %193 = sbr.rel (0) target = $region43
              $region42: #{partitioned_transformer_encoder_layer.1} parent=27 // pred_region
                loop: start=0, step=1, limit=1
                $region44: #{partitioned_transformer_encoder_layer.1} parent=42 // loop_pre_header
                  _
                $region45: #{partitioned_transformer_encoder_layer.1} parent=42 // loop_header
                  %s195 = sphi 0, %s199
                  %p196 = scmp.ge.s32.totalorder %s195, 1
                  %s200 = sphi %s159, %s159
                  %s201 = sphi %s154, %s154
                $region46: #{partitioned_transformer_encoder_layer.1} parent=42 // loop_header_branch
                  %198 = sbr.rel (%p196) target = $region50
                $region47: #{partitioned_transformer_encoder_layer.1} parent=42 // loop_body
                  %v202 = vld [vmem:[%s200] sm:$0xff]
                  %203 = vst [vmem:[%s201] sm:$0xff] %v202
                  %v204 = vld [vmem:[%s200 + $0x10] sm:$0xff]
                  %205 = vst [vmem:[%s201 + $0x8] sm:$0xff] %v204
                  %v206 = vld [vmem:[%s200 + $0x20] sm:$0xff]
                  %207 = vst [vmem:[%s201 + $0x10] sm:$0xff] %v206
                  %v208 = vld [vmem:[%s200 + $0x30] sm:$0xff]
                  %209 = vst [vmem:[%s201 + $0x18] sm:$0xff] %v208
                  %v210 = vld [vmem:[%s200 + $0x40] sm:$0xff]
                  %211 = vst [vmem:[%s201 + $0x20] sm:$0xff] %v210
                  %v212 = vld [vmem:[%s200 + $0x50] sm:$0xff]
                  %213 = vst [vmem:[%s201 + $0x28] sm:$0xff] %v212
                  %v214 = vld [vmem:[%s200 + $0x60] sm:$0xff]
                  %215 = vst [vmem:[%s201 + $0x30] sm:$0xff] %v214
                  %v216 = vld [vmem:[%s200 + $0x70] sm:$0xff]
                  %217 = vst [vmem:[%s201 + $0x38] sm:$0xff] %v216
                $region48: #{partitioned_transformer_encoder_layer.1} parent=42 // loop_footer
                  %s199 = sadd.s32 1, %s195
                $region49: #{partitioned_transformer_encoder_layer.1} parent=42 // loop_footer_branch
                  %194 = sbr.rel target = $region45
                $region50: #{partitioned_transformer_encoder_layer.1} parent=42 // loop_exit
                  _
              $region43: #{partitioned_transformer_encoder_layer.1} parent=27 // pred_fallthru
                _
              // Predicated region
              $region51: #{partitioned_transformer_encoder_layer.1} parent=27 // pred_check
                _
              $region52: #{partitioned_transformer_encoder_layer.1} parent=27 // pred_check_branch
                %219 = sbr.rel target = $region54
              $region53: #{partitioned_transformer_encoder_layer.1} parent=27 // pred_region
                _
              $region54: #{partitioned_transformer_encoder_layer.1} parent=27 // pred_fallthru
                _
            $region28: #{partitioned_transformer_encoder_layer.1} parent=23 // pred_fallthru
              _
            // Predicated region
            $region29: #{partitioned_transformer_encoder_layer.1} parent=23 // pred_check
              _
            $region30: #{partitioned_transformer_encoder_layer.1} parent=23 // pred_check_branch
              %165 = sbr.rel target = $region32
            $region31: #{partitioned_transformer_encoder_layer.1} parent=23 // pred_region
              %s167 = ssub.s32 256, 1
              loop: start=0, step=1, limit=1
              $region33: #{partitioned_transformer_encoder_layer.1} parent=31 // loop_pre_header
                _
              $region34: #{partitioned_transformer_encoder_layer.1} parent=31 // loop_header
                %s169 = sphi 0, %s173
                %p170 = scmp.ge.s32.totalorder %s169, 1
                %s174 = sphi %s159, %s159
                %s175 = sphi %s154, %s154
              $region35: #{partitioned_transformer_encoder_layer.1} parent=31 // loop_header_branch
                %172 = sbr.rel (%p170) target = $region39
              $region36: #{partitioned_transformer_encoder_layer.1} parent=31 // loop_body
                %v176 = vld [vmem:[%s174] sm:%s167]
                %177 = vst [vmem:[%s175] sm:%s167] %v176
                %v178 = vld [vmem:[%s174 + $0x10] sm:%s167]
                %179 = vst [vmem:[%s175 + $0x8] sm:%s167] %v178
                %v180 = vld [vmem:[%s174 + $0x20] sm:%s167]
                %181 = vst [vmem:[%s175 + $0x10] sm:%s167] %v180
                %v182 = vld [vmem:[%s174 + $0x30] sm:%s167]
                %183 = vst [vmem:[%s175 + $0x18] sm:%s167] %v182
                %v184 = vld [vmem:[%s174 + $0x40] sm:%s167]
                %185 = vst [vmem:[%s175 + $0x20] sm:%s167] %v184
                %v186 = vld [vmem:[%s174 + $0x50] sm:%s167]
                %187 = vst [vmem:[%s175 + $0x28] sm:%s167] %v186
                %v188 = vld [vmem:[%s174 + $0x60] sm:%s167]
                %189 = vst [vmem:[%s175 + $0x30] sm:%s167] %v188
                %v190 = vld [vmem:[%s174 + $0x70] sm:%s167]
                %191 = vst [vmem:[%s175 + $0x38] sm:%s167] %v190
              $region37: #{partitioned_transformer_encoder_layer.1} parent=31 // loop_footer
                %s173 = sadd.s32 1, %s169
              $region38: #{partitioned_transformer_encoder_layer.1} parent=31 // loop_footer_branch
                %168 = sbr.rel target = $region34
              $region39: #{partitioned_transformer_encoder_layer.1} parent=31 // loop_exit
                _
            $region32: #{partitioned_transformer_encoder_layer.1} parent=23 // pred_fallthru
              _
          $region24: #{partitioned_transformer_encoder_layer.1} parent=19 // pred_fallthru
            _
          %220 = vnop
        $region20: #{partitioned_transformer_encoder_layer.1} parent=15 // pred_fallthru
          _
        // Predicated region
        $region55: #{partitioned_transformer_encoder_layer.1} parent=15 // pred_check
          %p221 = pneg %p69
        $region56: #{partitioned_transformer_encoder_layer.1} parent=15 // pred_check_branch
          %223 = sbr.rel (%p221) target = $region58
        $region57: #{partitioned_transformer_encoder_layer.1} parent=15 // pred_region
          %p224 = scmp.lt.s32.totalorder %s16, 1
          %s225 = scalar_select %p224, %s16, 1
          %s226 = smul.addr %s225, 96
          %s227 = smul.addr %s226, 4
          %s228 = scalar_lea.vmem %s1, %s227
        $region58: #{partitioned_transformer_encoder_layer.1} parent=15 // pred_fallthru
          _
        // Predicated region
        $region59: #{partitioned_transformer_encoder_layer.1} parent=15 // pred_check
          %p229 = pneg %p95
        $region60: #{partitioned_transformer_encoder_layer.1} parent=15 // pred_check_branch
          %231 = sbr.rel (%p229) target = $region62
        $region61: #{partitioned_transformer_encoder_layer.1} parent=15 // pred_region
          %p232 = scmp.lt.s32.totalorder %s16, 1
          %s233 = scalar_select %p232, %s16, 1
          %s234 = smul.addr %s233, 2
          %s235 = smul.addr %s234, 8
          %s236 = scalar_lea.vmem %s2, %s235
        $region62: #{partitioned_transformer_encoder_layer.1} parent=15 // pred_fallthru
          _
      $region16: #{partitioned_transformer_encoder_layer.1} parent=5 // pred_fallthru
        _
      %p237 = scmp.le.s32.totalorder 1, %s9
      %p238 = scmp.lt.s32.totalorder %s9, 5
      %p239 = pnand %p237, %p238
      %p240 = pneg %p239
      // Predicated region
      $region63: #{partitioned_transformer_encoder_layer.1} parent=5 // pred_check
        _
      $region64: #{partitioned_transformer_encoder_layer.1} parent=5 // pred_check_branch
        %242 = sbr.rel (%p239) target = $region66
      $region65: #{partitioned_transformer_encoder_layer.1} parent=5 // pred_region
        %s243 = ssub.s32 %s9, 1
        %s244 = sand.u32 %s36, 1
        %s245 = sand.u32 %s36, 1
        %s246 = smul.addr %s245, 64
        %s247 = scalar_lea.vmem [#allocation2], %s246
        // Predicated region
        $region67: #{partitioned_transformer_encoder_layer.1} parent=65 // pred_check
          %p248 = pneg %p49
        $region68: #{partitioned_transformer_encoder_layer.1} parent=65 // pred_check_branch
          %250 = sbr.rel (%p248) target = $region70
        $region69: #{partitioned_transformer_encoder_layer.1} parent=65 // pred_region
          _
        $region70: #{partitioned_transformer_encoder_layer.1} parent=65 // pred_fallthru
          _
        %s251 = sand.u32 %s36, 1
        %s252 = sand.u32 %s36, 1
        %s253 = smul.addr %s252, 64
        %s254 = scalar_lea.vmem [#allocation2], %s253
        %p255 = pneg %p49
        %p256 = pneg %p46
        %p257 = scmp.lt.s32.totalorder %s18, 1
        %s258 = scalar_select %p257, %s18, 1
        %s259 = smul.addr %s258, 96
        %s260 = smul.addr %s259, 4
        %s261 = scalar_lea.vmem %s1, %s260
        %p262 = pneg %p75
        %p263 = pneg %p72
        %p264 = scmp.lt.s32.totalorder %s18, 1
        %s265 = scalar_select %p264, %s18, 1
        %s266 = smul.addr %s265, 2
        %s267 = smul.addr %s266, 8
        %s268 = scalar_lea.vmem %s2, %s267
        %p269 = pneg %p101
        %p270 = pneg %p98
        %p271 = pneg %p129
        %p272 = pneg %p126
        %s273 = sand.u32 %s116, 1
        %s274 = sand.u32 %s116, 1
        %s275 = smul.addr %s274, 64
        %s276 = scalar_lea.vmem [#allocation3], %s275
        %s277 = smul.u32 8, %s19
        %p278 = scmp.lt.s32.totalorder %s18, 1
        %s279 = scalar_select %p278, %s18, 1
        %s280 = smul.addr %s279, 96
        %s281 = smul.addr %s280, 4
        %s282 = scalar_lea.vmem %s1, %s281
        %p283 = scmp.lt.s32.totalorder %s18, 1
        %s284 = scalar_select %p283, %s18, 1
        %s285 = smul.addr %s284, 2
        %s286 = smul.addr %s285, 8
        %s287 = scalar_lea.vmem %s2, %s286
        %s288 = smul.u32 8, %s19
        %v290 = vld [vmem:[%s247] sm:$0xff]
        %v291 = vld [vmem:[%s247 + $0x8] sm:$0xff]
        %v292 = vld [vmem:[%s247 + $0x10] sm:$0xff]
        %v293 = vld [vmem:[%s247 + $0x18] sm:$0xff]
        %v294 = vld [vmem:[%s247 + $0x20] sm:$0xff]
        %v295 = vld [vmem:[%s247 + $0x28] sm:$0xff]
        %v296 = vld [vmem:[%s247 + $0x30] sm:$0xff]
        %v297 = vld [vmem:[%s247 + $0x38] sm:$0xff]
        %v298 = vpack.c.bf16 %v291, %v290
        %v299 = vpack.c.bf16 %v293, %v292
        %v300 = vpack.c.bf16 %v295, %v294
        %v301 = vpack.c.bf16 %v297, %v296
        %v302 = vld [vmem:[%s287] sm:$0xff]
        %v303 = vld [vmem:[%s287 + $0x8] sm:$0x3]
        %v304 = vld [vmem:[%s282] sm:$0xf]
        %v305 = vld [vmem:[%s282 + $0x4] sm:$0xf]
        %v306 = vld [vmem:[%s282 + $0x8] sm:$0xf]
        %v307 = vld [vmem:[%s282 + $0xc] sm:$0xf]
        %v308 = vld [vmem:[%s282 + $0x10] sm:$0xf]
        %v309 = vld [vmem:[%s282 + $0x14] sm:$0xf]
        %v310 = vld [vmem:[%s282 + $0x18] sm:$0xf]
        %v311 = vld [vmem:[%s282 + $0x1c] sm:$0xf]
        %v312 = vld [vmem:[%s282 + $0x20] sm:$0xf]
        %v313 = vld [vmem:[%s282 + $0x24] sm:$0xf]
        %v314 = vld [vmem:[%s282 + $0x28] sm:$0xf]
        %v315 = vld [vmem:[%s282 + $0x2c] sm:$0xf]
        %v316 = vld [vmem:[%s282 + $0x30] sm:$0xf]
        %v317 = vld [vmem:[%s282 + $0x34] sm:$0xf]
        %v318 = vld [vmem:[%s282 + $0x38] sm:$0xf]
        %v319 = vld [vmem:[%s282 + $0x3c] sm:$0xf]
        %v320 = vperm.slane %v302, 0
        %v337 = vunpack.c.l.b16 %v304
        %v338 = vunpack.c.l.b16 %v305
        %v339 = vunpack.c.l.b16 %v306
        %v340 = vunpack.c.l.b16 %v307
        %v341 = vunpack.c.l.b16 %v308
        %v342 = vunpack.c.l.b16 %v309
        %v343 = vunpack.c.l.b16 %v310
        %v344 = vunpack.c.l.b16 %v311
        %v345 = vunpack.c.l.b16 %v312
        %v346 = vunpack.c.l.b16 %v313
        %v347 = vunpack.c.l.b16 %v314
        %v348 = vunpack.c.l.b16 %v315
        %v349 = vunpack.c.l.b16 %v316
        %v350 = vunpack.c.l.b16 %v317
        %v351 = vunpack.c.l.b16 %v318
        %v352 = vunpack.c.l.b16 %v319
        %v353 = vpack.c.b16 %v338, %v337
        %v354 = vpack.c.b16 %v340, %v339
        %v355 = vpack.c.b16 %v342, %v341
        %v356 = vpack.c.b16 %v344, %v343
        %v357 = vpack.c.b16 %v346, %v345
        %v358 = vpack.c.b16 %v348, %v347
        %v359 = vpack.c.b16 %v350, %v349
        %v360 = vpack.c.b16 %v352, %v351
        %369 = vmatpush.bf16.msra.mxu0 %v360
        %370 = vmatpush.bf16.msra.mxu0 %v359
        %371 = vmatpush.bf16.msra.mxu0 %v358
        %372 = vmatpush.bf16.msra.mxu0 %v357
        %373 = vmatpush.bf16.msra.mxu0 %v356
        %374 = vmatpush.bf16.msra.mxu0 %v355
        %375 = vmatpush.bf16.msra.mxu0 %v354
        %376 = vmatpush.bf16.msra.mxu0 %v353
        %377 = vmatmul.bf16.gmra.mxu0 %v298
        %v378 = vpop.f32.mrf.mxu0
        %v379 = vadd.f32 %v320, %v378
        %v380 = vpop.f32.mrf.mxu0
        %v381 = vadd.f32 %v320, %v380
        %382 = vmatmul.bf16.gmra.mxu0 %v299
        %v383 = vpop.f32.mrf.mxu0
        %v384 = vadd.f32 %v320, %v383
        %v385 = vpop.f32.mrf.mxu0
        %v386 = vadd.f32 %v320, %v385
        %387 = vmatmul.bf16.gmra.mxu0 %v300
        %v388 = vpop.f32.mrf.mxu0
        %v389 = vadd.f32 %v320, %v388
        %v390 = vpop.f32.mrf.mxu0
        %v391 = vadd.f32 %v320, %v390
        %392 = vmatmul.bf16.gmra.mxu0 %v301
        %v393 = vpop.f32.mrf.mxu0
        %v394 = vadd.f32 %v320, %v393
        %v395 = vpop.f32.mrf.mxu0
        %v396 = vadd.f32 %v320, %v395
        %397 = vdwg.mxu0
        %v398 = vmul.f32 %v379, 0.17677669
        %v399 = vmul.f32 %v381, 0.17677669
        %v400 = vmul.f32 %v384, 0.17677669
        %v401 = vmul.f32 %v386, 0.17677669
        %v402 = vmul.f32 %v389, 0.17677669
        %v403 = vmul.f32 %v391, 0.17677669
        %v404 = vmul.f32 %v394, 0.17677669
        %v405 = vmul.f32 %v396, 0.17677669
        %s406 = scalar_lea.vmem %s282, 64
        %v407 = vld [vmem:[%s406] sm:$0xf]
        %v408 = vld [vmem:[%s406 + $0x4] sm:$0xf]
        %v409 = vld [vmem:[%s406 + $0x8] sm:$0xf]
        %v410 = vld [vmem:[%s406 + $0xc] sm:$0xf]
        %v411 = vld [vmem:[%s406 + $0x10] sm:$0xf]
        %v412 = vld [vmem:[%s406 + $0x14] sm:$0xf]
        %v413 = vld [vmem:[%s406 + $0x18] sm:$0xf]
        %v414 = vld [vmem:[%s406 + $0x1c] sm:$0xf]
        %v415 = vld [vmem:[%s406 + $0x20] sm:$0xf]
        %v416 = vld [vmem:[%s406 + $0x24] sm:$0xf]
        %v417 = vld [vmem:[%s406 + $0x28] sm:$0xf]
        %v418 = vld [vmem:[%s406 + $0x2c] sm:$0xf]
        %v419 = vld [vmem:[%s406 + $0x30] sm:$0xf]
        %v420 = vld [vmem:[%s406 + $0x34] sm:$0xf]
        %v421 = vld [vmem:[%s406 + $0x38] sm:$0xf]
        %v422 = vld [vmem:[%s406 + $0x3c] sm:$0xf]
        %v423 = vperm.slane %v302, 1
        %v440 = vunpack.c.l.b16 %v407
        %v441 = vunpack.c.l.b16 %v408
        %v442 = vunpack.c.l.b16 %v409
        %v443 = vunpack.c.l.b16 %v410
        %v444 = vunpack.c.l.b16 %v411
        %v445 = vunpack.c.l.b16 %v412
        %v446 = vunpack.c.l.b16 %v413
        %v447 = vunpack.c.l.b16 %v414
        %v448 = vunpack.c.l.b16 %v415
        %v449 = vunpack.c.l.b16 %v416
        %v450 = vunpack.c.l.b16 %v417
        %v451 = vunpack.c.l.b16 %v418
        %v452 = vunpack.c.l.b16 %v419
        %v453 = vunpack.c.l.b16 %v420
        %v454 = vunpack.c.l.b16 %v421
        %v455 = vunpack.c.l.b16 %v422
        %v456 = vpack.c.b16 %v441, %v440
        %v457 = vpack.c.b16 %v443, %v442
        %v458 = vpack.c.b16 %v445, %v444
        %v459 = vpack.c.b16 %v447, %v446
        %v460 = vpack.c.b16 %v449, %v448
        %v461 = vpack.c.b16 %v451, %v450
        %v462 = vpack.c.b16 %v453, %v452
        %v463 = vpack.c.b16 %v455, %v454
        %472 = vmatpush.bf16.msra.mxu0 %v463
        %473 = vmatpush.bf16.msra.mxu0 %v462
        %474 = vmatpush.bf16.msra.mxu0 %v461
        %475 = vmatpush.bf16.msra.mxu0 %v460
        %476 = vmatpush.bf16.msra.mxu0 %v459
        %477 = vmatpush.bf16.msra.mxu0 %v458
        %478 = vmatpush.bf16.msra.mxu0 %v457
        %479 = vmatpush.bf16.msra.mxu0 %v456
        %480 = vmatmul.bf16.gmra.mxu0 %v298
        %v481 = vpop.f32.mrf.mxu0
        %v482 = vadd.f32 %v423, %v481
        %v483 = vpop.f32.mrf.mxu0
        %v484 = vadd.f32 %v423, %v483
        %485 = vmatmul.bf16.gmra.mxu0 %v299
        %v486 = vpop.f32.mrf.mxu0
        %v487 = vadd.f32 %v423, %v486
        %v488 = vpop.f32.mrf.mxu0
        %v489 = vadd.f32 %v423, %v488
        %490 = vmatmul.bf16.gmra.mxu0 %v300
        %v491 = vpop.f32.mrf.mxu0
        %v492 = vadd.f32 %v423, %v491
        %v493 = vpop.f32.mrf.mxu0
        %v494 = vadd.f32 %v423, %v493
        %495 = vmatmul.bf16.gmra.mxu0 %v301
        %v496 = vpop.f32.mrf.mxu0
        %v497 = vadd.f32 %v423, %v496
        %v498 = vpop.f32.mrf.mxu0
        %v499 = vadd.f32 %v423, %v498
        %500 = vdwg.mxu0
        %s501 = scalar_lea.vmem %s282, 128
        %v502 = vld [vmem:[%s501] sm:$0xf]
        %v503 = vld [vmem:[%s501 + $0x4] sm:$0xf]
        %v504 = vld [vmem:[%s501 + $0x8] sm:$0xf]
        %v505 = vld [vmem:[%s501 + $0xc] sm:$0xf]
        %v506 = vld [vmem:[%s501 + $0x10] sm:$0xf]
        %v507 = vld [vmem:[%s501 + $0x14] sm:$0xf]
        %v508 = vld [vmem:[%s501 + $0x18] sm:$0xf]
        %v509 = vld [vmem:[%s501 + $0x1c] sm:$0xf]
        %v510 = vld [vmem:[%s501 + $0x20] sm:$0xf]
        %v511 = vld [vmem:[%s501 + $0x24] sm:$0xf]
        %v512 = vld [vmem:[%s501 + $0x28] sm:$0xf]
        %v513 = vld [vmem:[%s501 + $0x2c] sm:$0xf]
        %v514 = vld [vmem:[%s501 + $0x30] sm:$0xf]
        %v515 = vld [vmem:[%s501 + $0x34] sm:$0xf]
        %v516 = vld [vmem:[%s501 + $0x38] sm:$0xf]
        %v517 = vld [vmem:[%s501 + $0x3c] sm:$0xf]
        %v518 = vperm.slane %v302, 2
        %v535 = vunpack.c.l.b16 %v502
        %v536 = vunpack.c.l.b16 %v503
        %v537 = vunpack.c.l.b16 %v504
        %v538 = vunpack.c.l.b16 %v505
        %v539 = vunpack.c.l.b16 %v506
        %v540 = vunpack.c.l.b16 %v507
        %v541 = vunpack.c.l.b16 %v508
        %v542 = vunpack.c.l.b16 %v509
        %v543 = vunpack.c.l.b16 %v510
        %v544 = vunpack.c.l.b16 %v511
        %v545 = vunpack.c.l.b16 %v512
        %v546 = vunpack.c.l.b16 %v513
        %v547 = vunpack.c.l.b16 %v514
        %v548 = vunpack.c.l.b16 %v515
        %v549 = vunpack.c.l.b16 %v516
        %v550 = vunpack.c.l.b16 %v517
        %v551 = vpack.c.b16 %v536, %v535
        %v552 = vpack.c.b16 %v538, %v537
        %v553 = vpack.c.b16 %v540, %v539
        %v554 = vpack.c.b16 %v542, %v541
        %v555 = vpack.c.b16 %v544, %v543
        %v556 = vpack.c.b16 %v546, %v545
        %v557 = vpack.c.b16 %v548, %v547
        %v558 = vpack.c.b16 %v550, %v549
        %567 = vmatpush.bf16.msra.mxu0 %v558
        %568 = vmatpush.bf16.msra.mxu0 %v557
        %569 = vmatpush.bf16.msra.mxu0 %v556
        %570 = vmatpush.bf16.msra.mxu0 %v555
        %571 = vmatpush.bf16.msra.mxu0 %v554
        %572 = vmatpush.bf16.msra.mxu0 %v553
        %573 = vmatpush.bf16.msra.mxu0 %v552
        %574 = vmatpush.bf16.msra.mxu0 %v551
        %575 = vmatmul.bf16.gmra.mxu0 %v298
        %v576 = vpop.f32.mrf.mxu0
        %v577 = vadd.f32 %v518, %v576
        %v578 = vpop.f32.mrf.mxu0
        %v579 = vadd.f32 %v518, %v578
        %580 = vmatmul.bf16.gmra.mxu0 %v299
        %v581 = vpop.f32.mrf.mxu0
        %v582 = vadd.f32 %v518, %v581
        %v583 = vpop.f32.mrf.mxu0
        %v584 = vadd.f32 %v518, %v583
        %585 = vmatmul.bf16.gmra.mxu0 %v300
        %v586 = vpop.f32.mrf.mxu0
        %v587 = vadd.f32 %v518, %v586
        %v588 = vpop.f32.mrf.mxu0
        %v589 = vadd.f32 %v518, %v588
        %590 = vmatmul.bf16.gmra.mxu0 %v301
        %v591 = vpop.f32.mrf.mxu0
        %v592 = vadd.f32 %v518, %v591
        %v593 = vpop.f32.mrf.mxu0
        %v594 = vadd.f32 %v518, %v593
        %595 = vdwg.mxu0
        %v596 = vpack.c.bf16 %v398, %v398
        %v597 = vpack.c.bf16 %v482, %v482
        %v598 = vpack.c.bf16 %v577, %v577
        %vm599 = vcmask 261120
        %v601 = vsel %vm599, %v596, 0
        %v604 = vsel %vm599, %v597, 0
        %606 = vmatpush.bf16.xpose.msra.mxu0 0
        %607 = vmatpush.bf16.xpose.msra.mxu0 0
        %608 = vmatpush.bf16.xpose.msra.mxu0 0
        %609 = vmatpush.bf16.xpose.msra.mxu0 0
        %610 = vmatpush.bf16.xpose.msra.mxu0 0
        %611 = vmatpush.bf16.xpose.msra.mxu0 0
        %612 = vmatpush.bf16.xpose.msra.mxu0 0
        %613 = vmatpush.bf16.xpose.msra.mxu0 %v604
        %614 = vmatmul.bf16.gmra.mxu0 %v601
        %v615 = vpop.f32.mrf.mxu0
        %v616 = vadd.f32 0.0, %v615
        %v617 = vpop.f32.mrf.mxu0
        %618 = vdwg.mxu0
        %vm619 = vcmask 64512
        %v620 = vsel %vm619, %v616, -inf
        %621 = vmax.xlane.f32.xlu0 %v620
        %v622 = vpop.xlane.xlu0 %621
        %v623 = vsub.f32 %v616, %v622
        %v624 = vmul.f32 %v623, 1.442695
        %v625 = vpow.pop %v624
        %v626 = vsel %vm619, %v625, 0.0
        %627 = vadd.xlane.f32.xlu0 %v626
        %v628 = vpop.xlane.xlu0 %627
        %v629 = vrcp.pop %v628
        %v630 = vmul.f32 %v625, %v629
        %v631 = vpack.c.bf16 %v630, %v630
        %v633 = vsel %vm619, %v631, 0
        %vm635 = vcmask 1043456
        %v637 = vsel %vm635, %v598, 0
        %639 = vmatpush.bf16.msra.mxu0 0
        %640 = vmatpush.bf16.msra.mxu0 0
        %641 = vmatpush.bf16.msra.mxu0 0
        %642 = vmatpush.bf16.msra.mxu0 0
        %643 = vmatpush.bf16.msra.mxu0 0
        %644 = vmatpush.bf16.msra.mxu0 0
        %645 = vmatpush.bf16.msra.mxu0 0
        %646 = vmatpush.bf16.msra.mxu0 %v637
        %647 = vmatmul.bf16.gmra.mxu0 %v633
        %v648 = vpop.f32.mrf.mxu0
        %v649 = vadd.f32 0.0, %v648
        %v650 = vpop.f32.mrf.mxu0
        %651 = vdwg.mxu0
        %v653 = vunpack.c.l.b16 %v596
        %v654 = vpack.c.b16 %v653, %v653
        %655 = vrot.lane.b32.xlu0 %v654, 96
        %v656 = vpop.permute.xlu0 %655
        %v658 = vunpack.c.l.b16 %v597
        %v659 = vpack.c.b16 %v658, %v658
        %660 = vrot.lane.b32.xlu0 %v659, 96
        %v661 = vpop.permute.xlu0 %660
        %v663 = vsel %vm599, %v656, 0
        %v666 = vsel %vm599, %v661, 0
        %668 = vmatpush.bf16.xpose.msra.mxu0 0
        %669 = vmatpush.bf16.xpose.msra.mxu0 0
        %670 = vmatpush.bf16.xpose.msra.mxu0 0
        %671 = vmatpush.bf16.xpose.msra.mxu0 0
        %672 = vmatpush.bf16.xpose.msra.mxu0 0
        %673 = vmatpush.bf16.xpose.msra.mxu0 0
        %674 = vmatpush.bf16.xpose.msra.mxu0 0
        %675 = vmatpush.bf16.xpose.msra.mxu0 %v666
        %676 = vmatmul.bf16.gmra.mxu0 %v663
        %v677 = vpop.f32.mrf.mxu0
        %v678 = vadd.f32 0.0, %v677
        %v679 = vpop.f32.mrf.mxu0
        %680 = vdwg.mxu0
        %v681 = vsel %vm619, %v678, -inf
        %682 = vmax.xlane.f32.xlu0 %v681
        %v683 = vpop.xlane.xlu0 %682
        %v684 = vsub.f32 %v678, %v683
        %v685 = vmul.f32 %v684, 1.442695
        %v686 = vpow.pop %v685
        %v687 = vsel %vm619, %v686, 0.0
        %688 = vadd.xlane.f32.xlu0 %v687
        %v689 = vpop.xlane.xlu0 %688
        %v690 = vrcp.pop %v689
        %v691 = vmul.f32 %v686, %v690
        %v692 = vpack.c.bf16 %v691, %v691
        %v694 = vunpack.c.l.b16 %v598
        %v695 = vpack.c.b16 %v694, %v694
        %696 = vrot.lane.b32.xlu0 %v695, 96
        %v697 = vpop.permute.xlu0 %696
        %v699 = vsel %vm619, %v692, 0
        %v702 = vsel %vm635, %v697, 0
        %704 = vmatpush.bf16.msra.mxu0 0
        %705 = vmatpush.bf16.msra.mxu0 0
        %706 = vmatpush.bf16.msra.mxu0 0
        %707 = vmatpush.bf16.msra.mxu0 0
        %708 = vmatpush.bf16.msra.mxu0 0
        %709 = vmatpush.bf16.msra.mxu0 0
        %710 = vmatpush.bf16.msra.mxu0 0
        %711 = vmatpush.bf16.msra.mxu0 %v702
        %712 = vmatmul.bf16.gmra.mxu0 %v699
        %v713 = vpop.f32.mrf.mxu0
        %v714 = vadd.f32 0.0, %v713
        %v715 = vpop.f32.mrf.mxu0
        %716 = vdwg.mxu0
        %717 = vrot.lane.b32.xlu0 %v654, 64
        %v718 = vpop.permute.xlu0 %717
        %719 = vrot.lane.b32.xlu0 %v659, 64
        %v720 = vpop.permute.xlu0 %719
        %v722 = vsel %vm599, %v718, 0
        %v725 = vsel %vm599, %v720, 0
        %727 = vmatpush.bf16.xpose.msra.mxu0 0
        %728 = vmatpush.bf16.xpose.msra.mxu0 0
        %729 = vmatpush.bf16.xpose.msra.mxu0 0
        %730 = vmatpush.bf16.xpose.msra.mxu0 0
        %731 = vmatpush.bf16.xpose.msra.mxu0 0
        %732 = vmatpush.bf16.xpose.msra.mxu0 0
        %733 = vmatpush.bf16.xpose.msra.mxu0 0
        %734 = vmatpush.bf16.xpose.msra.mxu0 %v725
        %735 = vmatmul.bf16.gmra.mxu0 %v722
        %v736 = vpop.f32.mrf.mxu0
        %v737 = vadd.f32 0.0, %v736
        %v738 = vpop.f32.mrf.mxu0
        %739 = vdwg.mxu0
        %v740 = vsel %vm619, %v737, -inf
        %741 = vmax.xlane.f32.xlu0 %v740
        %v742 = vpop.xlane.xlu0 %741
        %v743 = vsub.f32 %v737, %v742
        %v744 = vmul.f32 %v743, 1.442695
        %v745 = vpow.pop %v744
        %v746 = vsel %vm619, %v745, 0.0
        %747 = vadd.xlane.f32.xlu0 %v746
        %v748 = vpop.xlane.xlu0 %747
        %v749 = vrcp.pop %v748
        %v750 = vmul.f32 %v745, %v749
        %v751 = vpack.c.bf16 %v750, %v750
        %752 = vrot.lane.b32.xlu0 %v695, 64
        %v753 = vpop.permute.xlu0 %752
        %v755 = vsel %vm619, %v751, 0
        %v758 = vsel %vm635, %v753, 0
        %760 = vmatpush.bf16.msra.mxu0 0
        %761 = vmatpush.bf16.msra.mxu0 0
        %762 = vmatpush.bf16.msra.mxu0 0
        %763 = vmatpush.bf16.msra.mxu0 0
        %764 = vmatpush.bf16.msra.mxu0 0
        %765 = vmatpush.bf16.msra.mxu0 0
        %766 = vmatpush.bf16.msra.mxu0 0
        %767 = vmatpush.bf16.msra.mxu0 %v758
        %768 = vmatmul.bf16.gmra.mxu0 %v755
        %v769 = vpop.f32.mrf.mxu0
        %v770 = vadd.f32 0.0, %v769
        %v771 = vpop.f32.mrf.mxu0
        %772 = vdwg.mxu0
        %773 = vrot.lane.b32.xlu0 %v654, 32
        %v774 = vpop.permute.xlu0 %773
        %775 = vrot.lane.b32.xlu0 %v659, 32
        %v776 = vpop.permute.xlu0 %775
        %v778 = vsel %vm599, %v774, 0
        %v781 = vsel %vm599, %v776, 0
        %783 = vmatpush.bf16.xpose.msra.mxu0 0
        %784 = vmatpush.bf16.xpose.msra.mxu0 0
        %785 = vmatpush.bf16.xpose.msra.mxu0 0
        %786 = vmatpush.bf16.xpose.msra.mxu0 0
        %787 = vmatpush.bf16.xpose.msra.mxu0 0
        %788 = vmatpush.bf16.xpose.msra.mxu0 0
        %789 = vmatpush.bf16.xpose.msra.mxu0 0
        %790 = vmatpush.bf16.xpose.msra.mxu0 %v781
        %791 = vmatmul.bf16.gmra.mxu0 %v778
        %v792 = vpop.f32.mrf.mxu0
        %v793 = vadd.f32 0.0, %v792
        %v794 = vpop.f32.mrf.mxu0
        %795 = vdwg.mxu0
        %v796 = vsel %vm619, %v793, -inf
        %797 = vmax.xlane.f32.xlu0 %v796
        %v798 = vpop.xlane.xlu0 %797
        %v799 = vsub.f32 %v793, %v798
        %v800 = vmul.f32 %v799, 1.442695
        %v801 = vpow.pop %v800
        %v802 = vsel %vm619, %v801, 0.0
        %803 = vadd.xlane.f32.xlu0 %v802
        %v804 = vpop.xlane.xlu0 %803
        %v805 = vrcp.pop %v804
        %v806 = vmul.f32 %v801, %v805
        %v807 = vpack.c.bf16 %v806, %v806
        %808 = vrot.lane.b32.xlu0 %v695, 32
        %v809 = vpop.permute.xlu0 %808
        %v811 = vsel %vm619, %v807, 0
        %v814 = vsel %vm635, %v809, 0
        %816 = vmatpush.bf16.msra.mxu0 0
        %817 = vmatpush.bf16.msra.mxu0 0
        %818 = vmatpush.bf16.msra.mxu0 0
        %819 = vmatpush.bf16.msra.mxu0 0
        %820 = vmatpush.bf16.msra.mxu0 0
        %821 = vmatpush.bf16.msra.mxu0 0
        %822 = vmatpush.bf16.msra.mxu0 0
        %823 = vmatpush.bf16.msra.mxu0 %v814
        %824 = vmatmul.bf16.gmra.mxu0 %v811
        %v825 = vpop.f32.mrf.mxu0
        %v826 = vadd.f32 0.0, %v825
        %v827 = vpop.f32.mrf.mxu0
        %828 = vdwg.mxu0
        %830 = vrot.lane.b32.xlu0 %v714, 32
        %v831 = vpop.permute.xlu0 %830
        %834 = vrot.lane.b32.xlu0 %v770, 64
        %v835 = vpop.permute.xlu0 %834
        %838 = vrot.lane.b32.xlu0 %v826, 96
        %v839 = vpop.permute.xlu0 %838
        %v841 = vsel %vm599, %v649, %v831
        %vm842 = vcmask 523264
        %v843 = vsel %vm842, %v841, %v835
        %vm844 = vcmask 785408
        %v845 = vsel %vm844, %v843, %v839
        %v846 = vpack.c.bf16 %v399, %v399
        %v847 = vpack.c.bf16 %v484, %v484
        %v848 = vpack.c.bf16 %v579, %v579
        %v850 = vsel %vm599, %v846, 0
        %v853 = vsel %vm599, %v847, 0
        %855 = vmatpush.bf16.xpose.msra.mxu0 0
        %856 = vmatpush.bf16.xpose.msra.mxu0 0
        %857 = vmatpush.bf16.xpose.msra.mxu0 0
        %858 = vmatpush.bf16.xpose.msra.mxu0 0
        %859 = vmatpush.bf16.xpose.msra.mxu0 0
        %860 = vmatpush.bf16.xpose.msra.mxu0 0
        %861 = vmatpush.bf16.xpose.msra.mxu0 0
        %862 = vmatpush.bf16.xpose.msra.mxu0 %v853
        %863 = vmatmul.bf16.gmra.mxu0 %v850
        %v864 = vpop.f32.mrf.mxu0
        %v865 = vadd.f32 0.0, %v864
        %v866 = vpop.f32.mrf.mxu0
        %867 = vdwg.mxu0
        %v868 = vsel %vm619, %v865, -inf
        %869 = vmax.xlane.f32.xlu0 %v868
        %v870 = vpop.xlane.xlu0 %869
        %v871 = vsub.f32 %v865, %v870
        %v872 = vmul.f32 %v871, 1.442695
        %v873 = vpow.pop %v872
        %v874 = vsel %vm619, %v873, 0.0
        %875 = vadd.xlane.f32.xlu0 %v874
        %v876 = vpop.xlane.xlu0 %875
        %v877 = vrcp.pop %v876
        %v878 = vmul.f32 %v873, %v877
        %v879 = vpack.c.bf16 %v878, %v878
        %v881 = vsel %vm619, %v879, 0
        %v884 = vsel %vm635, %v848, 0
        %886 = vmatpush.bf16.msra.mxu0 0
        %887 = vmatpush.bf16.msra.mxu0 0
        %888 = vmatpush.bf16.msra.mxu0 0
        %889 = vmatpush.bf16.msra.mxu0 0
        %890 = vmatpush.bf16.msra.mxu0 0
        %891 = vmatpush.bf16.msra.mxu0 0
        %892 = vmatpush.bf16.msra.mxu0 0
        %893 = vmatpush.bf16.msra.mxu0 %v884
        %894 = vmatmul.bf16.gmra.mxu0 %v881
        %v895 = vpop.f32.mrf.mxu0
        %v896 = vadd.f32 0.0, %v895
        %v897 = vpop.f32.mrf.mxu0
        %898 = vdwg.mxu0
        %v900 = vunpack.c.l.b16 %v846
        %v901 = vpack.c.b16 %v900, %v900
        %902 = vrot.lane.b32.xlu0 %v901, 96
        %v903 = vpop.permute.xlu0 %902
        %v905 = vunpack.c.l.b16 %v847
        %v906 = vpack.c.b16 %v905, %v905
        %907 = vrot.lane.b32.xlu0 %v906, 96
        %v908 = vpop.permute.xlu0 %907
        %v910 = vsel %vm599, %v903, 0
        %v913 = vsel %vm599, %v908, 0
        %915 = vmatpush.bf16.xpose.msra.mxu0 0
        %916 = vmatpush.bf16.xpose.msra.mxu0 0
        %917 = vmatpush.bf16.xpose.msra.mxu0 0
        %918 = vmatpush.bf16.xpose.msra.mxu0 0
        %919 = vmatpush.bf16.xpose.msra.mxu0 0
        %920 = vmatpush.bf16.xpose.msra.mxu0 0
        %921 = vmatpush.bf16.xpose.msra.mxu0 0
        %922 = vmatpush.bf16.xpose.msra.mxu0 %v913
        %923 = vmatmul.bf16.gmra.mxu0 %v910
        %v924 = vpop.f32.mrf.mxu0
        %v925 = vadd.f32 0.0, %v924
        %v926 = vpop.f32.mrf.mxu0
        %927 = vdwg.mxu0
        %v928 = vsel %vm619, %v925, -inf
        %929 = vmax.xlane.f32.xlu0 %v928
        %v930 = vpop.xlane.xlu0 %929
        %v931 = vsub.f32 %v925, %v930
        %v932 = vmul.f32 %v931, 1.442695
        %v933 = vpow.pop %v932
        %v934 = vsel %vm619, %v933, 0.0
        %935 = vadd.xlane.f32.xlu0 %v934
        %v936 = vpop.xlane.xlu0 %935
        %v937 = vrcp.pop %v936
        %v938 = vmul.f32 %v933, %v937
        %v939 = vpack.c.bf16 %v938, %v938
        %v941 = vunpack.c.l.b16 %v848
        %v942 = vpack.c.b16 %v941, %v941
        %943 = vrot.lane.b32.xlu0 %v942, 96
        %v944 = vpop.permute.xlu0 %943
        %v946 = vsel %vm619, %v939, 0
        %v949 = vsel %vm635, %v944, 0
        %951 = vmatpush.bf16.msra.mxu0 0
        %952 = vmatpush.bf16.msra.mxu0 0
        %953 = vmatpush.bf16.msra.mxu0 0
        %954 = vmatpush.bf16.msra.mxu0 0
        %955 = vmatpush.bf16.msra.mxu0 0
        %956 = vmatpush.bf16.msra.mxu0 0
        %957 = vmatpush.bf16.msra.mxu0 0
        %958 = vmatpush.bf16.msra.mxu0 %v949
        %959 = vmatmul.bf16.gmra.mxu0 %v946
        %v960 = vpop.f32.mrf.mxu0
        %v961 = vadd.f32 0.0, %v960
        %v962 = vpop.f32.mrf.mxu0
        %963 = vdwg.mxu0
        %964 = vrot.lane.b32.xlu0 %v901, 64
        %v965 = vpop.permute.xlu0 %964
        %966 = vrot.lane.b32.xlu0 %v906, 64
        %v967 = vpop.permute.xlu0 %966
        %v969 = vsel %vm599, %v965, 0
        %v972 = vsel %vm599, %v967, 0
        %974 = vmatpush.bf16.xpose.msra.mxu0 0
        %975 = vmatpush.bf16.xpose.msra.mxu0 0
        %976 = vmatpush.bf16.xpose.msra.mxu0 0
        %977 = vmatpush.bf16.xpose.msra.mxu0 0
        %978 = vmatpush.bf16.xpose.msra.mxu0 0
        %979 = vmatpush.bf16.xpose.msra.mxu0 0
        %980 = vmatpush.bf16.xpose.msra.mxu0 0
        %981 = vmatpush.bf16.xpose.msra.mxu0 %v972
        %982 = vmatmul.bf16.gmra.mxu0 %v969
        %v983 = vpop.f32.mrf.mxu0
        %v984 = vadd.f32 0.0, %v983
        %v985 = vpop.f32.mrf.mxu0
        %986 = vdwg.mxu0
        %v987 = vsel %vm619, %v984, -inf
        %988 = vmax.xlane.f32.xlu0 %v987
        %v989 = vpop.xlane.xlu0 %988
        %v990 = vsub.f32 %v984, %v989
        %v991 = vmul.f32 %v990, 1.442695
        %v992 = vpow.pop %v991
        %v993 = vsel %vm619, %v992, 0.0
        %994 = vadd.xlane.f32.xlu0 %v993
        %v995 = vpop.xlane.xlu0 %994
        %v996 = vrcp.pop %v995
        %v997 = vmul.f32 %v992, %v996
        %v998 = vpack.c.bf16 %v997, %v997
        %999 = vrot.lane.b32.xlu0 %v942, 64
        %v1000 = vpop.permute.xlu0 %999
        %v1002 = vsel %vm619, %v998, 0
        %v1005 = vsel %vm635, %v1000, 0
        %1007 = vmatpush.bf16.msra.mxu0 0
        %1008 = vmatpush.bf16.msra.mxu0 0
        %1009 = vmatpush.bf16.msra.mxu0 0
        %1010 = vmatpush.bf16.msra.mxu0 0
        %1011 = vmatpush.bf16.msra.mxu0 0
        %1012 = vmatpush.bf16.msra.mxu0 0
        %1013 = vmatpush.bf16.msra.mxu0 0
        %1014 = vmatpush.bf16.msra.mxu0 %v1005
        %1015 = vmatmul.bf16.gmra.mxu0 %v1002
        %v1016 = vpop.f32.mrf.mxu0
        %v1017 = vadd.f32 0.0, %v1016
        %v1018 = vpop.f32.mrf.mxu0
        %1019 = vdwg.mxu0
        %1020 = vrot.lane.b32.xlu0 %v901, 32
        %v1021 = vpop.permute.xlu0 %1020
        %1022 = vrot.lane.b32.xlu0 %v906, 32
        %v1023 = vpop.permute.xlu0 %1022
        %v1025 = vsel %vm599, %v1021, 0
        %v1028 = vsel %vm599, %v1023, 0
        %1030 = vmatpush.bf16.xpose.msra.mxu0 0
        %1031 = vmatpush.bf16.xpose.msra.mxu0 0
        %1032 = vmatpush.bf16.xpose.msra.mxu0 0
        %1033 = vmatpush.bf16.xpose.msra.mxu0 0
        %1034 = vmatpush.bf16.xpose.msra.mxu0 0
        %1035 = vmatpush.bf16.xpose.msra.mxu0 0
        %1036 = vmatpush.bf16.xpose.msra.mxu0 0
        %1037 = vmatpush.bf16.xpose.msra.mxu0 %v1028
        %1038 = vmatmul.bf16.gmra.mxu0 %v1025
        %v1039 = vpop.f32.mrf.mxu0
        %v1040 = vadd.f32 0.0, %v1039
        %v1041 = vpop.f32.mrf.mxu0
        %1042 = vdwg.mxu0
        %v1043 = vsel %vm619, %v1040, -inf
        %1044 = vmax.xlane.f32.xlu0 %v1043
        %v1045 = vpop.xlane.xlu0 %1044
        %v1046 = vsub.f32 %v1040, %v1045
        %v1047 = vmul.f32 %v1046, 1.442695
        %v1048 = vpow.pop %v1047
        %v1049 = vsel %vm619, %v1048, 0.0
        %1050 = vadd.xlane.f32.xlu0 %v1049
        %v1051 = vpop.xlane.xlu0 %1050
        %v1052 = vrcp.pop %v1051
        %v1053 = vmul.f32 %v1048, %v1052
        %v1054 = vpack.c.bf16 %v1053, %v1053
        %1055 = vrot.lane.b32.xlu0 %v942, 32
        %v1056 = vpop.permute.xlu0 %1055
        %v1058 = vsel %vm619, %v1054, 0
        %v1061 = vsel %vm635, %v1056, 0
        %1063 = vmatpush.bf16.msra.mxu0 0
        %1064 = vmatpush.bf16.msra.mxu0 0
        %1065 = vmatpush.bf16.msra.mxu0 0
        %1066 = vmatpush.bf16.msra.mxu0 0
        %1067 = vmatpush.bf16.msra.mxu0 0
        %1068 = vmatpush.bf16.msra.mxu0 0
        %1069 = vmatpush.bf16.msra.mxu0 0
        %1070 = vmatpush.bf16.msra.mxu0 %v1061
        %1071 = vmatmul.bf16.gmra.mxu0 %v1058
        %v1072 = vpop.f32.mrf.mxu0
        %v1073 = vadd.f32 0.0, %v1072
        %v1074 = vpop.f32.mrf.mxu0
        %1075 = vdwg.mxu0
        %1077 = vrot.lane.b32.xlu0 %v961, 32
        %v1078 = vpop.permute.xlu0 %1077
        %1081 = vrot.lane.b32.xlu0 %v1017, 64
        %v1082 = vpop.permute.xlu0 %1081
        %1085 = vrot.lane.b32.xlu0 %v1073, 96
        %v1086 = vpop.permute.xlu0 %1085
        %v1088 = vsel %vm599, %v896, %v1078
        %v1089 = vsel %vm842, %v1088, %v1082
        %v1090 = vsel %vm844, %v1089, %v1086
        %v1091 = vpack.c.bf16 %v400, %v400
        %v1092 = vpack.c.bf16 %v487, %v487
        %v1093 = vpack.c.bf16 %v582, %v582
        %v1095 = vsel %vm599, %v1091, 0
        %v1098 = vsel %vm599, %v1092, 0
        %1100 = vmatpush.bf16.xpose.msra.mxu0 0
        %1101 = vmatpush.bf16.xpose.msra.mxu0 0
        %1102 = vmatpush.bf16.xpose.msra.mxu0 0
        %1103 = vmatpush.bf16.xpose.msra.mxu0 0
        %1104 = vmatpush.bf16.xpose.msra.mxu0 0
        %1105 = vmatpush.bf16.xpose.msra.mxu0 0
        %1106 = vmatpush.bf16.xpose.msra.mxu0 0
        %1107 = vmatpush.bf16.xpose.msra.mxu0 %v1098
        %1108 = vmatmul.bf16.gmra.mxu0 %v1095
        %v1109 = vpop.f32.mrf.mxu0
        %v1110 = vadd.f32 0.0, %v1109
        %v1111 = vpop.f32.mrf.mxu0
        %1112 = vdwg.mxu0
        %v1113 = vsel %vm619, %v1110, -inf
        %1114 = vmax.xlane.f32.xlu0 %v1113
        %v1115 = vpop.xlane.xlu0 %1114
        %v1116 = vsub.f32 %v1110, %v1115
        %v1117 = vmul.f32 %v1116, 1.442695
        %v1118 = vpow.pop %v1117
        %v1119 = vsel %vm619, %v1118, 0.0
        %1120 = vadd.xlane.f32.xlu0 %v1119
        %v1121 = vpop.xlane.xlu0 %1120
        %v1122 = vrcp.pop %v1121
        %v1123 = vmul.f32 %v1118, %v1122
        %v1124 = vpack.c.bf16 %v1123, %v1123
        %v1126 = vsel %vm619, %v1124, 0
        %v1129 = vsel %vm635, %v1093, 0
        %1131 = vmatpush.bf16.msra.mxu0 0
        %1132 = vmatpush.bf16.msra.mxu0 0
        %1133 = vmatpush.bf16.msra.mxu0 0
        %1134 = vmatpush.bf16.msra.mxu0 0
        %1135 = vmatpush.bf16.msra.mxu0 0
        %1136 = vmatpush.bf16.msra.mxu0 0
        %1137 = vmatpush.bf16.msra.mxu0 0
        %1138 = vmatpush.bf16.msra.mxu0 %v1129
        %1139 = vmatmul.bf16.gmra.mxu0 %v1126
        %v1140 = vpop.f32.mrf.mxu0
        %v1141 = vadd.f32 0.0, %v1140
        %v1142 = vpop.f32.mrf.mxu0
        %1143 = vdwg.mxu0
        %v1145 = vunpack.c.l.b16 %v1091
        %v1146 = vpack.c.b16 %v1145, %v1145
        %1147 = vrot.lane.b32.xlu0 %v1146, 96
        %v1148 = vpop.permute.xlu0 %1147
        %v1150 = vunpack.c.l.b16 %v1092
        %v1151 = vpack.c.b16 %v1150, %v1150
        %1152 = vrot.lane.b32.xlu0 %v1151, 96
        %v1153 = vpop.permute.xlu0 %1152
        %v1155 = vsel %vm599, %v1148, 0
        %v1158 = vsel %vm599, %v1153, 0
        %1160 = vmatpush.bf16.xpose.msra.mxu0 0
        %1161 = vmatpush.bf16.xpose.msra.mxu0 0
        %1162 = vmatpush.bf16.xpose.msra.mxu0 0
        %1163 = vmatpush.bf16.xpose.msra.mxu0 0
        %1164 = vmatpush.bf16.xpose.msra.mxu0 0
        %1165 = vmatpush.bf16.xpose.msra.mxu0 0
        %1166 = vmatpush.bf16.xpose.msra.mxu0 0
        %1167 = vmatpush.bf16.xpose.msra.mxu0 %v1158
        %1168 = vmatmul.bf16.gmra.mxu0 %v1155
        %v1169 = vpop.f32.mrf.mxu0
        %v1170 = vadd.f32 0.0, %v1169
        %v1171 = vpop.f32.mrf.mxu0
        %1172 = vdwg.mxu0
        %v1173 = vsel %vm619, %v1170, -inf
        %1174 = vmax.xlane.f32.xlu0 %v1173
        %v1175 = vpop.xlane.xlu0 %1174
        %v1176 = vsub.f32 %v1170, %v1175
        %v1177 = vmul.f32 %v1176, 1.442695
        %v1178 = vpow.pop %v1177
        %v1179 = vsel %vm619, %v1178, 0.0
        %1180 = vadd.xlane.f32.xlu0 %v1179
        %v1181 = vpop.xlane.xlu0 %1180
        %v1182 = vrcp.pop %v1181
        %v1183 = vmul.f32 %v1178, %v1182
        %v1184 = vpack.c.bf16 %v1183, %v1183
        %v1186 = vunpack.c.l.b16 %v1093
        %v1187 = vpack.c.b16 %v1186, %v1186
        %1188 = vrot.lane.b32.xlu0 %v1187, 96
        %v1189 = vpop.permute.xlu0 %1188
        %v1191 = vsel %vm619, %v1184, 0
        %v1194 = vsel %vm635, %v1189, 0
        %1196 = vmatpush.bf16.msra.mxu0 0
        %1197 = vmatpush.bf16.msra.mxu0 0
        %1198 = vmatpush.bf16.msra.mxu0 0
        %1199 = vmatpush.bf16.msra.mxu0 0
        %1200 = vmatpush.bf16.msra.mxu0 0
        %1201 = vmatpush.bf16.msra.mxu0 0
        %1202 = vmatpush.bf16.msra.mxu0 0
        %1203 = vmatpush.bf16.msra.mxu0 %v1194
        %1204 = vmatmul.bf16.gmra.mxu0 %v1191
        %v1205 = vpop.f32.mrf.mxu0
        %v1206 = vadd.f32 0.0, %v1205
        %v1207 = vpop.f32.mrf.mxu0
        %1208 = vdwg.mxu0
        %1209 = vrot.lane.b32.xlu0 %v1146, 64
        %v1210 = vpop.permute.xlu0 %1209
        %1211 = vrot.lane.b32.xlu0 %v1151, 64
        %v1212 = vpop.permute.xlu0 %1211
        %v1214 = vsel %vm599, %v1210, 0
        %v1217 = vsel %vm599, %v1212, 0
        %1219 = vmatpush.bf16.xpose.msra.mxu0 0
        %1220 = vmatpush.bf16.xpose.msra.mxu0 0
        %1221 = vmatpush.bf16.xpose.msra.mxu0 0
        %1222 = vmatpush.bf16.xpose.msra.mxu0 0
        %1223 = vmatpush.bf16.xpose.msra.mxu0 0
        %1224 = vmatpush.bf16.xpose.msra.mxu0 0
        %1225 = vmatpush.bf16.xpose.msra.mxu0 0
        %1226 = vmatpush.bf16.xpose.msra.mxu0 %v1217
        %1227 = vmatmul.bf16.gmra.mxu0 %v1214
        %v1228 = vpop.f32.mrf.mxu0
        %v1229 = vadd.f32 0.0, %v1228
        %v1230 = vpop.f32.mrf.mxu0
        %1231 = vdwg.mxu0
        %v1232 = vsel %vm619, %v1229, -inf
        %1233 = vmax.xlane.f32.xlu0 %v1232
        %v1234 = vpop.xlane.xlu0 %1233
        %v1235 = vsub.f32 %v1229, %v1234
        %v1236 = vmul.f32 %v1235, 1.442695
        %v1237 = vpow.pop %v1236
        %v1238 = vsel %vm619, %v1237, 0.0
        %1239 = vadd.xlane.f32.xlu0 %v1238
        %v1240 = vpop.xlane.xlu0 %1239
        %v1241 = vrcp.pop %v1240
        %v1242 = vmul.f32 %v1237, %v1241
        %v1243 = vpack.c.bf16 %v1242, %v1242
        %1244 = vrot.lane.b32.xlu0 %v1187, 64
        %v1245 = vpop.permute.xlu0 %1244
        %v1247 = vsel %vm619, %v1243, 0
        %v1250 = vsel %vm635, %v1245, 0
        %1252 = vmatpush.bf16.msra.mxu0 0
        %1253 = vmatpush.bf16.msra.mxu0 0
        %1254 = vmatpush.bf16.msra.mxu0 0
        %1255 = vmatpush.bf16.msra.mxu0 0
        %1256 = vmatpush.bf16.msra.mxu0 0
        %1257 = vmatpush.bf16.msra.mxu0 0
        %1258 = vmatpush.bf16.msra.mxu0 0
        %1259 = vmatpush.bf16.msra.mxu0 %v1250
        %1260 = vmatmul.bf16.gmra.mxu0 %v1247
        %v1261 = vpop.f32.mrf.mxu0
        %v1262 = vadd.f32 0.0, %v1261
        %v1263 = vpop.f32.mrf.mxu0
        %1264 = vdwg.mxu0
        %1265 = vrot.lane.b32.xlu0 %v1146, 32
        %v1266 = vpop.permute.xlu0 %1265
        %1267 = vrot.lane.b32.xlu0 %v1151, 32
        %v1268 = vpop.permute.xlu0 %1267
        %v1270 = vsel %vm599, %v1266, 0
        %v1273 = vsel %vm599, %v1268, 0
        %1275 = vmatpush.bf16.xpose.msra.mxu0 0
        %1276 = vmatpush.bf16.xpose.msra.mxu0 0
        %1277 = vmatpush.bf16.xpose.msra.mxu0 0
        %1278 = vmatpush.bf16.xpose.msra.mxu0 0
        %1279 = vmatpush.bf16.xpose.msra.mxu0 0
        %1280 = vmatpush.bf16.xpose.msra.mxu0 0
        %1281 = vmatpush.bf16.xpose.msra.mxu0 0
        %1282 = vmatpush.bf16.xpose.msra.mxu0 %v1273
        %1283 = vmatmul.bf16.gmra.mxu0 %v1270
        %v1284 = vpop.f32.mrf.mxu0
        %v1285 = vadd.f32 0.0, %v1284
        %v1286 = vpop.f32.mrf.mxu0
        %1287 = vdwg.mxu0
        %v1288 = vsel %vm619, %v1285, -inf
        %1289 = vmax.xlane.f32.xlu0 %v1288
        %v1290 = vpop.xlane.xlu0 %1289
        %v1291 = vsub.f32 %v1285, %v1290
        %v1292 = vmul.f32 %v1291, 1.442695
        %v1293 = vpow.pop %v1292
        %v1294 = vsel %vm619, %v1293, 0.0
        %1295 = vadd.xlane.f32.xlu0 %v1294
        %v1296 = vpop.xlane.xlu0 %1295
        %v1297 = vrcp.pop %v1296
        %v1298 = vmul.f32 %v1293, %v1297
        %v1299 = vpack.c.bf16 %v1298, %v1298
        %1300 = vrot.lane.b32.xlu0 %v1187, 32
        %v1301 = vpop.permute.xlu0 %1300
        %v1303 = vsel %vm619, %v1299, 0
        %v1306 = vsel %vm635, %v1301, 0
        %1308 = vmatpush.bf16.msra.mxu0 0
        %1309 = vmatpush.bf16.msra.mxu0 0
        %1310 = vmatpush.bf16.msra.mxu0 0
        %1311 = vmatpush.bf16.msra.mxu0 0
        %1312 = vmatpush.bf16.msra.mxu0 0
        %1313 = vmatpush.bf16.msra.mxu0 0
        %1314 = vmatpush.bf16.msra.mxu0 0
        %1315 = vmatpush.bf16.msra.mxu0 %v1306
        %1316 = vmatmul.bf16.gmra.mxu0 %v1303
        %v1317 = vpop.f32.mrf.mxu0
        %v1318 = vadd.f32 0.0, %v1317
        %v1319 = vpop.f32.mrf.mxu0
        %1320 = vdwg.mxu0
        %1322 = vrot.lane.b32.xlu0 %v1206, 32
        %v1323 = vpop.permute.xlu0 %1322
        %1326 = vrot.lane.b32.xlu0 %v1262, 64
        %v1327 = vpop.permute.xlu0 %1326
        %1330 = vrot.lane.b32.xlu0 %v1318, 96
        %v1331 = vpop.permute.xlu0 %1330
        %v1333 = vsel %vm599, %v1141, %v1323
        %v1334 = vsel %vm842, %v1333, %v1327
        %v1335 = vsel %vm844, %v1334, %v1331
        %v1336 = vpack.c.bf16 %v401, %v401
        %v1337 = vpack.c.bf16 %v489, %v489
        %v1338 = vpack.c.bf16 %v584, %v584
        %v1340 = vsel %vm599, %v1336, 0
        %v1343 = vsel %vm599, %v1337, 0
        %1345 = vmatpush.bf16.xpose.msra.mxu0 0
        %1346 = vmatpush.bf16.xpose.msra.mxu0 0
        %1347 = vmatpush.bf16.xpose.msra.mxu0 0
        %1348 = vmatpush.bf16.xpose.msra.mxu0 0
        %1349 = vmatpush.bf16.xpose.msra.mxu0 0
        %1350 = vmatpush.bf16.xpose.msra.mxu0 0
        %1351 = vmatpush.bf16.xpose.msra.mxu0 0
        %1352 = vmatpush.bf16.xpose.msra.mxu0 %v1343
        %1353 = vmatmul.bf16.gmra.mxu0 %v1340
        %v1354 = vpop.f32.mrf.mxu0
        %v1355 = vadd.f32 0.0, %v1354
        %v1356 = vpop.f32.mrf.mxu0
        %1357 = vdwg.mxu0
        %v1358 = vsel %vm619, %v1355, -inf
        %1359 = vmax.xlane.f32.xlu0 %v1358
        %v1360 = vpop.xlane.xlu0 %1359
        %v1361 = vsub.f32 %v1355, %v1360
        %v1362 = vmul.f32 %v1361, 1.442695
        %v1363 = vpow.pop %v1362
        %v1364 = vsel %vm619, %v1363, 0.0
        %1365 = vadd.xlane.f32.xlu0 %v1364
        %v1366 = vpop.xlane.xlu0 %1365
        %v1367 = vrcp.pop %v1366
        %v1368 = vmul.f32 %v1363, %v1367
        %v1369 = vpack.c.bf16 %v1368, %v1368
        %v1371 = vsel %vm619, %v1369, 0
        %v1374 = vsel %vm635, %v1338, 0
        %1376 = vmatpush.bf16.msra.mxu0 0
        %1377 = vmatpush.bf16.msra.mxu0 0
        %1378 = vmatpush.bf16.msra.mxu0 0
        %1379 = vmatpush.bf16.msra.mxu0 0
        %1380 = vmatpush.bf16.msra.mxu0 0
        %1381 = vmatpush.bf16.msra.mxu0 0
        %1382 = vmatpush.bf16.msra.mxu0 0
        %1383 = vmatpush.bf16.msra.mxu0 %v1374
        %1384 = vmatmul.bf16.gmra.mxu0 %v1371
        %v1385 = vpop.f32.mrf.mxu0
        %v1386 = vadd.f32 0.0, %v1385
        %v1387 = vpop.f32.mrf.mxu0
        %1388 = vdwg.mxu0
        %v1390 = vunpack.c.l.b16 %v1336
        %v1391 = vpack.c.b16 %v1390, %v1390
        %1392 = vrot.lane.b32.xlu0 %v1391, 96
        %v1393 = vpop.permute.xlu0 %1392
        %v1395 = vunpack.c.l.b16 %v1337
        %v1396 = vpack.c.b16 %v1395, %v1395
        %1397 = vrot.lane.b32.xlu0 %v1396, 96
        %v1398 = vpop.permute.xlu0 %1397
        %v1400 = vsel %vm599, %v1393, 0
        %v1403 = vsel %vm599, %v1398, 0
        %1405 = vmatpush.bf16.xpose.msra.mxu0 0
        %1406 = vmatpush.bf16.xpose.msra.mxu0 0
        %1407 = vmatpush.bf16.xpose.msra.mxu0 0
        %1408 = vmatpush.bf16.xpose.msra.mxu0 0
        %1409 = vmatpush.bf16.xpose.msra.mxu0 0
        %1410 = vmatpush.bf16.xpose.msra.mxu0 0
        %1411 = vmatpush.bf16.xpose.msra.mxu0 0
        %1412 = vmatpush.bf16.xpose.msra.mxu0 %v1403
        %1413 = vmatmul.bf16.gmra.mxu0 %v1400
        %v1414 = vpop.f32.mrf.mxu0
        %v1415 = vadd.f32 0.0, %v1414
        %v1416 = vpop.f32.mrf.mxu0
        %1417 = vdwg.mxu0
        %v1418 = vsel %vm619, %v1415, -inf
        %1419 = vmax.xlane.f32.xlu0 %v1418
        %v1420 = vpop.xlane.xlu0 %1419
        %v1421 = vsub.f32 %v1415, %v1420
        %v1422 = vmul.f32 %v1421, 1.442695
        %v1423 = vpow.pop %v1422
        %v1424 = vsel %vm619, %v1423, 0.0
        %1425 = vadd.xlane.f32.xlu0 %v1424
        %v1426 = vpop.xlane.xlu0 %1425
        %v1427 = vrcp.pop %v1426
        %v1428 = vmul.f32 %v1423, %v1427
        %v1429 = vpack.c.bf16 %v1428, %v1428
        %v1431 = vunpack.c.l.b16 %v1338
        %v1432 = vpack.c.b16 %v1431, %v1431
        %1433 = vrot.lane.b32.xlu0 %v1432, 96
        %v1434 = vpop.permute.xlu0 %1433
        %v1436 = vsel %vm619, %v1429, 0
        %v1439 = vsel %vm635, %v1434, 0
        %1441 = vmatpush.bf16.msra.mxu0 0
        %1442 = vmatpush.bf16.msra.mxu0 0
        %1443 = vmatpush.bf16.msra.mxu0 0
        %1444 = vmatpush.bf16.msra.mxu0 0
        %1445 = vmatpush.bf16.msra.mxu0 0
        %1446 = vmatpush.bf16.msra.mxu0 0
        %1447 = vmatpush.bf16.msra.mxu0 0
        %1448 = vmatpush.bf16.msra.mxu0 %v1439
        %1449 = vmatmul.bf16.gmra.mxu0 %v1436
        %v1450 = vpop.f32.mrf.mxu0
        %v1451 = vadd.f32 0.0, %v1450
        %v1452 = vpop.f32.mrf.mxu0
        %1453 = vdwg.mxu0
        %1454 = vrot.lane.b32.xlu0 %v1391, 64
        %v1455 = vpop.permute.xlu0 %1454
        %1456 = vrot.lane.b32.xlu0 %v1396, 64
        %v1457 = vpop.permute.xlu0 %1456
        %v1459 = vsel %vm599, %v1455, 0
        %v1462 = vsel %vm599, %v1457, 0
        %1464 = vmatpush.bf16.xpose.msra.mxu0 0
        %1465 = vmatpush.bf16.xpose.msra.mxu0 0
        %1466 = vmatpush.bf16.xpose.msra.mxu0 0
        %1467 = vmatpush.bf16.xpose.msra.mxu0 0
        %1468 = vmatpush.bf16.xpose.msra.mxu0 0
        %1469 = vmatpush.bf16.xpose.msra.mxu0 0
        %1470 = vmatpush.bf16.xpose.msra.mxu0 0
        %1471 = vmatpush.bf16.xpose.msra.mxu0 %v1462
        %1472 = vmatmul.bf16.gmra.mxu0 %v1459
        %v1473 = vpop.f32.mrf.mxu0
        %v1474 = vadd.f32 0.0, %v1473
        %v1475 = vpop.f32.mrf.mxu0
        %1476 = vdwg.mxu0
        %v1477 = vsel %vm619, %v1474, -inf
        %1478 = vmax.xlane.f32.xlu0 %v1477
        %v1479 = vpop.xlane.xlu0 %1478
        %v1480 = vsub.f32 %v1474, %v1479
        %v1481 = vmul.f32 %v1480, 1.442695
        %v1482 = vpow.pop %v1481
        %v1483 = vsel %vm619, %v1482, 0.0
        %1484 = vadd.xlane.f32.xlu0 %v1483
        %v1485 = vpop.xlane.xlu0 %1484
        %v1486 = vrcp.pop %v1485
        %v1487 = vmul.f32 %v1482, %v1486
        %v1488 = vpack.c.bf16 %v1487, %v1487
        %1489 = vrot.lane.b32.xlu0 %v1432, 64
        %v1490 = vpop.permute.xlu0 %1489
        %v1492 = vsel %vm619, %v1488, 0
        %v1495 = vsel %vm635, %v1490, 0
        %1497 = vmatpush.bf16.msra.mxu0 0
        %1498 = vmatpush.bf16.msra.mxu0 0
        %1499 = vmatpush.bf16.msra.mxu0 0
        %1500 = vmatpush.bf16.msra.mxu0 0
        %1501 = vmatpush.bf16.msra.mxu0 0
        %1502 = vmatpush.bf16.msra.mxu0 0
        %1503 = vmatpush.bf16.msra.mxu0 0
        %1504 = vmatpush.bf16.msra.mxu0 %v1495
        %1505 = vmatmul.bf16.gmra.mxu0 %v1492
        %v1506 = vpop.f32.mrf.mxu0
        %v1507 = vadd.f32 0.0, %v1506
        %v1508 = vpop.f32.mrf.mxu0
        %1509 = vdwg.mxu0
        %1510 = vrot.lane.b32.xlu0 %v1391, 32
        %v1511 = vpop.permute.xlu0 %1510
        %1512 = vrot.lane.b32.xlu0 %v1396, 32
        %v1513 = vpop.permute.xlu0 %1512
        %v1515 = vsel %vm599, %v1511, 0
        %v1518 = vsel %vm599, %v1513, 0
        %1520 = vmatpush.bf16.xpose.msra.mxu0 0
        %1521 = vmatpush.bf16.xpose.msra.mxu0 0
        %1522 = vmatpush.bf16.xpose.msra.mxu0 0
        %1523 = vmatpush.bf16.xpose.msra.mxu0 0
        %1524 = vmatpush.bf16.xpose.msra.mxu0 0
        %1525 = vmatpush.bf16.xpose.msra.mxu0 0
        %1526 = vmatpush.bf16.xpose.msra.mxu0 0
        %1527 = vmatpush.bf16.xpose.msra.mxu0 %v1518
        %1528 = vmatmul.bf16.gmra.mxu0 %v1515
        %v1529 = vpop.f32.mrf.mxu0
        %v1530 = vadd.f32 0.0, %v1529
        %v1531 = vpop.f32.mrf.mxu0
        %1532 = vdwg.mxu0
        %v1533 = vsel %vm619, %v1530, -inf
        %1534 = vmax.xlane.f32.xlu0 %v1533
        %v1535 = vpop.xlane.xlu0 %1534
        %v1536 = vsub.f32 %v1530, %v1535
        %v1537 = vmul.f32 %v1536, 1.442695
        %v1538 = vpow.pop %v1537
        %v1539 = vsel %vm619, %v1538, 0.0
        %1540 = vadd.xlane.f32.xlu0 %v1539
        %v1541 = vpop.xlane.xlu0 %1540
        %v1542 = vrcp.pop %v1541
        %v1543 = vmul.f32 %v1538, %v1542
        %v1544 = vpack.c.bf16 %v1543, %v1543
        %1545 = vrot.lane.b32.xlu0 %v1432, 32
        %v1546 = vpop.permute.xlu0 %1545
        %v1548 = vsel %vm619, %v1544, 0
        %v1551 = vsel %vm635, %v1546, 0
        %1553 = vmatpush.bf16.msra.mxu0 0
        %1554 = vmatpush.bf16.msra.mxu0 0
        %1555 = vmatpush.bf16.msra.mxu0 0
        %1556 = vmatpush.bf16.msra.mxu0 0
        %1557 = vmatpush.bf16.msra.mxu0 0
        %1558 = vmatpush.bf16.msra.mxu0 0
        %1559 = vmatpush.bf16.msra.mxu0 0
        %1560 = vmatpush.bf16.msra.mxu0 %v1551
        %1561 = vmatmul.bf16.gmra.mxu0 %v1548
        %v1562 = vpop.f32.mrf.mxu0
        %v1563 = vadd.f32 0.0, %v1562
        %v1564 = vpop.f32.mrf.mxu0
        %1565 = vdwg.mxu0
        %1567 = vrot.lane.b32.xlu0 %v1451, 32
        %v1568 = vpop.permute.xlu0 %1567
        %1571 = vrot.lane.b32.xlu0 %v1507, 64
        %v1572 = vpop.permute.xlu0 %1571
        %1575 = vrot.lane.b32.xlu0 %v1563, 96
        %v1576 = vpop.permute.xlu0 %1575
        %v1578 = vsel %vm599, %v1386, %v1568
        %v1579 = vsel %vm842, %v1578, %v1572
        %v1580 = vsel %vm844, %v1579, %v1576
        %v1581 = vpack.c.bf16 %v402, %v402
        %v1582 = vpack.c.bf16 %v492, %v492
        %v1583 = vpack.c.bf16 %v587, %v587
        %v1585 = vsel %vm599, %v1581, 0
        %v1588 = vsel %vm599, %v1582, 0
        %1590 = vmatpush.bf16.xpose.msra.mxu0 0
        %1591 = vmatpush.bf16.xpose.msra.mxu0 0
        %1592 = vmatpush.bf16.xpose.msra.mxu0 0
        %1593 = vmatpush.bf16.xpose.msra.mxu0 0
        %1594 = vmatpush.bf16.xpose.msra.mxu0 0
        %1595 = vmatpush.bf16.xpose.msra.mxu0 0
        %1596 = vmatpush.bf16.xpose.msra.mxu0 0
        %1597 = vmatpush.bf16.xpose.msra.mxu0 %v1588
        %1598 = vmatmul.bf16.gmra.mxu0 %v1585
        %v1599 = vpop.f32.mrf.mxu0
        %v1600 = vadd.f32 0.0, %v1599
        %v1601 = vpop.f32.mrf.mxu0
        %1602 = vdwg.mxu0
        %v1603 = vsel %vm619, %v1600, -inf
        %1604 = vmax.xlane.f32.xlu0 %v1603
        %v1605 = vpop.xlane.xlu0 %1604
        %v1606 = vsub.f32 %v1600, %v1605
        %v1607 = vmul.f32 %v1606, 1.442695
        %v1608 = vpow.pop %v1607
        %v1609 = vsel %vm619, %v1608, 0.0
        %1610 = vadd.xlane.f32.xlu0 %v1609
        %v1611 = vpop.xlane.xlu0 %1610
        %v1612 = vrcp.pop %v1611
        %v1613 = vmul.f32 %v1608, %v1612
        %v1614 = vpack.c.bf16 %v1613, %v1613
        %v1616 = vsel %vm619, %v1614, 0
        %v1619 = vsel %vm635, %v1583, 0
        %1621 = vmatpush.bf16.msra.mxu0 0
        %1622 = vmatpush.bf16.msra.mxu0 0
        %1623 = vmatpush.bf16.msra.mxu0 0
        %1624 = vmatpush.bf16.msra.mxu0 0
        %1625 = vmatpush.bf16.msra.mxu0 0
        %1626 = vmatpush.bf16.msra.mxu0 0
        %1627 = vmatpush.bf16.msra.mxu0 0
        %1628 = vmatpush.bf16.msra.mxu0 %v1619
        %1629 = vmatmul.bf16.gmra.mxu0 %v1616
        %v1630 = vpop.f32.mrf.mxu0
        %v1631 = vadd.f32 0.0, %v1630
        %v1632 = vpop.f32.mrf.mxu0
        %1633 = vdwg.mxu0
        %v1635 = vunpack.c.l.b16 %v1581
        %v1636 = vpack.c.b16 %v1635, %v1635
        %1637 = vrot.lane.b32.xlu0 %v1636, 96
        %v1638 = vpop.permute.xlu0 %1637
        %v1640 = vunpack.c.l.b16 %v1582
        %v1641 = vpack.c.b16 %v1640, %v1640
        %1642 = vrot.lane.b32.xlu0 %v1641, 96
        %v1643 = vpop.permute.xlu0 %1642
        %v1645 = vsel %vm599, %v1638, 0
        %v1648 = vsel %vm599, %v1643, 0
        %1650 = vmatpush.bf16.xpose.msra.mxu0 0
        %1651 = vmatpush.bf16.xpose.msra.mxu0 0
        %1652 = vmatpush.bf16.xpose.msra.mxu0 0
        %1653 = vmatpush.bf16.xpose.msra.mxu0 0
        %1654 = vmatpush.bf16.xpose.msra.mxu0 0
        %1655 = vmatpush.bf16.xpose.msra.mxu0 0
        %1656 = vmatpush.bf16.xpose.msra.mxu0 0
        %1657 = vmatpush.bf16.xpose.msra.mxu0 %v1648
        %1658 = vmatmul.bf16.gmra.mxu0 %v1645
        %v1659 = vpop.f32.mrf.mxu0
        %v1660 = vadd.f32 0.0, %v1659
        %v1661 = vpop.f32.mrf.mxu0
        %1662 = vdwg.mxu0
        %v1663 = vsel %vm619, %v1660, -inf
        %1664 = vmax.xlane.f32.xlu0 %v1663
        %v1665 = vpop.xlane.xlu0 %1664
        %v1666 = vsub.f32 %v1660, %v1665
        %v1667 = vmul.f32 %v1666, 1.442695
        %v1668 = vpow.pop %v1667
        %v1669 = vsel %vm619, %v1668, 0.0
        %1670 = vadd.xlane.f32.xlu0 %v1669
        %v1671 = vpop.xlane.xlu0 %1670
        %v1672 = vrcp.pop %v1671
        %v1673 = vmul.f32 %v1668, %v1672
        %v1674 = vpack.c.bf16 %v1673, %v1673
        %v1676 = vunpack.c.l.b16 %v1583
        %v1677 = vpack.c.b16 %v1676, %v1676
        %1678 = vrot.lane.b32.xlu0 %v1677, 96
        %v1679 = vpop.permute.xlu0 %1678
        %v1681 = vsel %vm619, %v1674, 0
        %v1684 = vsel %vm635, %v1679, 0
        %1686 = vmatpush.bf16.msra.mxu0 0
        %1687 = vmatpush.bf16.msra.mxu0 0
        %1688 = vmatpush.bf16.msra.mxu0 0
        %1689 = vmatpush.bf16.msra.mxu0 0
        %1690 = vmatpush.bf16.msra.mxu0 0
        %1691 = vmatpush.bf16.msra.mxu0 0
        %1692 = vmatpush.bf16.msra.mxu0 0
        %1693 = vmatpush.bf16.msra.mxu0 %v1684
        %1694 = vmatmul.bf16.gmra.mxu0 %v1681
        %v1695 = vpop.f32.mrf.mxu0
        %v1696 = vadd.f32 0.0, %v1695
        %v1697 = vpop.f32.mrf.mxu0
        %1698 = vdwg.mxu0
        %1699 = vrot.lane.b32.xlu0 %v1636, 64
        %v1700 = vpop.permute.xlu0 %1699
        %1701 = vrot.lane.b32.xlu0 %v1641, 64
        %v1702 = vpop.permute.xlu0 %1701
        %v1704 = vsel %vm599, %v1700, 0
        %v1707 = vsel %vm599, %v1702, 0
        %1709 = vmatpush.bf16.xpose.msra.mxu0 0
        %1710 = vmatpush.bf16.xpose.msra.mxu0 0
        %1711 = vmatpush.bf16.xpose.msra.mxu0 0
        %1712 = vmatpush.bf16.xpose.msra.mxu0 0
        %1713 = vmatpush.bf16.xpose.msra.mxu0 0
        %1714 = vmatpush.bf16.xpose.msra.mxu0 0
        %1715 = vmatpush.bf16.xpose.msra.mxu0 0
        %1716 = vmatpush.bf16.xpose.msra.mxu0 %v1707
        %1717 = vmatmul.bf16.gmra.mxu0 %v1704
        %v1718 = vpop.f32.mrf.mxu0
        %v1719 = vadd.f32 0.0, %v1718
        %v1720 = vpop.f32.mrf.mxu0
        %1721 = vdwg.mxu0
        %v1722 = vsel %vm619, %v1719, -inf
        %1723 = vmax.xlane.f32.xlu0 %v1722
        %v1724 = vpop.xlane.xlu0 %1723
        %v1725 = vsub.f32 %v1719, %v1724
        %v1726 = vmul.f32 %v1725, 1.442695
        %v1727 = vpow.pop %v1726
        %v1728 = vsel %vm619, %v1727, 0.0
        %1729 = vadd.xlane.f32.xlu0 %v1728
        %v1730 = vpop.xlane.xlu0 %1729
        %v1731 = vrcp.pop %v1730
        %v1732 = vmul.f32 %v1727, %v1731
        %v1733 = vpack.c.bf16 %v1732, %v1732
        %1734 = vrot.lane.b32.xlu0 %v1677, 64
        %v1735 = vpop.permute.xlu0 %1734
        %v1737 = vsel %vm619, %v1733, 0
        %v1740 = vsel %vm635, %v1735, 0
        %1742 = vmatpush.bf16.msra.mxu0 0
        %1743 = vmatpush.bf16.msra.mxu0 0
        %1744 = vmatpush.bf16.msra.mxu0 0
        %1745 = vmatpush.bf16.msra.mxu0 0
        %1746 = vmatpush.bf16.msra.mxu0 0
        %1747 = vmatpush.bf16.msra.mxu0 0
        %1748 = vmatpush.bf16.msra.mxu0 0
        %1749 = vmatpush.bf16.msra.mxu0 %v1740
        %1750 = vmatmul.bf16.gmra.mxu0 %v1737
        %v1751 = vpop.f32.mrf.mxu0
        %v1752 = vadd.f32 0.0, %v1751
        %v1753 = vpop.f32.mrf.mxu0
        %1754 = vdwg.mxu0
        %1755 = vrot.lane.b32.xlu0 %v1636, 32
        %v1756 = vpop.permute.xlu0 %1755
        %1757 = vrot.lane.b32.xlu0 %v1641, 32
        %v1758 = vpop.permute.xlu0 %1757
        %v1760 = vsel %vm599, %v1756, 0
        %v1763 = vsel %vm599, %v1758, 0
        %1765 = vmatpush.bf16.xpose.msra.mxu0 0
        %1766 = vmatpush.bf16.xpose.msra.mxu0 0
        %1767 = vmatpush.bf16.xpose.msra.mxu0 0
        %1768 = vmatpush.bf16.xpose.msra.mxu0 0
        %1769 = vmatpush.bf16.xpose.msra.mxu0 0
        %1770 = vmatpush.bf16.xpose.msra.mxu0 0
        %1771 = vmatpush.bf16.xpose.msra.mxu0 0
        %1772 = vmatpush.bf16.xpose.msra.mxu0 %v1763
        %1773 = vmatmul.bf16.gmra.mxu0 %v1760
        %v1774 = vpop.f32.mrf.mxu0
        %v1775 = vadd.f32 0.0, %v1774
        %v1776 = vpop.f32.mrf.mxu0
        %1777 = vdwg.mxu0
        %v1778 = vsel %vm619, %v1775, -inf
        %1779 = vmax.xlane.f32.xlu0 %v1778
        %v1780 = vpop.xlane.xlu0 %1779
        %v1781 = vsub.f32 %v1775, %v1780
        %v1782 = vmul.f32 %v1781, 1.442695
        %v1783 = vpow.pop %v1782
        %v1784 = vsel %vm619, %v1783, 0.0
        %1785 = vadd.xlane.f32.xlu0 %v1784
        %v1786 = vpop.xlane.xlu0 %1785
        %v1787 = vrcp.pop %v1786
        %v1788 = vmul.f32 %v1783, %v1787
        %v1789 = vpack.c.bf16 %v1788, %v1788
        %1790 = vrot.lane.b32.xlu0 %v1677, 32
        %v1791 = vpop.permute.xlu0 %1790
        %v1793 = vsel %vm619, %v1789, 0
        %v1796 = vsel %vm635, %v1791, 0
        %1798 = vmatpush.bf16.msra.mxu0 0
        %1799 = vmatpush.bf16.msra.mxu0 0
        %1800 = vmatpush.bf16.msra.mxu0 0
        %1801 = vmatpush.bf16.msra.mxu0 0
        %1802 = vmatpush.bf16.msra.mxu0 0
        %1803 = vmatpush.bf16.msra.mxu0 0
        %1804 = vmatpush.bf16.msra.mxu0 0
        %1805 = vmatpush.bf16.msra.mxu0 %v1796
        %1806 = vmatmul.bf16.gmra.mxu0 %v1793
        %v1807 = vpop.f32.mrf.mxu0
        %v1808 = vadd.f32 0.0, %v1807
        %v1809 = vpop.f32.mrf.mxu0
        %1810 = vdwg.mxu0
        %1812 = vrot.lane.b32.xlu0 %v1696, 32
        %v1813 = vpop.permute.xlu0 %1812
        %1816 = vrot.lane.b32.xlu0 %v1752, 64
        %v1817 = vpop.permute.xlu0 %1816
        %1820 = vrot.lane.b32.xlu0 %v1808, 96
        %v1821 = vpop.permute.xlu0 %1820
        %v1823 = vsel %vm599, %v1631, %v1813
        %v1824 = vsel %vm842, %v1823, %v1817
        %v1825 = vsel %vm844, %v1824, %v1821
        %v1826 = vpack.c.bf16 %v403, %v403
        %v1827 = vpack.c.bf16 %v494, %v494
        %v1828 = vpack.c.bf16 %v589, %v589
        %v1830 = vsel %vm599, %v1826, 0
        %v1833 = vsel %vm599, %v1827, 0
        %1835 = vmatpush.bf16.xpose.msra.mxu0 0
        %1836 = vmatpush.bf16.xpose.msra.mxu0 0
        %1837 = vmatpush.bf16.xpose.msra.mxu0 0
        %1838 = vmatpush.bf16.xpose.msra.mxu0 0
        %1839 = vmatpush.bf16.xpose.msra.mxu0 0
        %1840 = vmatpush.bf16.xpose.msra.mxu0 0
        %1841 = vmatpush.bf16.xpose.msra.mxu0 0
        %1842 = vmatpush.bf16.xpose.msra.mxu0 %v1833
        %1843 = vmatmul.bf16.gmra.mxu0 %v1830
        %v1844 = vpop.f32.mrf.mxu0
        %v1845 = vadd.f32 0.0, %v1844
        %v1846 = vpop.f32.mrf.mxu0
        %1847 = vdwg.mxu0
        %v1848 = vsel %vm619, %v1845, -inf
        %1849 = vmax.xlane.f32.xlu0 %v1848
        %v1850 = vpop.xlane.xlu0 %1849
        %v1851 = vsub.f32 %v1845, %v1850
        %v1852 = vmul.f32 %v1851, 1.442695
        %v1853 = vpow.pop %v1852
        %v1854 = vsel %vm619, %v1853, 0.0
        %1855 = vadd.xlane.f32.xlu0 %v1854
        %v1856 = vpop.xlane.xlu0 %1855
        %v1857 = vrcp.pop %v1856
        %v1858 = vmul.f32 %v1853, %v1857
        %v1859 = vpack.c.bf16 %v1858, %v1858
        %v1861 = vsel %vm619, %v1859, 0
        %v1864 = vsel %vm635, %v1828, 0
        %1866 = vmatpush.bf16.msra.mxu0 0
        %1867 = vmatpush.bf16.msra.mxu0 0
        %1868 = vmatpush.bf16.msra.mxu0 0
        %1869 = vmatpush.bf16.msra.mxu0 0
        %1870 = vmatpush.bf16.msra.mxu0 0
        %1871 = vmatpush.bf16.msra.mxu0 0
        %1872 = vmatpush.bf16.msra.mxu0 0
        %1873 = vmatpush.bf16.msra.mxu0 %v1864
        %1874 = vmatmul.bf16.gmra.mxu0 %v1861
        %v1875 = vpop.f32.mrf.mxu0
        %v1876 = vadd.f32 0.0, %v1875
        %v1877 = vpop.f32.mrf.mxu0
        %1878 = vdwg.mxu0
        %v1880 = vunpack.c.l.b16 %v1826
        %v1881 = vpack.c.b16 %v1880, %v1880
        %1882 = vrot.lane.b32.xlu0 %v1881, 96
        %v1883 = vpop.permute.xlu0 %1882
        %v1885 = vunpack.c.l.b16 %v1827
        %v1886 = vpack.c.b16 %v1885, %v1885
        %1887 = vrot.lane.b32.xlu0 %v1886, 96
        %v1888 = vpop.permute.xlu0 %1887
        %v1890 = vsel %vm599, %v1883, 0
        %v1893 = vsel %vm599, %v1888, 0
        %1895 = vmatpush.bf16.xpose.msra.mxu0 0
        %1896 = vmatpush.bf16.xpose.msra.mxu0 0
        %1897 = vmatpush.bf16.xpose.msra.mxu0 0
        %1898 = vmatpush.bf16.xpose.msra.mxu0 0
        %1899 = vmatpush.bf16.xpose.msra.mxu0 0
        %1900 = vmatpush.bf16.xpose.msra.mxu0 0
        %1901 = vmatpush.bf16.xpose.msra.mxu0 0
        %1902 = vmatpush.bf16.xpose.msra.mxu0 %v1893
        %1903 = vmatmul.bf16.gmra.mxu0 %v1890
        %v1904 = vpop.f32.mrf.mxu0
        %v1905 = vadd.f32 0.0, %v1904
        %v1906 = vpop.f32.mrf.mxu0
        %1907 = vdwg.mxu0
        %v1908 = vsel %vm619, %v1905, -inf
        %1909 = vmax.xlane.f32.xlu0 %v1908
        %v1910 = vpop.xlane.xlu0 %1909
        %v1911 = vsub.f32 %v1905, %v1910
        %v1912 = vmul.f32 %v1911, 1.442695
        %v1913 = vpow.pop %v1912
        %v1914 = vsel %vm619, %v1913, 0.0
        %1915 = vadd.xlane.f32.xlu0 %v1914
        %v1916 = vpop.xlane.xlu0 %1915
        %v1917 = vrcp.pop %v1916
        %v1918 = vmul.f32 %v1913, %v1917
        %v1919 = vpack.c.bf16 %v1918, %v1918
        %v1921 = vunpack.c.l.b16 %v1828
        %v1922 = vpack.c.b16 %v1921, %v1921
        %1923 = vrot.lane.b32.xlu0 %v1922, 96
        %v1924 = vpop.permute.xlu0 %1923
        %v1926 = vsel %vm619, %v1919, 0
        %v1929 = vsel %vm635, %v1924, 0
        %1931 = vmatpush.bf16.msra.mxu0 0
        %1932 = vmatpush.bf16.msra.mxu0 0
        %1933 = vmatpush.bf16.msra.mxu0 0
        %1934 = vmatpush.bf16.msra.mxu0 0
        %1935 = vmatpush.bf16.msra.mxu0 0
        %1936 = vmatpush.bf16.msra.mxu0 0
        %1937 = vmatpush.bf16.msra.mxu0 0
        %1938 = vmatpush.bf16.msra.mxu0 %v1929
        %1939 = vmatmul.bf16.gmra.mxu0 %v1926
        %v1940 = vpop.f32.mrf.mxu0
        %v1941 = vadd.f32 0.0, %v1940
        %v1942 = vpop.f32.mrf.mxu0
        %1943 = vdwg.mxu0
        %1944 = vrot.lane.b32.xlu0 %v1881, 64
        %v1945 = vpop.permute.xlu0 %1944
        %1946 = vrot.lane.b32.xlu0 %v1886, 64
        %v1947 = vpop.permute.xlu0 %1946
        %v1949 = vsel %vm599, %v1945, 0
        %v1952 = vsel %vm599, %v1947, 0
        %1954 = vmatpush.bf16.xpose.msra.mxu0 0
        %1955 = vmatpush.bf16.xpose.msra.mxu0 0
        %1956 = vmatpush.bf16.xpose.msra.mxu0 0
        %1957 = vmatpush.bf16.xpose.msra.mxu0 0
        %1958 = vmatpush.bf16.xpose.msra.mxu0 0
        %1959 = vmatpush.bf16.xpose.msra.mxu0 0
        %1960 = vmatpush.bf16.xpose.msra.mxu0 0
        %1961 = vmatpush.bf16.xpose.msra.mxu0 %v1952
        %1962 = vmatmul.bf16.gmra.mxu0 %v1949
        %v1963 = vpop.f32.mrf.mxu0
        %v1964 = vadd.f32 0.0, %v1963
        %v1965 = vpop.f32.mrf.mxu0
        %1966 = vdwg.mxu0
        %v1967 = vsel %vm619, %v1964, -inf
        %1968 = vmax.xlane.f32.xlu0 %v1967
        %v1969 = vpop.xlane.xlu0 %1968
        %v1970 = vsub.f32 %v1964, %v1969
        %v1971 = vmul.f32 %v1970, 1.442695
        %v1972 = vpow.pop %v1971
        %v1973 = vsel %vm619, %v1972, 0.0
        %1974 = vadd.xlane.f32.xlu0 %v1973
        %v1975 = vpop.xlane.xlu0 %1974
        %v1976 = vrcp.pop %v1975
        %v1977 = vmul.f32 %v1972, %v1976
        %v1978 = vpack.c.bf16 %v1977, %v1977
        %1979 = vrot.lane.b32.xlu0 %v1922, 64
        %v1980 = vpop.permute.xlu0 %1979
        %v1982 = vsel %vm619, %v1978, 0
        %v1985 = vsel %vm635, %v1980, 0
        %1987 = vmatpush.bf16.msra.mxu0 0
        %1988 = vmatpush.bf16.msra.mxu0 0
        %1989 = vmatpush.bf16.msra.mxu0 0
        %1990 = vmatpush.bf16.msra.mxu0 0
        %1991 = vmatpush.bf16.msra.mxu0 0
        %1992 = vmatpush.bf16.msra.mxu0 0
        %1993 = vmatpush.bf16.msra.mxu0 0
        %1994 = vmatpush.bf16.msra.mxu0 %v1985
        %1995 = vmatmul.bf16.gmra.mxu0 %v1982
        %v1996 = vpop.f32.mrf.mxu0
        %v1997 = vadd.f32 0.0, %v1996
        %v1998 = vpop.f32.mrf.mxu0
        %1999 = vdwg.mxu0
        %2000 = vrot.lane.b32.xlu0 %v1881, 32
        %v2001 = vpop.permute.xlu0 %2000
        %2002 = vrot.lane.b32.xlu0 %v1886, 32
        %v2003 = vpop.permute.xlu0 %2002
        %v2005 = vsel %vm599, %v2001, 0
        %v2008 = vsel %vm599, %v2003, 0
        %2010 = vmatpush.bf16.xpose.msra.mxu0 0
        %2011 = vmatpush.bf16.xpose.msra.mxu0 0
        %2012 = vmatpush.bf16.xpose.msra.mxu0 0
        %2013 = vmatpush.bf16.xpose.msra.mxu0 0
        %2014 = vmatpush.bf16.xpose.msra.mxu0 0
        %2015 = vmatpush.bf16.xpose.msra.mxu0 0
        %2016 = vmatpush.bf16.xpose.msra.mxu0 0
        %2017 = vmatpush.bf16.xpose.msra.mxu0 %v2008
        %2018 = vmatmul.bf16.gmra.mxu0 %v2005
        %v2019 = vpop.f32.mrf.mxu0
        %v2020 = vadd.f32 0.0, %v2019
        %v2021 = vpop.f32.mrf.mxu0
        %2022 = vdwg.mxu0
        %v2023 = vsel %vm619, %v2020, -inf
        %2024 = vmax.xlane.f32.xlu0 %v2023
        %v2025 = vpop.xlane.xlu0 %2024
        %v2026 = vsub.f32 %v2020, %v2025
        %v2027 = vmul.f32 %v2026, 1.442695
        %v2028 = vpow.pop %v2027
        %v2029 = vsel %vm619, %v2028, 0.0
        %2030 = vadd.xlane.f32.xlu0 %v2029
        %v2031 = vpop.xlane.xlu0 %2030
        %v2032 = vrcp.pop %v2031
        %v2033 = vmul.f32 %v2028, %v2032
        %v2034 = vpack.c.bf16 %v2033, %v2033
        %2035 = vrot.lane.b32.xlu0 %v1922, 32
        %v2036 = vpop.permute.xlu0 %2035
        %v2038 = vsel %vm619, %v2034, 0
        %v2041 = vsel %vm635, %v2036, 0
        %2043 = vmatpush.bf16.msra.mxu0 0
        %2044 = vmatpush.bf16.msra.mxu0 0
        %2045 = vmatpush.bf16.msra.mxu0 0
        %2046 = vmatpush.bf16.msra.mxu0 0
        %2047 = vmatpush.bf16.msra.mxu0 0
        %2048 = vmatpush.bf16.msra.mxu0 0
        %2049 = vmatpush.bf16.msra.mxu0 0
        %2050 = vmatpush.bf16.msra.mxu0 %v2041
        %2051 = vmatmul.bf16.gmra.mxu0 %v2038
        %v2052 = vpop.f32.mrf.mxu0
        %v2053 = vadd.f32 0.0, %v2052
        %v2054 = vpop.f32.mrf.mxu0
        %2055 = vdwg.mxu0
        %2057 = vrot.lane.b32.xlu0 %v1941, 32
        %v2058 = vpop.permute.xlu0 %2057
        %2061 = vrot.lane.b32.xlu0 %v1997, 64
        %v2062 = vpop.permute.xlu0 %2061
        %2065 = vrot.lane.b32.xlu0 %v2053, 96
        %v2066 = vpop.permute.xlu0 %2065
        %v2068 = vsel %vm599, %v1876, %v2058
        %v2069 = vsel %vm842, %v2068, %v2062
        %v2070 = vsel %vm844, %v2069, %v2066
        %v2071 = vpack.c.bf16 %v404, %v404
        %v2072 = vpack.c.bf16 %v497, %v497
        %v2073 = vpack.c.bf16 %v592, %v592
        %v2075 = vsel %vm599, %v2071, 0
        %v2078 = vsel %vm599, %v2072, 0
        %2080 = vmatpush.bf16.xpose.msra.mxu0 0
        %2081 = vmatpush.bf16.xpose.msra.mxu0 0
        %2082 = vmatpush.bf16.xpose.msra.mxu0 0
        %2083 = vmatpush.bf16.xpose.msra.mxu0 0
        %2084 = vmatpush.bf16.xpose.msra.mxu0 0
        %2085 = vmatpush.bf16.xpose.msra.mxu0 0
        %2086 = vmatpush.bf16.xpose.msra.mxu0 0
        %2087 = vmatpush.bf16.xpose.msra.mxu0 %v2078
        %2088 = vmatmul.bf16.gmra.mxu0 %v2075
        %v2089 = vpop.f32.mrf.mxu0
        %v2090 = vadd.f32 0.0, %v2089
        %v2091 = vpop.f32.mrf.mxu0
        %2092 = vdwg.mxu0
        %v2093 = vsel %vm619, %v2090, -inf
        %2094 = vmax.xlane.f32.xlu0 %v2093
        %v2095 = vpop.xlane.xlu0 %2094
        %v2096 = vsub.f32 %v2090, %v2095
        %v2097 = vmul.f32 %v2096, 1.442695
        %v2098 = vpow.pop %v2097
        %v2099 = vsel %vm619, %v2098, 0.0
        %2100 = vadd.xlane.f32.xlu0 %v2099
        %v2101 = vpop.xlane.xlu0 %2100
        %v2102 = vrcp.pop %v2101
        %v2103 = vmul.f32 %v2098, %v2102
        %v2104 = vpack.c.bf16 %v2103, %v2103
        %v2106 = vsel %vm619, %v2104, 0
        %v2109 = vsel %vm635, %v2073, 0
        %2111 = vmatpush.bf16.msra.mxu0 0
        %2112 = vmatpush.bf16.msra.mxu0 0
        %2113 = vmatpush.bf16.msra.mxu0 0
        %2114 = vmatpush.bf16.msra.mxu0 0
        %2115 = vmatpush.bf16.msra.mxu0 0
        %2116 = vmatpush.bf16.msra.mxu0 0
        %2117 = vmatpush.bf16.msra.mxu0 0
        %2118 = vmatpush.bf16.msra.mxu0 %v2109
        %2119 = vmatmul.bf16.gmra.mxu0 %v2106
        %v2120 = vpop.f32.mrf.mxu0
        %v2121 = vadd.f32 0.0, %v2120
        %v2122 = vpop.f32.mrf.mxu0
        %2123 = vdwg.mxu0
        %v2125 = vunpack.c.l.b16 %v2071
        %v2126 = vpack.c.b16 %v2125, %v2125
        %2127 = vrot.lane.b32.xlu0 %v2126, 96
        %v2128 = vpop.permute.xlu0 %2127
        %v2130 = vunpack.c.l.b16 %v2072
        %v2131 = vpack.c.b16 %v2130, %v2130
        %2132 = vrot.lane.b32.xlu0 %v2131, 96
        %v2133 = vpop.permute.xlu0 %2132
        %v2135 = vsel %vm599, %v2128, 0
        %v2138 = vsel %vm599, %v2133, 0
        %2140 = vmatpush.bf16.xpose.msra.mxu0 0
        %2141 = vmatpush.bf16.xpose.msra.mxu0 0
        %2142 = vmatpush.bf16.xpose.msra.mxu0 0
        %2143 = vmatpush.bf16.xpose.msra.mxu0 0
        %2144 = vmatpush.bf16.xpose.msra.mxu0 0
        %2145 = vmatpush.bf16.xpose.msra.mxu0 0
        %2146 = vmatpush.bf16.xpose.msra.mxu0 0
        %2147 = vmatpush.bf16.xpose.msra.mxu0 %v2138
        %2148 = vmatmul.bf16.gmra.mxu0 %v2135
        %v2149 = vpop.f32.mrf.mxu0
        %v2150 = vadd.f32 0.0, %v2149
        %v2151 = vpop.f32.mrf.mxu0
        %2152 = vdwg.mxu0
        %v2153 = vsel %vm619, %v2150, -inf
        %2154 = vmax.xlane.f32.xlu0 %v2153
        %v2155 = vpop.xlane.xlu0 %2154
        %v2156 = vsub.f32 %v2150, %v2155
        %v2157 = vmul.f32 %v2156, 1.442695
        %v2158 = vpow.pop %v2157
        %v2159 = vsel %vm619, %v2158, 0.0
        %2160 = vadd.xlane.f32.xlu0 %v2159
        %v2161 = vpop.xlane.xlu0 %2160
        %v2162 = vrcp.pop %v2161
        %v2163 = vmul.f32 %v2158, %v2162
        %v2164 = vpack.c.bf16 %v2163, %v2163
        %v2166 = vunpack.c.l.b16 %v2073
        %v2167 = vpack.c.b16 %v2166, %v2166
        %2168 = vrot.lane.b32.xlu0 %v2167, 96
        %v2169 = vpop.permute.xlu0 %2168
        %v2171 = vsel %vm619, %v2164, 0
        %v2174 = vsel %vm635, %v2169, 0
        %2176 = vmatpush.bf16.msra.mxu0 0
        %2177 = vmatpush.bf16.msra.mxu0 0
        %2178 = vmatpush.bf16.msra.mxu0 0
        %2179 = vmatpush.bf16.msra.mxu0 0
        %2180 = vmatpush.bf16.msra.mxu0 0
        %2181 = vmatpush.bf16.msra.mxu0 0
        %2182 = vmatpush.bf16.msra.mxu0 0
        %2183 = vmatpush.bf16.msra.mxu0 %v2174
        %2184 = vmatmul.bf16.gmra.mxu0 %v2171
        %v2185 = vpop.f32.mrf.mxu0
        %v2186 = vadd.f32 0.0, %v2185
        %v2187 = vpop.f32.mrf.mxu0
        %2188 = vdwg.mxu0
        %2189 = vrot.lane.b32.xlu0 %v2126, 64
        %v2190 = vpop.permute.xlu0 %2189
        %2191 = vrot.lane.b32.xlu0 %v2131, 64
        %v2192 = vpop.permute.xlu0 %2191
        %v2194 = vsel %vm599, %v2190, 0
        %v2197 = vsel %vm599, %v2192, 0
        %2199 = vmatpush.bf16.xpose.msra.mxu0 0
        %2200 = vmatpush.bf16.xpose.msra.mxu0 0
        %2201 = vmatpush.bf16.xpose.msra.mxu0 0
        %2202 = vmatpush.bf16.xpose.msra.mxu0 0
        %2203 = vmatpush.bf16.xpose.msra.mxu0 0
        %2204 = vmatpush.bf16.xpose.msra.mxu0 0
        %2205 = vmatpush.bf16.xpose.msra.mxu0 0
        %2206 = vmatpush.bf16.xpose.msra.mxu0 %v2197
        %2207 = vmatmul.bf16.gmra.mxu0 %v2194
        %v2208 = vpop.f32.mrf.mxu0
        %v2209 = vadd.f32 0.0, %v2208
        %v2210 = vpop.f32.mrf.mxu0
        %2211 = vdwg.mxu0
        %v2212 = vsel %vm619, %v2209, -inf
        %2213 = vmax.xlane.f32.xlu0 %v2212
        %v2214 = vpop.xlane.xlu0 %2213
        %v2215 = vsub.f32 %v2209, %v2214
        %v2216 = vmul.f32 %v2215, 1.442695
        %v2217 = vpow.pop %v2216
        %v2218 = vsel %vm619, %v2217, 0.0
        %2219 = vadd.xlane.f32.xlu0 %v2218
        %v2220 = vpop.xlane.xlu0 %2219
        %v2221 = vrcp.pop %v2220
        %v2222 = vmul.f32 %v2217, %v2221
        %v2223 = vpack.c.bf16 %v2222, %v2222
        %2224 = vrot.lane.b32.xlu0 %v2167, 64
        %v2225 = vpop.permute.xlu0 %2224
        %v2227 = vsel %vm619, %v2223, 0
        %v2230 = vsel %vm635, %v2225, 0
        %2232 = vmatpush.bf16.msra.mxu0 0
        %2233 = vmatpush.bf16.msra.mxu0 0
        %2234 = vmatpush.bf16.msra.mxu0 0
        %2235 = vmatpush.bf16.msra.mxu0 0
        %2236 = vmatpush.bf16.msra.mxu0 0
        %2237 = vmatpush.bf16.msra.mxu0 0
        %2238 = vmatpush.bf16.msra.mxu0 0
        %2239 = vmatpush.bf16.msra.mxu0 %v2230
        %2240 = vmatmul.bf16.gmra.mxu0 %v2227
        %v2241 = vpop.f32.mrf.mxu0
        %v2242 = vadd.f32 0.0, %v2241
        %v2243 = vpop.f32.mrf.mxu0
        %2244 = vdwg.mxu0
        %2245 = vrot.lane.b32.xlu0 %v2126, 32
        %v2246 = vpop.permute.xlu0 %2245
        %2247 = vrot.lane.b32.xlu0 %v2131, 32
        %v2248 = vpop.permute.xlu0 %2247
        %v2250 = vsel %vm599, %v2246, 0
        %v2253 = vsel %vm599, %v2248, 0
        %2255 = vmatpush.bf16.xpose.msra.mxu0 0
        %2256 = vmatpush.bf16.xpose.msra.mxu0 0
        %2257 = vmatpush.bf16.xpose.msra.mxu0 0
        %2258 = vmatpush.bf16.xpose.msra.mxu0 0
        %2259 = vmatpush.bf16.xpose.msra.mxu0 0
        %2260 = vmatpush.bf16.xpose.msra.mxu0 0
        %2261 = vmatpush.bf16.xpose.msra.mxu0 0
        %2262 = vmatpush.bf16.xpose.msra.mxu0 %v2253
        %2263 = vmatmul.bf16.gmra.mxu0 %v2250
        %v2264 = vpop.f32.mrf.mxu0
        %v2265 = vadd.f32 0.0, %v2264
        %v2266 = vpop.f32.mrf.mxu0
        %2267 = vdwg.mxu0
        %v2268 = vsel %vm619, %v2265, -inf
        %2269 = vmax.xlane.f32.xlu0 %v2268
        %v2270 = vpop.xlane.xlu0 %2269
        %v2271 = vsub.f32 %v2265, %v2270
        %v2272 = vmul.f32 %v2271, 1.442695
        %v2273 = vpow.pop %v2272
        %v2274 = vsel %vm619, %v2273, 0.0
        %2275 = vadd.xlane.f32.xlu0 %v2274
        %v2276 = vpop.xlane.xlu0 %2275
        %v2277 = vrcp.pop %v2276
        %v2278 = vmul.f32 %v2273, %v2277
        %v2279 = vpack.c.bf16 %v2278, %v2278
        %2280 = vrot.lane.b32.xlu0 %v2167, 32
        %v2281 = vpop.permute.xlu0 %2280
        %v2283 = vsel %vm619, %v2279, 0
        %v2286 = vsel %vm635, %v2281, 0
        %2288 = vmatpush.bf16.msra.mxu0 0
        %2289 = vmatpush.bf16.msra.mxu0 0
        %2290 = vmatpush.bf16.msra.mxu0 0
        %2291 = vmatpush.bf16.msra.mxu0 0
        %2292 = vmatpush.bf16.msra.mxu0 0
        %2293 = vmatpush.bf16.msra.mxu0 0
        %2294 = vmatpush.bf16.msra.mxu0 0
        %2295 = vmatpush.bf16.msra.mxu0 %v2286
        %2296 = vmatmul.bf16.gmra.mxu0 %v2283
        %v2297 = vpop.f32.mrf.mxu0
        %v2298 = vadd.f32 0.0, %v2297
        %v2299 = vpop.f32.mrf.mxu0
        %2300 = vdwg.mxu0
        %2302 = vrot.lane.b32.xlu0 %v2186, 32
        %v2303 = vpop.permute.xlu0 %2302
        %2306 = vrot.lane.b32.xlu0 %v2242, 64
        %v2307 = vpop.permute.xlu0 %2306
        %2310 = vrot.lane.b32.xlu0 %v2298, 96
        %v2311 = vpop.permute.xlu0 %2310
        %v2313 = vsel %vm599, %v2121, %v2303
        %v2314 = vsel %vm842, %v2313, %v2307
        %v2315 = vsel %vm844, %v2314, %v2311
        %v2316 = vpack.c.bf16 %v405, %v405
        %v2317 = vpack.c.bf16 %v499, %v499
        %v2318 = vpack.c.bf16 %v594, %v594
        %v2320 = vsel %vm599, %v2316, 0
        %v2323 = vsel %vm599, %v2317, 0
        %2325 = vmatpush.bf16.xpose.msra.mxu0 0
        %2326 = vmatpush.bf16.xpose.msra.mxu0 0
        %2327 = vmatpush.bf16.xpose.msra.mxu0 0
        %2328 = vmatpush.bf16.xpose.msra.mxu0 0
        %2329 = vmatpush.bf16.xpose.msra.mxu0 0
        %2330 = vmatpush.bf16.xpose.msra.mxu0 0
        %2331 = vmatpush.bf16.xpose.msra.mxu0 0
        %2332 = vmatpush.bf16.xpose.msra.mxu0 %v2323
        %2333 = vmatmul.bf16.gmra.mxu0 %v2320
        %v2334 = vpop.f32.mrf.mxu0
        %v2335 = vadd.f32 0.0, %v2334
        %v2336 = vpop.f32.mrf.mxu0
        %2337 = vdwg.mxu0
        %v2338 = vsel %vm619, %v2335, -inf
        %2339 = vmax.xlane.f32.xlu0 %v2338
        %v2340 = vpop.xlane.xlu0 %2339
        %v2341 = vsub.f32 %v2335, %v2340
        %v2342 = vmul.f32 %v2341, 1.442695
        %v2343 = vpow.pop %v2342
        %v2344 = vsel %vm619, %v2343, 0.0
        %2345 = vadd.xlane.f32.xlu0 %v2344
        %v2346 = vpop.xlane.xlu0 %2345
        %v2347 = vrcp.pop %v2346
        %v2348 = vmul.f32 %v2343, %v2347
        %v2349 = vpack.c.bf16 %v2348, %v2348
        %v2351 = vsel %vm619, %v2349, 0
        %v2354 = vsel %vm635, %v2318, 0
        %2356 = vmatpush.bf16.msra.mxu0 0
        %2357 = vmatpush.bf16.msra.mxu0 0
        %2358 = vmatpush.bf16.msra.mxu0 0
        %2359 = vmatpush.bf16.msra.mxu0 0
        %2360 = vmatpush.bf16.msra.mxu0 0
        %2361 = vmatpush.bf16.msra.mxu0 0
        %2362 = vmatpush.bf16.msra.mxu0 0
        %2363 = vmatpush.bf16.msra.mxu0 %v2354
        %2364 = vmatmul.bf16.gmra.mxu0 %v2351
        %v2365 = vpop.f32.mrf.mxu0
        %v2366 = vadd.f32 0.0, %v2365
        %v2367 = vpop.f32.mrf.mxu0
        %2368 = vdwg.mxu0
        %v2370 = vunpack.c.l.b16 %v2316
        %v2371 = vpack.c.b16 %v2370, %v2370
        %2372 = vrot.lane.b32.xlu0 %v2371, 96
        %v2373 = vpop.permute.xlu0 %2372
        %v2375 = vunpack.c.l.b16 %v2317
        %v2376 = vpack.c.b16 %v2375, %v2375
        %2377 = vrot.lane.b32.xlu0 %v2376, 96
        %v2378 = vpop.permute.xlu0 %2377
        %v2380 = vsel %vm599, %v2373, 0
        %v2383 = vsel %vm599, %v2378, 0
        %2385 = vmatpush.bf16.xpose.msra.mxu0 0
        %2386 = vmatpush.bf16.xpose.msra.mxu0 0
        %2387 = vmatpush.bf16.xpose.msra.mxu0 0
        %2388 = vmatpush.bf16.xpose.msra.mxu0 0
        %2389 = vmatpush.bf16.xpose.msra.mxu0 0
        %2390 = vmatpush.bf16.xpose.msra.mxu0 0
        %2391 = vmatpush.bf16.xpose.msra.mxu0 0
        %2392 = vmatpush.bf16.xpose.msra.mxu0 %v2383
        %2393 = vmatmul.bf16.gmra.mxu0 %v2380
        %v2394 = vpop.f32.mrf.mxu0
        %v2395 = vadd.f32 0.0, %v2394
        %v2396 = vpop.f32.mrf.mxu0
        %2397 = vdwg.mxu0
        %v2398 = vsel %vm619, %v2395, -inf
        %2399 = vmax.xlane.f32.xlu0 %v2398
        %v2400 = vpop.xlane.xlu0 %2399
        %v2401 = vsub.f32 %v2395, %v2400
        %v2402 = vmul.f32 %v2401, 1.442695
        %v2403 = vpow.pop %v2402
        %v2404 = vsel %vm619, %v2403, 0.0
        %2405 = vadd.xlane.f32.xlu0 %v2404
        %v2406 = vpop.xlane.xlu0 %2405
        %v2407 = vrcp.pop %v2406
        %v2408 = vmul.f32 %v2403, %v2407
        %v2409 = vpack.c.bf16 %v2408, %v2408
        %v2411 = vunpack.c.l.b16 %v2318
        %v2412 = vpack.c.b16 %v2411, %v2411
        %2413 = vrot.lane.b32.xlu0 %v2412, 96
        %v2414 = vpop.permute.xlu0 %2413
        %v2416 = vsel %vm619, %v2409, 0
        %v2419 = vsel %vm635, %v2414, 0
        %2421 = vmatpush.bf16.msra.mxu0 0
        %2422 = vmatpush.bf16.msra.mxu0 0
        %2423 = vmatpush.bf16.msra.mxu0 0
        %2424 = vmatpush.bf16.msra.mxu0 0
        %2425 = vmatpush.bf16.msra.mxu0 0
        %2426 = vmatpush.bf16.msra.mxu0 0
        %2427 = vmatpush.bf16.msra.mxu0 0
        %2428 = vmatpush.bf16.msra.mxu0 %v2419
        %2429 = vmatmul.bf16.gmra.mxu0 %v2416
        %v2430 = vpop.f32.mrf.mxu0
        %v2431 = vadd.f32 0.0, %v2430
        %v2432 = vpop.f32.mrf.mxu0
        %2433 = vdwg.mxu0
        %2434 = vrot.lane.b32.xlu0 %v2371, 64
        %v2435 = vpop.permute.xlu0 %2434
        %2436 = vrot.lane.b32.xlu0 %v2376, 64
        %v2437 = vpop.permute.xlu0 %2436
        %v2439 = vsel %vm599, %v2435, 0
        %v2442 = vsel %vm599, %v2437, 0
        %2444 = vmatpush.bf16.xpose.msra.mxu0 0
        %2445 = vmatpush.bf16.xpose.msra.mxu0 0
        %2446 = vmatpush.bf16.xpose.msra.mxu0 0
        %2447 = vmatpush.bf16.xpose.msra.mxu0 0
        %2448 = vmatpush.bf16.xpose.msra.mxu0 0
        %2449 = vmatpush.bf16.xpose.msra.mxu0 0
        %2450 = vmatpush.bf16.xpose.msra.mxu0 0
        %2451 = vmatpush.bf16.xpose.msra.mxu0 %v2442
        %2452 = vmatmul.bf16.gmra.mxu0 %v2439
        %v2453 = vpop.f32.mrf.mxu0
        %v2454 = vadd.f32 0.0, %v2453
        %v2455 = vpop.f32.mrf.mxu0
        %2456 = vdwg.mxu0
        %v2457 = vsel %vm619, %v2454, -inf
        %2458 = vmax.xlane.f32.xlu0 %v2457
        %v2459 = vpop.xlane.xlu0 %2458
        %v2460 = vsub.f32 %v2454, %v2459
        %v2461 = vmul.f32 %v2460, 1.442695
        %v2462 = vpow.pop %v2461
        %v2463 = vsel %vm619, %v2462, 0.0
        %2464 = vadd.xlane.f32.xlu0 %v2463
        %v2465 = vpop.xlane.xlu0 %2464
        %v2466 = vrcp.pop %v2465
        %v2467 = vmul.f32 %v2462, %v2466
        %v2468 = vpack.c.bf16 %v2467, %v2467
        %2469 = vrot.lane.b32.xlu0 %v2412, 64
        %v2470 = vpop.permute.xlu0 %2469
        %v2472 = vsel %vm619, %v2468, 0
        %v2475 = vsel %vm635, %v2470, 0
        %2477 = vmatpush.bf16.msra.mxu0 0
        %2478 = vmatpush.bf16.msra.mxu0 0
        %2479 = vmatpush.bf16.msra.mxu0 0
        %2480 = vmatpush.bf16.msra.mxu0 0
        %2481 = vmatpush.bf16.msra.mxu0 0
        %2482 = vmatpush.bf16.msra.mxu0 0
        %2483 = vmatpush.bf16.msra.mxu0 0
        %2484 = vmatpush.bf16.msra.mxu0 %v2475
        %2485 = vmatmul.bf16.gmra.mxu0 %v2472
        %v2486 = vpop.f32.mrf.mxu0
        %v2487 = vadd.f32 0.0, %v2486
        %v2488 = vpop.f32.mrf.mxu0
        %2489 = vdwg.mxu0
        %2490 = vrot.lane.b32.xlu0 %v2371, 32
        %v2491 = vpop.permute.xlu0 %2490
        %2492 = vrot.lane.b32.xlu0 %v2376, 32
        %v2493 = vpop.permute.xlu0 %2492
        %v2495 = vsel %vm599, %v2491, 0
        %v2498 = vsel %vm599, %v2493, 0
        %2500 = vmatpush.bf16.xpose.msra.mxu0 0
        %2501 = vmatpush.bf16.xpose.msra.mxu0 0
        %2502 = vmatpush.bf16.xpose.msra.mxu0 0
        %2503 = vmatpush.bf16.xpose.msra.mxu0 0
        %2504 = vmatpush.bf16.xpose.msra.mxu0 0
        %2505 = vmatpush.bf16.xpose.msra.mxu0 0
        %2506 = vmatpush.bf16.xpose.msra.mxu0 0
        %2507 = vmatpush.bf16.xpose.msra.mxu0 %v2498
        %2508 = vmatmul.bf16.gmra.mxu0 %v2495
        %v2509 = vpop.f32.mrf.mxu0
        %v2510 = vadd.f32 0.0, %v2509
        %v2511 = vpop.f32.mrf.mxu0
        %2512 = vdwg.mxu0
        %v2513 = vsel %vm619, %v2510, -inf
        %2514 = vmax.xlane.f32.xlu0 %v2513
        %v2515 = vpop.xlane.xlu0 %2514
        %v2516 = vsub.f32 %v2510, %v2515
        %v2517 = vmul.f32 %v2516, 1.442695
        %v2518 = vpow.pop %v2517
        %v2519 = vsel %vm619, %v2518, 0.0
        %2520 = vadd.xlane.f32.xlu0 %v2519
        %v2521 = vpop.xlane.xlu0 %2520
        %v2522 = vrcp.pop %v2521
        %v2523 = vmul.f32 %v2518, %v2522
        %v2524 = vpack.c.bf16 %v2523, %v2523
        %2525 = vrot.lane.b32.xlu0 %v2412, 32
        %v2526 = vpop.permute.xlu0 %2525
        %v2528 = vsel %vm619, %v2524, 0
        %v2531 = vsel %vm635, %v2526, 0
        %2533 = vmatpush.bf16.msra.mxu0 0
        %2534 = vmatpush.bf16.msra.mxu0 0
        %2535 = vmatpush.bf16.msra.mxu0 0
        %2536 = vmatpush.bf16.msra.mxu0 0
        %2537 = vmatpush.bf16.msra.mxu0 0
        %2538 = vmatpush.bf16.msra.mxu0 0
        %2539 = vmatpush.bf16.msra.mxu0 0
        %2540 = vmatpush.bf16.msra.mxu0 %v2531
        %2541 = vmatmul.bf16.gmra.mxu0 %v2528
        %v2542 = vpop.f32.mrf.mxu0
        %v2543 = vadd.f32 0.0, %v2542
        %v2544 = vpop.f32.mrf.mxu0
        %2545 = vdwg.mxu0
        %2547 = vrot.lane.b32.xlu0 %v2431, 32
        %v2548 = vpop.permute.xlu0 %2547
        %2551 = vrot.lane.b32.xlu0 %v2487, 64
        %v2552 = vpop.permute.xlu0 %2551
        %2555 = vrot.lane.b32.xlu0 %v2543, 96
        %v2556 = vpop.permute.xlu0 %2555
        %v2558 = vsel %vm599, %v2366, %v2548
        %v2559 = vsel %vm842, %v2558, %v2552
        %v2560 = vsel %vm844, %v2559, %v2556
        %v2561 = vpack.c.bf16 %v1090, %v845
        %v2562 = vpack.c.bf16 %v1580, %v1335
        %v2563 = vpack.c.bf16 %v2070, %v1825
        %v2564 = vpack.c.bf16 %v2560, %v2315
        %s2565 = scalar_lea.vmem %s282, 192
        %v2566 = vld [vmem:[%s2565] sm:$0xf]
        %v2567 = vld [vmem:[%s2565 + $0x4] sm:$0xf]
        %v2568 = vld [vmem:[%s2565 + $0x8] sm:$0xf]
        %v2569 = vld [vmem:[%s2565 + $0xc] sm:$0xf]
        %v2570 = vld [vmem:[%s2565 + $0x10] sm:$0xf]
        %v2571 = vld [vmem:[%s2565 + $0x14] sm:$0xf]
        %v2572 = vld [vmem:[%s2565 + $0x18] sm:$0xf]
        %v2573 = vld [vmem:[%s2565 + $0x1c] sm:$0xf]
        %v2574 = vld [vmem:[%s2565 + $0x20] sm:$0xf]
        %v2575 = vld [vmem:[%s2565 + $0x24] sm:$0xf]
        %v2576 = vld [vmem:[%s2565 + $0x28] sm:$0xf]
        %v2577 = vld [vmem:[%s2565 + $0x2c] sm:$0xf]
        %v2578 = vld [vmem:[%s2565 + $0x30] sm:$0xf]
        %v2579 = vld [vmem:[%s2565 + $0x34] sm:$0xf]
        %v2580 = vld [vmem:[%s2565 + $0x38] sm:$0xf]
        %v2581 = vld [vmem:[%s2565 + $0x3c] sm:$0xf]
        %v2582 = vperm.slane %v302, 3
        %v2599 = vunpack.c.l.b16 %v2566
        %v2600 = vunpack.c.l.b16 %v2567
        %v2601 = vunpack.c.l.b16 %v2568
        %v2602 = vunpack.c.l.b16 %v2569
        %v2603 = vunpack.c.l.b16 %v2570
        %v2604 = vunpack.c.l.b16 %v2571
        %v2605 = vunpack.c.l.b16 %v2572
        %v2606 = vunpack.c.l.b16 %v2573
        %v2607 = vunpack.c.l.b16 %v2574
        %v2608 = vunpack.c.l.b16 %v2575
        %v2609 = vunpack.c.l.b16 %v2576
        %v2610 = vunpack.c.l.b16 %v2577
        %v2611 = vunpack.c.l.b16 %v2578
        %v2612 = vunpack.c.l.b16 %v2579
        %v2613 = vunpack.c.l.b16 %v2580
        %v2614 = vunpack.c.l.b16 %v2581
        %v2615 = vpack.c.b16 %v2600, %v2599
        %v2616 = vpack.c.b16 %v2602, %v2601
        %v2617 = vpack.c.b16 %v2604, %v2603
        %v2618 = vpack.c.b16 %v2606, %v2605
        %v2619 = vpack.c.b16 %v2608, %v2607
        %v2620 = vpack.c.b16 %v2610, %v2609
        %v2621 = vpack.c.b16 %v2612, %v2611
        %v2622 = vpack.c.b16 %v2614, %v2613
        %2631 = vmatpush.bf16.msra.mxu0 %v2622
        %2632 = vmatpush.bf16.msra.mxu0 %v2621
        %2633 = vmatpush.bf16.msra.mxu0 %v2620
        %2634 = vmatpush.bf16.msra.mxu0 %v2619
        %2635 = vmatpush.bf16.msra.mxu0 %v2618
        %2636 = vmatpush.bf16.msra.mxu0 %v2617
        %2637 = vmatpush.bf16.msra.mxu0 %v2616
        %2638 = vmatpush.bf16.msra.mxu0 %v2615
        %2639 = vmatmul.bf16.gmra.mxu0 %v2561
        %v2640 = vpop.f32.mrf.mxu0
        %v2641 = vadd.f32 %v2582, %v2640
        %v2642 = vpop.f32.mrf.mxu0
        %v2643 = vadd.f32 %v2582, %v2642
        %2644 = vmatmul.bf16.gmra.mxu0 %v2562
        %v2645 = vpop.f32.mrf.mxu0
        %v2646 = vadd.f32 %v2582, %v2645
        %v2647 = vpop.f32.mrf.mxu0
        %v2648 = vadd.f32 %v2582, %v2647
        %2649 = vmatmul.bf16.gmra.mxu0 %v2563
        %v2650 = vpop.f32.mrf.mxu0
        %v2651 = vadd.f32 %v2582, %v2650
        %v2652 = vpop.f32.mrf.mxu0
        %v2653 = vadd.f32 %v2582, %v2652
        %2654 = vmatmul.bf16.gmra.mxu0 %v2564
        %v2655 = vpop.f32.mrf.mxu0
        %v2656 = vadd.f32 %v2582, %v2655
        %v2657 = vpop.f32.mrf.mxu0
        %v2658 = vadd.f32 %v2582, %v2657
        %2659 = vdwg.mxu0
        %v2660 = vadd.f32 %v290, %v2641
        %v2661 = vadd.f32 %v291, %v2643
        %v2662 = vadd.f32 %v292, %v2646
        %v2663 = vadd.f32 %v293, %v2648
        %v2664 = vadd.f32 %v294, %v2651
        %v2665 = vadd.f32 %v295, %v2653
        %v2666 = vadd.f32 %v296, %v2656
        %v2667 = vadd.f32 %v297, %v2658
        %2668 = vadd.xlane.f32.xlu0 %v2660
        %v2669 = vpop.xlane.xlu0 %2668
        %2670 = vadd.xlane.f32.xlu0 %v2661
        %v2671 = vpop.xlane.xlu0 %2670
        %2672 = vadd.xlane.f32.xlu0 %v2662
        %v2673 = vpop.xlane.xlu0 %2672
        %2674 = vadd.xlane.f32.xlu0 %v2663
        %v2675 = vpop.xlane.xlu0 %2674
        %2676 = vadd.xlane.f32.xlu0 %v2664
        %v2677 = vpop.xlane.xlu0 %2676
        %2678 = vadd.xlane.f32.xlu0 %v2665
        %v2679 = vpop.xlane.xlu0 %2678
        %2680 = vadd.xlane.f32.xlu0 %v2666
        %v2681 = vpop.xlane.xlu0 %2680
        %2682 = vadd.xlane.f32.xlu0 %v2667
        %v2683 = vpop.xlane.xlu0 %2682
        %v2684 = vrcp.pop 128.0
        %v2685 = vmul.f32 128.0, %v2684
        %v2686 = vsub.f32 1.0, %v2685
        %v2687 = vmul.f32 %v2684, %v2686
        %v2688 = vadd.f32 %v2684, %v2687
        %vm2689 = vweird.f32 %v2684
        %v2690 = vsel %vm2689, %v2684, %v2688
        %v2691 = vmul.f32 %v2669, %v2690
        %v2692 = vmul.f32 %v2671, %v2690
        %v2693 = vmul.f32 %v2673, %v2690
        %v2694 = vmul.f32 %v2675, %v2690
        %v2695 = vmul.f32 %v2677, %v2690
        %v2696 = vmul.f32 %v2679, %v2690
        %v2697 = vmul.f32 %v2681, %v2690
        %v2698 = vmul.f32 %v2683, %v2690
        %v2699 = vsub.f32 %v2660, %v2691
        %v2700 = vsub.f32 %v2661, %v2692
        %v2701 = vsub.f32 %v2662, %v2693
        %v2702 = vsub.f32 %v2663, %v2694
        %v2703 = vsub.f32 %v2664, %v2695
        %v2704 = vsub.f32 %v2665, %v2696
        %v2705 = vsub.f32 %v2666, %v2697
        %v2706 = vsub.f32 %v2667, %v2698
        %v2707 = vmul.f32 %v2699, %v2699
        %v2708 = vmul.f32 %v2700, %v2700
        %v2709 = vmul.f32 %v2701, %v2701
        %v2710 = vmul.f32 %v2702, %v2702
        %v2711 = vmul.f32 %v2703, %v2703
        %v2712 = vmul.f32 %v2704, %v2704
        %v2713 = vmul.f32 %v2705, %v2705
        %v2714 = vmul.f32 %v2706, %v2706
        %2715 = vadd.xlane.f32.xlu0 %v2707
        %v2716 = vpop.xlane.xlu0 %2715
        %2717 = vadd.xlane.f32.xlu0 %v2708
        %v2718 = vpop.xlane.xlu0 %2717
        %2719 = vadd.xlane.f32.xlu0 %v2709
        %v2720 = vpop.xlane.xlu0 %2719
        %2721 = vadd.xlane.f32.xlu0 %v2710
        %v2722 = vpop.xlane.xlu0 %2721
        %2723 = vadd.xlane.f32.xlu0 %v2711
        %v2724 = vpop.xlane.xlu0 %2723
        %2725 = vadd.xlane.f32.xlu0 %v2712
        %v2726 = vpop.xlane.xlu0 %2725
        %2727 = vadd.xlane.f32.xlu0 %v2713
        %v2728 = vpop.xlane.xlu0 %2727
        %2729 = vadd.xlane.f32.xlu0 %v2714
        %v2730 = vpop.xlane.xlu0 %2729
        %v2731 = vmul.f32 %v2716, %v2690
        %v2732 = vmul.f32 %v2718, %v2690
        %v2733 = vmul.f32 %v2720, %v2690
        %v2734 = vmul.f32 %v2722, %v2690
        %v2735 = vmul.f32 %v2724, %v2690
        %v2736 = vmul.f32 %v2726, %v2690
        %v2737 = vmul.f32 %v2728, %v2690
        %v2738 = vmul.f32 %v2730, %v2690
        %v2739 = vadd.f32 %v2731, 1e-05
        %v2740 = vadd.f32 %v2732, 1e-05
        %v2741 = vadd.f32 %v2733, 1e-05
        %v2742 = vadd.f32 %v2734, 1e-05
        %v2743 = vadd.f32 %v2735, 1e-05
        %v2744 = vadd.f32 %v2736, 1e-05
        %v2745 = vadd.f32 %v2737, 1e-05
        %v2746 = vadd.f32 %v2738, 1e-05
        %v2747 = vrsqrt.pop %v2739
        %v2748 = vmul.f32 %v2747, %v2739
        %v2749 = vmul.f32 %v2748, %v2747
        %v2750 = vmul.f32 0.5, %v2749
        %v2751 = vsub.f32 1.5, %v2750
        %v2752 = vmul.f32 %v2747, %v2751
        %vm2753 = vweird.f32 %v2739
        %vm2754 = vweird.f32 %v2747
        %vm2755 = vmor %vm2753, %vm2754
        %v2756 = vsel %vm2755, %v2747, %v2752
        %v2757 = vrsqrt.pop %v2740
        %v2758 = vmul.f32 %v2757, %v2740
        %v2759 = vmul.f32 %v2758, %v2757
        %v2760 = vmul.f32 0.5, %v2759
        %v2761 = vsub.f32 1.5, %v2760
        %v2762 = vmul.f32 %v2757, %v2761
        %vm2763 = vweird.f32 %v2740
        %vm2764 = vweird.f32 %v2757
        %vm2765 = vmor %vm2763, %vm2764
        %v2766 = vsel %vm2765, %v2757, %v2762
        %v2767 = vrsqrt.pop %v2741
        %v2768 = vmul.f32 %v2767, %v2741
        %v2769 = vmul.f32 %v2768, %v2767
        %v2770 = vmul.f32 0.5, %v2769
        %v2771 = vsub.f32 1.5, %v2770
        %v2772 = vmul.f32 %v2767, %v2771
        %vm2773 = vweird.f32 %v2741
        %vm2774 = vweird.f32 %v2767
        %vm2775 = vmor %vm2773, %vm2774
        %v2776 = vsel %vm2775, %v2767, %v2772
        %v2777 = vrsqrt.pop %v2742
        %v2778 = vmul.f32 %v2777, %v2742
        %v2779 = vmul.f32 %v2778, %v2777
        %v2780 = vmul.f32 0.5, %v2779
        %v2781 = vsub.f32 1.5, %v2780
        %v2782 = vmul.f32 %v2777, %v2781
        %vm2783 = vweird.f32 %v2742
        %vm2784 = vweird.f32 %v2777
        %vm2785 = vmor %vm2783, %vm2784
        %v2786 = vsel %vm2785, %v2777, %v2782
        %v2787 = vrsqrt.pop %v2743
        %v2788 = vmul.f32 %v2787, %v2743
        %v2789 = vmul.f32 %v2788, %v2787
        %v2790 = vmul.f32 0.5, %v2789
        %v2791 = vsub.f32 1.5, %v2790
        %v2792 = vmul.f32 %v2787, %v2791
        %vm2793 = vweird.f32 %v2743
        %vm2794 = vweird.f32 %v2787
        %vm2795 = vmor %vm2793, %vm2794
        %v2796 = vsel %vm2795, %v2787, %v2792
        %v2797 = vrsqrt.pop %v2744
        %v2798 = vmul.f32 %v2797, %v2744
        %v2799 = vmul.f32 %v2798, %v2797
        %v2800 = vmul.f32 0.5, %v2799
        %v2801 = vsub.f32 1.5, %v2800
        %v2802 = vmul.f32 %v2797, %v2801
        %vm2803 = vweird.f32 %v2744
        %vm2804 = vweird.f32 %v2797
        %vm2805 = vmor %vm2803, %vm2804
        %v2806 = vsel %vm2805, %v2797, %v2802
        %v2807 = vrsqrt.pop %v2745
        %v2808 = vmul.f32 %v2807, %v2745
        %v2809 = vmul.f32 %v2808, %v2807
        %v2810 = vmul.f32 0.5, %v2809
        %v2811 = vsub.f32 1.5, %v2810
        %v2812 = vmul.f32 %v2807, %v2811
        %vm2813 = vweird.f32 %v2745
        %vm2814 = vweird.f32 %v2807
        %vm2815 = vmor %vm2813, %vm2814
        %v2816 = vsel %vm2815, %v2807, %v2812
        %v2817 = vrsqrt.pop %v2746
        %v2818 = vmul.f32 %v2817, %v2746
        %v2819 = vmul.f32 %v2818, %v2817
        %v2820 = vmul.f32 0.5, %v2819
        %v2821 = vsub.f32 1.5, %v2820
        %v2822 = vmul.f32 %v2817, %v2821
        %vm2823 = vweird.f32 %v2746
        %vm2824 = vweird.f32 %v2817
        %vm2825 = vmor %vm2823, %vm2824
        %v2826 = vsel %vm2825, %v2817, %v2822
        %v2827 = vmul.f32 %v2699, %v2756
        %v2828 = vmul.f32 %v2700, %v2766
        %v2829 = vmul.f32 %v2701, %v2776
        %v2830 = vmul.f32 %v2702, %v2786
        %v2831 = vmul.f32 %v2703, %v2796
        %v2832 = vmul.f32 %v2704, %v2806
        %v2833 = vmul.f32 %v2705, %v2816
        %v2834 = vmul.f32 %v2706, %v2826
        %v2835 = vperm.slane %v302, 4
        %v2836 = vmul.f32 %v2827, %v2835
        %v2837 = vmul.f32 %v2828, %v2835
        %v2838 = vmul.f32 %v2829, %v2835
        %v2839 = vmul.f32 %v2830, %v2835
        %v2840 = vmul.f32 %v2831, %v2835
        %v2841 = vmul.f32 %v2832, %v2835
        %v2842 = vmul.f32 %v2833, %v2835
        %v2843 = vmul.f32 %v2834, %v2835
        %v2844 = vperm.slane %v302, 5
        %v2845 = vadd.f32 %v2836, %v2844
        %v2846 = vadd.f32 %v2837, %v2844
        %v2847 = vadd.f32 %v2838, %v2844
        %v2848 = vadd.f32 %v2839, %v2844
        %v2849 = vadd.f32 %v2840, %v2844
        %v2850 = vadd.f32 %v2841, %v2844
        %v2851 = vadd.f32 %v2842, %v2844
        %v2852 = vadd.f32 %v2843, %v2844
        %v2853 = vpack.c.bf16 %v2846, %v2845
        %v2854 = vpack.c.bf16 %v2848, %v2847
        %v2855 = vpack.c.bf16 %v2850, %v2849
        %v2856 = vpack.c.bf16 %v2852, %v2851
        %s2857 = scalar_lea.vmem %s282, 256
        %v2858 = vld [vmem:[%s2857] sm:$0xf]
        %v2859 = vld [vmem:[%s2857 + $0x4] sm:$0xf]
        %v2860 = vld [vmem:[%s2857 + $0x8] sm:$0xf]
        %v2861 = vld [vmem:[%s2857 + $0xc] sm:$0xf]
        %v2862 = vld [vmem:[%s2857 + $0x10] sm:$0xf]
        %v2863 = vld [vmem:[%s2857 + $0x14] sm:$0xf]
        %v2864 = vld [vmem:[%s2857 + $0x18] sm:$0xf]
        %v2865 = vld [vmem:[%s2857 + $0x1c] sm:$0xf]
        %v2866 = vld [vmem:[%s2857 + $0x20] sm:$0xf]
        %v2867 = vld [vmem:[%s2857 + $0x24] sm:$0xf]
        %v2868 = vld [vmem:[%s2857 + $0x28] sm:$0xf]
        %v2869 = vld [vmem:[%s2857 + $0x2c] sm:$0xf]
        %v2870 = vld [vmem:[%s2857 + $0x30] sm:$0xf]
        %v2871 = vld [vmem:[%s2857 + $0x34] sm:$0xf]
        %v2872 = vld [vmem:[%s2857 + $0x38] sm:$0xf]
        %v2873 = vld [vmem:[%s2857 + $0x3c] sm:$0xf]
        %v2874 = vperm.slane %v303, 0
        %v2891 = vunpack.c.l.b16 %v2858
        %v2892 = vunpack.c.l.b16 %v2859
        %v2893 = vunpack.c.l.b16 %v2860
        %v2894 = vunpack.c.l.b16 %v2861
        %v2895 = vunpack.c.l.b16 %v2862
        %v2896 = vunpack.c.l.b16 %v2863
        %v2897 = vunpack.c.l.b16 %v2864
        %v2898 = vunpack.c.l.b16 %v2865
        %v2899 = vunpack.c.l.b16 %v2866
        %v2900 = vunpack.c.l.b16 %v2867
        %v2901 = vunpack.c.l.b16 %v2868
        %v2902 = vunpack.c.l.b16 %v2869
        %v2903 = vunpack.c.l.b16 %v2870
        %v2904 = vunpack.c.l.b16 %v2871
        %v2905 = vunpack.c.l.b16 %v2872
        %v2906 = vunpack.c.l.b16 %v2873
        %v2907 = vpack.c.b16 %v2892, %v2891
        %v2908 = vpack.c.b16 %v2894, %v2893
        %v2909 = vpack.c.b16 %v2896, %v2895
        %v2910 = vpack.c.b16 %v2898, %v2897
        %v2911 = vpack.c.b16 %v2900, %v2899
        %v2912 = vpack.c.b16 %v2902, %v2901
        %v2913 = vpack.c.b16 %v2904, %v2903
        %v2914 = vpack.c.b16 %v2906, %v2905
        %2923 = vmatpush.bf16.msra.mxu0 %v2914
        %2924 = vmatpush.bf16.msra.mxu0 %v2913
        %2925 = vmatpush.bf16.msra.mxu0 %v2912
        %2926 = vmatpush.bf16.msra.mxu0 %v2911
        %2927 = vmatpush.bf16.msra.mxu0 %v2910
        %2928 = vmatpush.bf16.msra.mxu0 %v2909
        %2929 = vmatpush.bf16.msra.mxu0 %v2908
        %2930 = vmatpush.bf16.msra.mxu0 %v2907
        %2931 = vmatmul.bf16.gmra.mxu0 %v2853
        %v2932 = vpop.f32.mrf.mxu0
        %v2933 = vadd.f32 %v2874, %v2932
        %v2934 = vpop.f32.mrf.mxu0
        %v2935 = vadd.f32 %v2874, %v2934
        %2936 = vmatmul.bf16.gmra.mxu0 %v2854
        %v2937 = vpop.f32.mrf.mxu0
        %v2938 = vadd.f32 %v2874, %v2937
        %v2939 = vpop.f32.mrf.mxu0
        %v2940 = vadd.f32 %v2874, %v2939
        %2941 = vmatmul.bf16.gmra.mxu0 %v2855
        %v2942 = vpop.f32.mrf.mxu0
        %v2943 = vadd.f32 %v2874, %v2942
        %v2944 = vpop.f32.mrf.mxu0
        %v2945 = vadd.f32 %v2874, %v2944
        %2946 = vmatmul.bf16.gmra.mxu0 %v2856
        %v2947 = vpop.f32.mrf.mxu0
        %v2948 = vadd.f32 %v2874, %v2947
        %v2949 = vpop.f32.mrf.mxu0
        %v2950 = vadd.f32 %v2874, %v2949
        %2951 = vdwg.mxu0
        %v2952 = vmax.f32 %v2933, 0.0
        %v2953 = vmax.f32 %v2935, 0.0
        %v2954 = vmax.f32 %v2938, 0.0
        %v2955 = vmax.f32 %v2940, 0.0
        %v2956 = vmax.f32 %v2943, 0.0
        %v2957 = vmax.f32 %v2945, 0.0
        %v2958 = vmax.f32 %v2948, 0.0
        %v2959 = vmax.f32 %v2950, 0.0
        %v2960 = vpack.c.bf16 %v2953, %v2952
        %v2961 = vpack.c.bf16 %v2955, %v2954
        %v2962 = vpack.c.bf16 %v2957, %v2956
        %v2963 = vpack.c.bf16 %v2959, %v2958
        %s2964 = scalar_lea.vmem %s282, 320
        %v2965 = vld [vmem:[%s2964] sm:$0xf]
        %v2966 = vld [vmem:[%s2964 + $0x4] sm:$0xf]
        %v2967 = vld [vmem:[%s2964 + $0x8] sm:$0xf]
        %v2968 = vld [vmem:[%s2964 + $0xc] sm:$0xf]
        %v2969 = vld [vmem:[%s2964 + $0x10] sm:$0xf]
        %v2970 = vld [vmem:[%s2964 + $0x14] sm:$0xf]
        %v2971 = vld [vmem:[%s2964 + $0x18] sm:$0xf]
        %v2972 = vld [vmem:[%s2964 + $0x1c] sm:$0xf]
        %v2973 = vld [vmem:[%s2964 + $0x20] sm:$0xf]
        %v2974 = vld [vmem:[%s2964 + $0x24] sm:$0xf]
        %v2975 = vld [vmem:[%s2964 + $0x28] sm:$0xf]
        %v2976 = vld [vmem:[%s2964 + $0x2c] sm:$0xf]
        %v2977 = vld [vmem:[%s2964 + $0x30] sm:$0xf]
        %v2978 = vld [vmem:[%s2964 + $0x34] sm:$0xf]
        %v2979 = vld [vmem:[%s2964 + $0x38] sm:$0xf]
        %v2980 = vld [vmem:[%s2964 + $0x3c] sm:$0xf]
        %v2981 = vperm.slane %v303, 1
        %v2998 = vunpack.c.l.b16 %v2965
        %v2999 = vunpack.c.l.b16 %v2966
        %v3000 = vunpack.c.l.b16 %v2967
        %v3001 = vunpack.c.l.b16 %v2968
        %v3002 = vunpack.c.l.b16 %v2969
        %v3003 = vunpack.c.l.b16 %v2970
        %v3004 = vunpack.c.l.b16 %v2971
        %v3005 = vunpack.c.l.b16 %v2972
        %v3006 = vunpack.c.l.b16 %v2973
        %v3007 = vunpack.c.l.b16 %v2974
        %v3008 = vunpack.c.l.b16 %v2975
        %v3009 = vunpack.c.l.b16 %v2976
        %v3010 = vunpack.c.l.b16 %v2977
        %v3011 = vunpack.c.l.b16 %v2978
        %v3012 = vunpack.c.l.b16 %v2979
        %v3013 = vunpack.c.l.b16 %v2980
        %v3014 = vpack.c.b16 %v2999, %v2998
        %v3015 = vpack.c.b16 %v3001, %v3000
        %v3016 = vpack.c.b16 %v3003, %v3002
        %v3017 = vpack.c.b16 %v3005, %v3004
        %v3018 = vpack.c.b16 %v3007, %v3006
        %v3019 = vpack.c.b16 %v3009, %v3008
        %v3020 = vpack.c.b16 %v3011, %v3010
        %v3021 = vpack.c.b16 %v3013, %v3012
        %3030 = vmatpush.bf16.msra.mxu0 %v3021
        %3031 = vmatpush.bf16.msra.mxu0 %v3020
        %3032 = vmatpush.bf16.msra.mxu0 %v3019
        %3033 = vmatpush.bf16.msra.mxu0 %v3018
        %3034 = vmatpush.bf16.msra.mxu0 %v3017
        %3035 = vmatpush.bf16.msra.mxu0 %v3016
        %3036 = vmatpush.bf16.msra.mxu0 %v3015
        %3037 = vmatpush.bf16.msra.mxu0 %v3014
        %3038 = vmatmul.bf16.gmra.mxu0 %v2960
        %v3039 = vpop.f32.mrf.mxu0
        %v3040 = vadd.f32 %v2981, %v3039
        %v3041 = vpop.f32.mrf.mxu0
        %v3042 = vadd.f32 %v2981, %v3041
        %3043 = vmatmul.bf16.gmra.mxu0 %v2961
        %v3044 = vpop.f32.mrf.mxu0
        %v3045 = vadd.f32 %v2981, %v3044
        %v3046 = vpop.f32.mrf.mxu0
        %v3047 = vadd.f32 %v2981, %v3046
        %3048 = vmatmul.bf16.gmra.mxu0 %v2962
        %v3049 = vpop.f32.mrf.mxu0
        %v3050 = vadd.f32 %v2981, %v3049
        %v3051 = vpop.f32.mrf.mxu0
        %v3052 = vadd.f32 %v2981, %v3051
        %3053 = vmatmul.bf16.gmra.mxu0 %v2963
        %v3054 = vpop.f32.mrf.mxu0
        %v3055 = vadd.f32 %v2981, %v3054
        %v3056 = vpop.f32.mrf.mxu0
        %v3057 = vadd.f32 %v2981, %v3056
        %3058 = vdwg.mxu0
        %v3059 = vadd.f32 %v2845, %v3040
        %v3060 = vadd.f32 %v2846, %v3042
        %v3061 = vadd.f32 %v2847, %v3045
        %v3062 = vadd.f32 %v2848, %v3047
        %v3063 = vadd.f32 %v2849, %v3050
        %v3064 = vadd.f32 %v2850, %v3052
        %v3065 = vadd.f32 %v2851, %v3055
        %v3066 = vadd.f32 %v2852, %v3057
        %3067 = vadd.xlane.f32.xlu0 %v3059
        %v3068 = vpop.xlane.xlu0 %3067
        %3069 = vadd.xlane.f32.xlu0 %v3060
        %v3070 = vpop.xlane.xlu0 %3069
        %3071 = vadd.xlane.f32.xlu0 %v3061
        %v3072 = vpop.xlane.xlu0 %3071
        %3073 = vadd.xlane.f32.xlu0 %v3062
        %v3074 = vpop.xlane.xlu0 %3073
        %3075 = vadd.xlane.f32.xlu0 %v3063
        %v3076 = vpop.xlane.xlu0 %3075
        %3077 = vadd.xlane.f32.xlu0 %v3064
        %v3078 = vpop.xlane.xlu0 %3077
        %3079 = vadd.xlane.f32.xlu0 %v3065
        %v3080 = vpop.xlane.xlu0 %3079
        %3081 = vadd.xlane.f32.xlu0 %v3066
        %v3082 = vpop.xlane.xlu0 %3081
        %v3083 = vmul.f32 %v3068, %v2690
        %v3084 = vmul.f32 %v3070, %v2690
        %v3085 = vmul.f32 %v3072, %v2690
        %v3086 = vmul.f32 %v3074, %v2690
        %v3087 = vmul.f32 %v3076, %v2690
        %v3088 = vmul.f32 %v3078, %v2690
        %v3089 = vmul.f32 %v3080, %v2690
        %v3090 = vmul.f32 %v3082, %v2690
        %v3091 = vsub.f32 %v3059, %v3083
        %v3092 = vsub.f32 %v3060, %v3084
        %v3093 = vsub.f32 %v3061, %v3085
        %v3094 = vsub.f32 %v3062, %v3086
        %v3095 = vsub.f32 %v3063, %v3087
        %v3096 = vsub.f32 %v3064, %v3088
        %v3097 = vsub.f32 %v3065, %v3089
        %v3098 = vsub.f32 %v3066, %v3090
        %v3099 = vmul.f32 %v3091, %v3091
        %v3100 = vmul.f32 %v3092, %v3092
        %v3101 = vmul.f32 %v3093, %v3093
        %v3102 = vmul.f32 %v3094, %v3094
        %v3103 = vmul.f32 %v3095, %v3095
        %v3104 = vmul.f32 %v3096, %v3096
        %v3105 = vmul.f32 %v3097, %v3097
        %v3106 = vmul.f32 %v3098, %v3098
        %3107 = vadd.xlane.f32.xlu0 %v3099
        %v3108 = vpop.xlane.xlu0 %3107
        %3109 = vadd.xlane.f32.xlu0 %v3100
        %v3110 = vpop.xlane.xlu0 %3109
        %3111 = vadd.xlane.f32.xlu0 %v3101
        %v3112 = vpop.xlane.xlu0 %3111
        %3113 = vadd.xlane.f32.xlu0 %v3102
        %v3114 = vpop.xlane.xlu0 %3113
        %3115 = vadd.xlane.f32.xlu0 %v3103
        %v3116 = vpop.xlane.xlu0 %3115
        %3117 = vadd.xlane.f32.xlu0 %v3104
        %v3118 = vpop.xlane.xlu0 %3117
        %3119 = vadd.xlane.f32.xlu0 %v3105
        %v3120 = vpop.xlane.xlu0 %3119
        %3121 = vadd.xlane.f32.xlu0 %v3106
        %v3122 = vpop.xlane.xlu0 %3121
        %v3123 = vmul.f32 %v3108, %v2690
        %v3124 = vmul.f32 %v3110, %v2690
        %v3125 = vmul.f32 %v3112, %v2690
        %v3126 = vmul.f32 %v3114, %v2690
        %v3127 = vmul.f32 %v3116, %v2690
        %v3128 = vmul.f32 %v3118, %v2690
        %v3129 = vmul.f32 %v3120, %v2690
        %v3130 = vmul.f32 %v3122, %v2690
        %v3131 = vadd.f32 %v3123, 1e-05
        %v3132 = vadd.f32 %v3124, 1e-05
        %v3133 = vadd.f32 %v3125, 1e-05
        %v3134 = vadd.f32 %v3126, 1e-05
        %v3135 = vadd.f32 %v3127, 1e-05
        %v3136 = vadd.f32 %v3128, 1e-05
        %v3137 = vadd.f32 %v3129, 1e-05
        %v3138 = vadd.f32 %v3130, 1e-05
        %v3139 = vrsqrt.pop %v3131
        %v3140 = vmul.f32 %v3139, %v3131
        %v3141 = vmul.f32 %v3140, %v3139
        %v3142 = vmul.f32 0.5, %v3141
        %v3143 = vsub.f32 1.5, %v3142
        %v3144 = vmul.f32 %v3139, %v3143
        %vm3145 = vweird.f32 %v3131
        %vm3146 = vweird.f32 %v3139
        %vm3147 = vmor %vm3145, %vm3146
        %v3148 = vsel %vm3147, %v3139, %v3144
        %v3149 = vrsqrt.pop %v3132
        %v3150 = vmul.f32 %v3149, %v3132
        %v3151 = vmul.f32 %v3150, %v3149
        %v3152 = vmul.f32 0.5, %v3151
        %v3153 = vsub.f32 1.5, %v3152
        %v3154 = vmul.f32 %v3149, %v3153
        %vm3155 = vweird.f32 %v3132
        %vm3156 = vweird.f32 %v3149
        %vm3157 = vmor %vm3155, %vm3156
        %v3158 = vsel %vm3157, %v3149, %v3154
        %v3159 = vrsqrt.pop %v3133
        %v3160 = vmul.f32 %v3159, %v3133
        %v3161 = vmul.f32 %v3160, %v3159
        %v3162 = vmul.f32 0.5, %v3161
        %v3163 = vsub.f32 1.5, %v3162
        %v3164 = vmul.f32 %v3159, %v3163
        %vm3165 = vweird.f32 %v3133
        %vm3166 = vweird.f32 %v3159
        %vm3167 = vmor %vm3165, %vm3166
        %v3168 = vsel %vm3167, %v3159, %v3164
        %v3169 = vrsqrt.pop %v3134
        %v3170 = vmul.f32 %v3169, %v3134
        %v3171 = vmul.f32 %v3170, %v3169
        %v3172 = vmul.f32 0.5, %v3171
        %v3173 = vsub.f32 1.5, %v3172
        %v3174 = vmul.f32 %v3169, %v3173
        %vm3175 = vweird.f32 %v3134
        %vm3176 = vweird.f32 %v3169
        %vm3177 = vmor %vm3175, %vm3176
        %v3178 = vsel %vm3177, %v3169, %v3174
        %v3179 = vrsqrt.pop %v3135
        %v3180 = vmul.f32 %v3179, %v3135
        %v3181 = vmul.f32 %v3180, %v3179
        %v3182 = vmul.f32 0.5, %v3181
        %v3183 = vsub.f32 1.5, %v3182
        %v3184 = vmul.f32 %v3179, %v3183
        %vm3185 = vweird.f32 %v3135
        %vm3186 = vweird.f32 %v3179
        %vm3187 = vmor %vm3185, %vm3186
        %v3188 = vsel %vm3187, %v3179, %v3184
        %v3189 = vrsqrt.pop %v3136
        %v3190 = vmul.f32 %v3189, %v3136
        %v3191 = vmul.f32 %v3190, %v3189
        %v3192 = vmul.f32 0.5, %v3191
        %v3193 = vsub.f32 1.5, %v3192
        %v3194 = vmul.f32 %v3189, %v3193
        %vm3195 = vweird.f32 %v3136
        %vm3196 = vweird.f32 %v3189
        %vm3197 = vmor %vm3195, %vm3196
        %v3198 = vsel %vm3197, %v3189, %v3194
        %v3199 = vrsqrt.pop %v3137
        %v3200 = vmul.f32 %v3199, %v3137
        %v3201 = vmul.f32 %v3200, %v3199
        %v3202 = vmul.f32 0.5, %v3201
        %v3203 = vsub.f32 1.5, %v3202
        %v3204 = vmul.f32 %v3199, %v3203
        %vm3205 = vweird.f32 %v3137
        %vm3206 = vweird.f32 %v3199
        %vm3207 = vmor %vm3205, %vm3206
        %v3208 = vsel %vm3207, %v3199, %v3204
        %v3209 = vrsqrt.pop %v3138
        %v3210 = vmul.f32 %v3209, %v3138
        %v3211 = vmul.f32 %v3210, %v3209
        %v3212 = vmul.f32 0.5, %v3211
        %v3213 = vsub.f32 1.5, %v3212
        %v3214 = vmul.f32 %v3209, %v3213
        %vm3215 = vweird.f32 %v3138
        %vm3216 = vweird.f32 %v3209
        %vm3217 = vmor %vm3215, %vm3216
        %v3218 = vsel %vm3217, %v3209, %v3214
        %v3219 = vmul.f32 %v3091, %v3148
        %v3220 = vmul.f32 %v3092, %v3158
        %v3221 = vmul.f32 %v3093, %v3168
        %v3222 = vmul.f32 %v3094, %v3178
        %v3223 = vmul.f32 %v3095, %v3188
        %v3224 = vmul.f32 %v3096, %v3198
        %v3225 = vmul.f32 %v3097, %v3208
        %v3226 = vmul.f32 %v3098, %v3218
        %v3227 = vperm.slane %v302, 6
        %v3228 = vmul.f32 %v3219, %v3227
        %v3229 = vmul.f32 %v3220, %v3227
        %v3230 = vmul.f32 %v3221, %v3227
        %v3231 = vmul.f32 %v3222, %v3227
        %v3232 = vmul.f32 %v3223, %v3227
        %v3233 = vmul.f32 %v3224, %v3227
        %v3234 = vmul.f32 %v3225, %v3227
        %v3235 = vmul.f32 %v3226, %v3227
        %v3236 = vperm.slane %v302, 7
        %v3237 = vadd.f32 %v3228, %v3236
        %v3238 = vadd.f32 %v3229, %v3236
        %v3239 = vadd.f32 %v3230, %v3236
        %v3240 = vadd.f32 %v3231, %v3236
        %v3241 = vadd.f32 %v3232, %v3236
        %v3242 = vadd.f32 %v3233, %v3236
        %v3243 = vadd.f32 %v3234, %v3236
        %v3244 = vadd.f32 %v3235, %v3236
        %3245 = vst [vmem:[%s276] sm:$0xff] %v3237
        %3246 = vst [vmem:[%s276 + $0x8] sm:$0xff] %v3238
        %3247 = vst [vmem:[%s276 + $0x10] sm:$0xff] %v3239
        %3248 = vst [vmem:[%s276 + $0x18] sm:$0xff] %v3240
        %3249 = vst [vmem:[%s276 + $0x20] sm:$0xff] %v3241
        %3250 = vst [vmem:[%s276 + $0x28] sm:$0xff] %v3242
        %3251 = vst [vmem:[%s276 + $0x30] sm:$0xff] %v3243
        %3252 = vst [vmem:[%s276 + $0x38] sm:$0xff] %v3244
        %s3253 = sand.u32 %s116, 1
        %s3254 = sand.u32 %s116, 1
        %s3255 = smul.addr %s3254, 64
        %s3256 = scalar_lea.vmem [#allocation3], %s3255
        // Predicated region
        $region71: #{partitioned_transformer_encoder_layer.1} parent=65 // pred_check
          %p3257 = pneg %p126
        $region72: #{partitioned_transformer_encoder_layer.1} parent=65 // pred_check_branch
          %3259 = sbr.rel (%p3257) target = $region74
        $region73: #{partitioned_transformer_encoder_layer.1} parent=65 // pred_region
          %s3260 = smul.u32 8, %s19
          %s3261 = smul.addr %s3260, 2
          %s3262 = sadd.s32 %s18, %s3261
          %s3263 = smul.addr %s3262, 8
          %s3264 = scalar_lea.vmem %s3, %s3263
          // Predicated region
          $region75: #{partitioned_transformer_encoder_layer.1} parent=73 // pred_check
            _
          $region76: #{partitioned_transformer_encoder_layer.1} parent=73 // pred_check_branch
            %3266 = sbr.rel (0) target = $region78
          $region77: #{partitioned_transformer_encoder_layer.1} parent=73 // pred_region
            // Predicated region
            $region79: #{partitioned_transformer_encoder_layer.1} parent=77 // pred_check
              _
            $region80: #{partitioned_transformer_encoder_layer.1} parent=77 // pred_check_branch
              %3268 = sbr.rel (0) target = $region82
            $region81: #{partitioned_transformer_encoder_layer.1} parent=77 // pred_region
              // Predicated region
              $region94: #{partitioned_transformer_encoder_layer.1} parent=81 // pred_check
                _
              $region95: #{partitioned_transformer_encoder_layer.1} parent=81 // pred_check_branch
                %3298 = sbr.rel (0) target = $region97
              $region96: #{partitioned_transformer_encoder_layer.1} parent=81 // pred_region
                loop: start=0, step=1, limit=1
                $region98: #{partitioned_transformer_encoder_layer.1} parent=96 // loop_pre_header
                  _
                $region99: #{partitioned_transformer_encoder_layer.1} parent=96 // loop_header
                  %s3300 = sphi 0, %s3304
                  %p3301 = scmp.ge.s32.totalorder %s3300, 1
                  %s3305 = sphi %s3256, %s3256
                  %s3306 = sphi %s3264, %s3264
                $region100: #{partitioned_transformer_encoder_layer.1} parent=96 // loop_header_branch
                  %3303 = sbr.rel (%p3301) target = $region104
                $region101: #{partitioned_transformer_encoder_layer.1} parent=96 // loop_body
                  %v3307 = vld [vmem:[%s3305] sm:$0xff]
                  %3308 = vst [vmem:[%s3306] sm:$0xff] %v3307
                  %v3309 = vld [vmem:[%s3305 + $0x8] sm:$0xff]
                  %3310 = vst [vmem:[%s3306 + $0x10] sm:$0xff] %v3309
                  %v3311 = vld [vmem:[%s3305 + $0x10] sm:$0xff]
                  %3312 = vst [vmem:[%s3306 + $0x20] sm:$0xff] %v3311
                  %v3313 = vld [vmem:[%s3305 + $0x18] sm:$0xff]
                  %3314 = vst [vmem:[%s3306 + $0x30] sm:$0xff] %v3313
                  %v3315 = vld [vmem:[%s3305 + $0x20] sm:$0xff]
                  %3316 = vst [vmem:[%s3306 + $0x40] sm:$0xff] %v3315
                  %v3317 = vld [vmem:[%s3305 + $0x28] sm:$0xff]
                  %3318 = vst [vmem:[%s3306 + $0x50] sm:$0xff] %v3317
                  %v3319 = vld [vmem:[%s3305 + $0x30] sm:$0xff]
                  %3320 = vst [vmem:[%s3306 + $0x60] sm:$0xff] %v3319
                  %v3321 = vld [vmem:[%s3305 + $0x38] sm:$0xff]
                  %3322 = vst [vmem:[%s3306 + $0x70] sm:$0xff] %v3321
                $region102: #{partitioned_transformer_encoder_layer.1} parent=96 // loop_footer
                  %s3304 = sadd.s32 1, %s3300
                $region103: #{partitioned_transformer_encoder_layer.1} parent=96 // loop_footer_branch
                  %3299 = sbr.rel target = $region99
                $region104: #{partitioned_transformer_encoder_layer.1} parent=96 // loop_exit
                  _
              $region97: #{partitioned_transformer_encoder_layer.1} parent=81 // pred_fallthru
                _
              // Predicated region
              $region105: #{partitioned_transformer_encoder_layer.1} parent=81 // pred_check
                _
              $region106: #{partitioned_transformer_encoder_layer.1} parent=81 // pred_check_branch
                %3324 = sbr.rel target = $region108
              $region107: #{partitioned_transformer_encoder_layer.1} parent=81 // pred_region
                _
              $region108: #{partitioned_transformer_encoder_layer.1} parent=81 // pred_fallthru
                _
            $region82: #{partitioned_transformer_encoder_layer.1} parent=77 // pred_fallthru
              _
            // Predicated region
            $region83: #{partitioned_transformer_encoder_layer.1} parent=77 // pred_check
              _
            $region84: #{partitioned_transformer_encoder_layer.1} parent=77 // pred_check_branch
              %3270 = sbr.rel target = $region86
            $region85: #{partitioned_transformer_encoder_layer.1} parent=77 // pred_region
              %s3272 = ssub.s32 256, 1
              loop: start=0, step=1, limit=1
              $region87: #{partitioned_transformer_encoder_layer.1} parent=85 // loop_pre_header
                _
              $region88: #{partitioned_transformer_encoder_layer.1} parent=85 // loop_header
                %s3274 = sphi 0, %s3278
                %p3275 = scmp.ge.s32.totalorder %s3274, 1
                %s3279 = sphi %s3256, %s3256
                %s3280 = sphi %s3264, %s3264
              $region89: #{partitioned_transformer_encoder_layer.1} parent=85 // loop_header_branch
                %3277 = sbr.rel (%p3275) target = $region93
              $region90: #{partitioned_transformer_encoder_layer.1} parent=85 // loop_body
                %v3281 = vld [vmem:[%s3279] sm:%s3272]
                %3282 = vst [vmem:[%s3280] sm:%s3272] %v3281
                %v3283 = vld [vmem:[%s3279 + $0x8] sm:%s3272]
                %3284 = vst [vmem:[%s3280 + $0x10] sm:%s3272] %v3283
                %v3285 = vld [vmem:[%s3279 + $0x10] sm:%s3272]
                %3286 = vst [vmem:[%s3280 + $0x20] sm:%s3272] %v3285
                %v3287 = vld [vmem:[%s3279 + $0x18] sm:%s3272]
                %3288 = vst [vmem:[%s3280 + $0x30] sm:%s3272] %v3287
                %v3289 = vld [vmem:[%s3279 + $0x20] sm:%s3272]
                %3290 = vst [vmem:[%s3280 + $0x40] sm:%s3272] %v3289
                %v3291 = vld [vmem:[%s3279 + $0x28] sm:%s3272]
                %3292 = vst [vmem:[%s3280 + $0x50] sm:%s3272] %v3291
                %v3293 = vld [vmem:[%s3279 + $0x30] sm:%s3272]
                %3294 = vst [vmem:[%s3280 + $0x60] sm:%s3272] %v3293
                %v3295 = vld [vmem:[%s3279 + $0x38] sm:%s3272]
                %3296 = vst [vmem:[%s3280 + $0x70] sm:%s3272] %v3295
              $region91: #{partitioned_transformer_encoder_layer.1} parent=85 // loop_footer
                %s3278 = sadd.s32 1, %s3274
              $region92: #{partitioned_transformer_encoder_layer.1} parent=85 // loop_footer_branch
                %3273 = sbr.rel target = $region88
              $region93: #{partitioned_transformer_encoder_layer.1} parent=85 // loop_exit
                _
            $region86: #{partitioned_transformer_encoder_layer.1} parent=77 // pred_fallthru
              _
          $region78: #{partitioned_transformer_encoder_layer.1} parent=73 // pred_fallthru
            _
          %3325 = vnop
        $region74: #{partitioned_transformer_encoder_layer.1} parent=65 // pred_fallthru
          _
      $region66: #{partitioned_transformer_encoder_layer.1} parent=5 // pred_fallthru
        _
      %p3326 = scmp.le.s32.totalorder 2, %s9
      // Predicated region
      $region109: #{partitioned_transformer_encoder_layer.1} parent=5 // pred_check
        %p3327 = pneg %p3326
      $region110: #{partitioned_transformer_encoder_layer.1} parent=5 // pred_check_branch
        %3329 = sbr.rel (%p3327) target = $region112
      $region111: #{partitioned_transformer_encoder_layer.1} parent=5 // pred_region
        %s3330 = ssub.s32 %s9, 2
        // Predicated region
        $region113: #{partitioned_transformer_encoder_layer.1} parent=111 // pred_check
          %p3331 = pneg %p132
        $region114: #{partitioned_transformer_encoder_layer.1} parent=111 // pred_check_branch
          %3333 = sbr.rel (%p3331) target = $region116
        $region115: #{partitioned_transformer_encoder_layer.1} parent=111 // pred_region
          %s3334 = sand.u32 %s117, 1
          %s3335 = sand.u32 %s117, 1
          %s3336 = smul.addr %s3335, 64
          %s3337 = scalar_lea.vmem [#allocation3], %s3336
        $region116: #{partitioned_transformer_encoder_layer.1} parent=111 // pred_fallthru
          _
      $region112: #{partitioned_transformer_encoder_layer.1} parent=5 // pred_fallthru
        _
    $region6: #{partitioned_transformer_encoder_layer.1} parent=1 // loop_footer
      %s13 = sadd.s32 1, %s9
    $region7: #{partitioned_transformer_encoder_layer.1} parent=1 // loop_footer_branch
      %8 = sbr.rel target = $region3
    $region8: #{partitioned_transformer_encoder_layer.1} parent=1 // loop_exit
      _

</llo_original>
